<compile_context>
chip_gen: v7x
topology: tpu7x:2x2x1
jax: 0.10.0
libtpu: 0.0.40
codegen_flags: <defaults>
</compile_context>

<pallas_src>
import functools

import numpy as np
import jax
import jax.numpy as jnp
from jax import lax
from jax.experimental import pallas as pl
from jax.experimental.pallas import tpu as pltpu

# 3x3 tap offsets in row-major (kh, kw) order -> (dh, dw) = (kh - 1, kw - 1).
_TAPS = tuple((dh, dw) for dh in (-1, 0, 1) for dw in (-1, 0, 1))


def _fused_block_kernel(x_ref, w1_ref, b1_ref, w2_ref, b2_ref,
                        g1_ref, bt1_ref, g2_ref, bt2_ref,
                        tapmask_ref, bnmask_ref, o_ref,
                        *, N, H, W, use_bc, count1, count2, eps):
    """Whole Block in one grid step; all operands resident in VMEM.

    In-kernel data layout: (channels, H*W) per batch element, i.e. channels on
    sublanes and the flattened spatial axis on lanes (lane-dense).
    """
    HW = H * W

    def conv3x3_relu(xs, w_ref, b_ref):
        # xs: list of N arrays (Cin, HW) -> list of N arrays (Cout, HW).
        cout = w_ref.shape[1]
        outs = []
        for n in range(N):
            xn = xs[n]
            acc = jnp.zeros((cout, HW), jnp.float32)
            for k, (dh, dw) in enumerate(_TAPS):
                off = dh * W + dw
                if off == 0:
                    shifted = xn
                else:
                    # shifted[:, c] = xn[:, c + off]  (lane rotation on the XLU)
                    shifted = pltpu.roll(xn, (-off) % HW, 1)
                    # Zero taps whose source pixel is outside the image
                    # (this IS the conv's zero padding).
                    shifted = shifted * tapmask_ref[k]
                acc = acc + jnp.dot(w_ref[k], shifted,
                                    preferred_element_type=jnp.float32)
            outs.append(jnp.maximum(acc + b_ref[...], 0.0))
        return outs

    def batchnorm(ys, g_ref, bt_ref, mask, count):
        # Training-mode BN (biased variance) over (batch, valid spatial),
        # one pass computing sum and sum-of-squares (lane-axis reductions).
        s = None
        ss = None
        for n in range(N):
            ym = ys[n] * mask                                   # (Cout, HW)
            sn = jnp.sum(ym, axis=1, keepdims=True)             # (Cout, 1)
            ssn = jnp.sum(ym * ys[n], axis=1, keepdims=True)    # (Cout, 1)
            s = sn if s is None else s + sn
            ss = ssn if ss is None else ss + ssn
        inv_count = 1.0 / count
        mean = s * inv_count
        var = jnp.maximum(ss * inv_count - mean * mean, 0.0)
        scale = g_ref[...] * lax.rsqrt(var + eps)               # (Cout, 1)
        shift = bt_ref[...] - mean * scale
        return [ys[n] * scale + shift for n in range(N)]

    xs = [x_ref[n].astype(jnp.float32) for n in range(N)]
    h = conv3x3_relu(xs, w1_ref, b1_ref)
    if use_bc:
        h = batchnorm(h, g1_ref, bt1_ref, bnmask_ref[0], count1)
    h = conv3x3_relu(h, w2_ref, b2_ref)
    if use_bc:
        h = batchnorm(h, g2_ref, bt2_ref, bnmask_ref[1], count2)
    for n in range(N):
        o_ref[n] = h[n].astype(o_ref.dtype)


@functools.partial(jax.jit, static_argnames=("pad", "use_bc", "eps"))
def block_forward(x_nchw, params, *, pad, use_bc, eps=1e-5):
    """Forward pass of Block.  x_nchw: (N, Cin, H, W) float32 (NCHW)."""
    N, Cin, H, W = x_nchw.shape
    Cout = params["w1"].shape[1]
    HW = H * W

    # Free (row-major compatible) reshape: spatial goes onto the lane axis.
    x_flat = x_nchw.reshape(N, Cin, HW)

    # Compile-time constant masks (numpy; no runtime index math in-kernel).
    rows = np.arange(HW, dtype=np.int32) // W
    cols = np.arange(HW, dtype=np.int32) % W
    tap_masks = np.stack([
        (((rows + dh) >= 0) & ((rows + dh) < H)
         & ((cols + dw) >= 0) & ((cols + dw) < W)).astype(np.float32)
        for dh, dw in _TAPS
    ]).reshape(len(_TAPS), 1, HW)

    def region(m):  # valid conv-output region with margin m inside HxW frame
        return (((rows >= m) & (rows < H - m)
                 & (cols >= m) & (cols < W - m)).astype(np.float32))

    m1 = 1 - pad          # margin of conv1's valid outputs in the frame
    m2 = 2 * (1 - pad)    # margin of conv2's valid outputs in the frame
    bn_masks = np.stack([region(m1), region(m2)]).reshape(2, 1, HW)
    count1 = float(N * (H - 2 * m1) * (W - 2 * m1))
    count2 = float(N * (H - 2 * m2) * (W - 2 * m2))

    kernel = functools.partial(
        _fused_block_kernel, N=N, H=H, W=W, use_bc=use_bc,
        count1=count1, count2=count2, eps=eps)

    args = (x_flat, params["w1"], params["b1"], params["w2"], params["b2"],
            params["g1"], params["bt1"], params["g2"], params["bt2"],
            jnp.asarray(tap_masks), jnp.asarray(bn_masks))

    def full_spec(shape):
        if len(shape) == 2:
            return pl.BlockSpec(shape, lambda i: (0, 0))
        return pl.BlockSpec(shape, lambda i: (0, 0, 0))

    # TODO(synk): for large N*H*W this single-step kernel should be tiled
    # (batch/spatial grid + two-pass BN) to use both v7x TensorCores and stay
    # under the per-core VMEM limit; at these sizes one step is optimal.
    out = pl.pallas_call(
        kernel,
        out_shape=jax.ShapeDtypeStruct((N, Cout, HW), x_nchw.dtype),
        grid=(1,),
        in_specs=[full_spec(a.shape) for a in args],
        out_specs=full_spec((N, Cout, HW)),
        compiler_params=pltpu.CompilerParams(
            dimension_semantics=("arbitrary",)),
    )(*args)

    out = out.reshape(N, Cout, H, W)   # free reshape (splits the lane axis)
    if pad == 0:
        # pad=0: the valid conv2 outputs sit 2 pixels inside the HxW frame.
        out = out[:, :, 2:H - 2, 2:W - 2]
    return out


class BlockPallas:
    """Forward-only Pallas port of the PyTorch `Block` module."""

    def __init__(self, in_c, out_c, xavier, bc, retain_size=False, key=None):
        if key is None:
            key = jax.random.PRNGKey(0)
        self.pad = 1 if retain_size else 0
        self.use_bc = bc
        k1, k2, k3, k4 = jax.random.split(key, 4)

        def conv_weight(k, cin, cout):
            fan_in, fan_out = cin * 9, cout * 9
            if xavier:                        # xavier_normal_
                std = (2.0 / (fan_in + fan_out)) ** 0.5
                return std * jax.random.normal(k, (cout, cin, 3, 3), jnp.float32)
            bound = 1.0 / (fan_in ** 0.5)     # PyTorch Conv2d default init
            return jax.random.uniform(k, (cout, cin, 3, 3), jnp.float32, -bound, bound)

        def conv_bias(k, cin, cout):
            bound = 1.0 / ((cin * 9) ** 0.5)
            return jax.random.uniform(k, (cout,), jnp.float32, -bound, bound)

        # Parameters in PyTorch layout (used by the pure-JAX reference).
        self.w1 = conv_weight(k1, in_c, out_c)
        self.b1 = conv_bias(k2, in_c, out_c)
        self.w2 = conv_weight(k3, out_c, out_c)
        self.b2 = conv_bias(k4, out_c, out_c)
        # BatchNorm2d defaults (weight=1, bias=0); placeholders if bc=False.
        self.g1 = jnp.ones((out_c,), jnp.float32)
        self.bt1 = jnp.zeros((out_c,), jnp.float32)
        self.g2 = jnp.ones((out_c,), jnp.float32)
        self.bt2 = jnp.zeros((out_c,), jnp.float32)
        # TODO(synk): BatchNorm running_mean/running_var buffers are not
        # tracked; only the training-mode forward is reproduced.

        # Kernel-layout parameters, precomputed once at init:
        #   conv weights as 9 per-tap (Cout, Cin) matrices; biases/BN params
        #   as (Cout, 1) columns (channels on sublanes).
        def taps(w):  # (Cout, Cin, 3, 3) -> (9, Cout, Cin), k = kh*3 + kw
            return jnp.transpose(w, (2, 3, 0, 1)).reshape(9, w.shape[0], w.shape[1])

        def col(v):
            return v.reshape(-1, 1)

        self.params = {
            "w1": taps(self.w1), "b1": col(self.b1),
            "w2": taps(self.w2), "b2": col(self.b2),
            "g1": col(self.g1), "bt1": col(self.bt1),
            "g2": col(self.g2), "bt2": col(self.bt2),
        }

    def __call__(self, x_nchw):
        return block_forward(x_nchw, self.params,
                             pad=self.pad, use_bc=self.use_bc, eps=1e-5)

    # Pure-JAX reference (NCHW, mirrors PyTorch) for the correctness check.
    def reference(self, x):
        def conv(x, w, b):
            y = lax.conv_general_dilated(
                x, w, window_strides=(1, 1),
                padding=[(self.pad, self.pad), (self.pad, self.pad)],
                dimension_numbers=("NCHW", "OIHW", "NCHW"),
                precision=lax.Precision.HIGHEST)
            return y + b.reshape(1, -1, 1, 1)

        def bn(x, g, bta):
            mean = jnp.mean(x, axis=(0, 2, 3), keepdims=True)
            var = jnp.mean((x - mean) ** 2, axis=(0, 2, 3), keepdims=True)
            return ((x - mean) * lax.rsqrt(var + 1e-5) * g.reshape(1, -1, 1, 1)
                    + bta.reshape(1, -1, 1, 1))

        h = jnp.maximum(conv(x, self.w1, self.b1), 0.0)
        if self.use_bc:
            h = bn(h, self.g1, self.bt1)
        h = jnp.maximum(conv(h, self.w2, self.b2), 0.0)
        if self.use_bc:
            h = bn(h, self.g2, self.bt2)
        return h


if __name__ == "__main__":
    key = jax.random.PRNGKey(0)
    kx, kp = jax.random.split(key)

    N, in_c, out_c, H, W = 2, 4, 8, 16, 16
    x = jax.random.normal(kx, (N, in_c, H, W), dtype=jnp.float32)  # NCHW input

    # Primary config: xavier init, BatchNorm enabled, retain_size (pad=1).
    block = BlockPallas(in_c, out_c, xavier=True, bc=True, retain_size=True, key=kp)
    y = jax.block_until_ready(block(x))
    assert y.shape == (N, out_c, H, W), y.shape

    y_ref = block.reference(x)
    err = float(jnp.max(jnp.abs(y - y_ref)))
    if not jnp.allclose(y, y_ref, atol=1e-4, rtol=1e-4):
        raise AssertionError(f"Pallas vs reference mismatch (bc=True), max abs err = {err}")

    # Also exercise the no-BatchNorm branch (same geometry, BN skipped).
    block2 = BlockPallas(in_c, out_c, xavier=True, bc=False, retain_size=True, key=kp)
    y2 = jax.block_until_ready(block2(x))
    y2_ref = block2.reference(x)
    err2 = float(jnp.max(jnp.abs(y2 - y2_ref)))
    if not jnp.allclose(y2, y2_ref, atol=1e-4, rtol=1e-4):
        raise AssertionError(f"Pallas vs reference mismatch (bc=False), max abs err = {err2}")

    print("KERNEL_OK")
</pallas_src>

<mosaic_0001>
module attributes {stable_mosaic.version = 11 : i64} {
  func.func @_fused_block_kernel(%arg0: i32, %arg1: memref<2x4x256xf32, #tpu.memory_space<vmem>>, %arg2: memref<9x8x4xf32, #tpu.memory_space<vmem>>, %arg3: memref<8x1xf32, #tpu.memory_space<vmem>>, %arg4: memref<9x8x8xf32, #tpu.memory_space<vmem>>, %arg5: memref<8x1xf32, #tpu.memory_space<vmem>>, %arg6: memref<8x1xf32, #tpu.memory_space<vmem>>, %arg7: memref<8x1xf32, #tpu.memory_space<vmem>>, %arg8: memref<8x1xf32, #tpu.memory_space<vmem>>, %arg9: memref<8x1xf32, #tpu.memory_space<vmem>>, %arg10: memref<9x1x256xf32, #tpu.memory_space<vmem>>, %arg11: memref<2x1x256xf32, #tpu.memory_space<vmem>>, %arg12: memref<2x8x256xf32, #tpu.memory_space<vmem>>) attributes {dimension_semantics = [#tpu.dimension_semantics<arbitrary>], iteration_bounds = array<i64: 1>, scalar_prefetch = 0 : i64, scratch_operands = 0 : i64, tpu.core_type = #tpu.core_type<tc>, window_params = [{pipeline_mode = #tpu.pipeline_mode<synchronous>, transform_indices = @transform_0, window_bounds = array<i64: 2, 4, 256>}, {pipeline_mode = #tpu.pipeline_mode<synchronous>, transform_indices = @transform_1, window_bounds = array<i64: 9, 8, 4>}, {pipeline_mode = #tpu.pipeline_mode<synchronous>, transform_indices = @transform_2, window_bounds = array<i64: 8, 1>}, {pipeline_mode = #tpu.pipeline_mode<synchronous>, transform_indices = @transform_3, window_bounds = array<i64: 9, 8, 8>}, {pipeline_mode = #tpu.pipeline_mode<synchronous>, transform_indices = @transform_4, window_bounds = array<i64: 8, 1>}, {pipeline_mode = #tpu.pipeline_mode<synchronous>, transform_indices = @transform_5, window_bounds = array<i64: 8, 1>}, {pipeline_mode = #tpu.pipeline_mode<synchronous>, transform_indices = @transform_6, window_bounds = array<i64: 8, 1>}, {pipeline_mode = #tpu.pipeline_mode<synchronous>, transform_indices = @transform_7, window_bounds = array<i64: 8, 1>}, {pipeline_mode = #tpu.pipeline_mode<synchronous>, transform_indices = @transform_8, window_bounds = array<i64: 8, 1>}, {pipeline_mode = #tpu.pipeline_mode<synchronous>, transform_indices = @transform_9, window_bounds = array<i64: 9, 1, 256>}, {pipeline_mode = #tpu.pipeline_mode<synchronous>, transform_indices = @transform_10, window_bounds = array<i64: 2, 1, 256>}, {pipeline_mode = #tpu.pipeline_mode<synchronous>, transform_indices = @transform_11, window_bounds = array<i64: 2, 8, 256>}]} {
    %c0 = arith.constant 0 : index
    %c0_0 = arith.constant 0 : index
    %c0_1 = arith.constant 0 : index
    %0 = vector.load %arg1[%c0, %c0_0, %c0_1] : memref<2x4x256xf32, #tpu.memory_space<vmem>>, vector<1x4x256xf32>
    %1 = vector.shape_cast %0 : vector<1x4x256xf32> to vector<4x256xf32>
    %c1 = arith.constant 1 : index
    %c0_2 = arith.constant 0 : index
    %c0_3 = arith.constant 0 : index
    %2 = vector.load %arg1[%c1, %c0_2, %c0_3] : memref<2x4x256xf32, #tpu.memory_space<vmem>>, vector<1x4x256xf32>
    %3 = vector.shape_cast %2 : vector<1x4x256xf32> to vector<4x256xf32>
    %cst = arith.constant 0.000000e+00 : f32
    %4 = vector.broadcast %cst : f32 to vector<8x256xf32>
    %c17_i32 = arith.constant 17 : i32
    %5 = tpu.dynamic_rotate %1 by %c17_i32 dim 1 : vector<4x256xf32>, i32 -> vector<4x256xf32>
    %c0_4 = arith.constant 0 : index
    %c0_5 = arith.constant 0 : index
    %c0_6 = arith.constant 0 : index
    %6 = vector.load %arg10[%c0_4, %c0_5, %c0_6] : memref<9x1x256xf32, #tpu.memory_space<vmem>>, vector<1x1x256xf32>
    %7 = vector.shape_cast %6 : vector<1x1x256xf32> to vector<1x256xf32>
    %8 = vector.broadcast %7 : vector<1x256xf32> to vector<4x256xf32>
    %9 = arith.mulf %5, %8 : vector<4x256xf32>
    %c0_7 = arith.constant 0 : index
    %c0_8 = arith.constant 0 : index
    %c0_9 = arith.constant 0 : index
    %10 = vector.load %arg2[%c0_7, %c0_8, %c0_9] : memref<9x8x4xf32, #tpu.memory_space<vmem>>, vector<1x8x4xf32>
    %11 = vector.shape_cast %10 : vector<1x8x4xf32> to vector<8x4xf32>
    %cst_10 = arith.constant dense<0.000000e+00> : vector<8x256xf32>
    %12 = tpu.matmul %11, %9, %cst_10 {dimension_numbers = #tpu.dot_dimension_numbers<[1], [0], [0], [1], [0, 0, 1, 1], [], []>} : vector<8x4xf32>, vector<4x256xf32>, vector<8x256xf32> -> vector<8x256xf32>
    %13 = arith.addf %4, %12 : vector<8x256xf32>
    %c16_i32 = arith.constant 16 : i32
    %14 = tpu.dynamic_rotate %1 by %c16_i32 dim 1 : vector<4x256xf32>, i32 -> vector<4x256xf32>
    %c1_11 = arith.constant 1 : index
    %c0_12 = arith.constant 0 : index
    %c0_13 = arith.constant 0 : index
    %15 = vector.load %arg10[%c1_11, %c0_12, %c0_13] : memref<9x1x256xf32, #tpu.memory_space<vmem>>, vector<1x1x256xf32>
    %16 = vector.shape_cast %15 : vector<1x1x256xf32> to vector<1x256xf32>
    %17 = vector.broadcast %16 : vector<1x256xf32> to vector<4x256xf32>
    %18 = arith.mulf %14, %17 : vector<4x256xf32>
    %c1_14 = arith.constant 1 : index
    %c0_15 = arith.constant 0 : index
    %c0_16 = arith.constant 0 : index
    %19 = vector.load %arg2[%c1_14, %c0_15, %c0_16] : memref<9x8x4xf32, #tpu.memory_space<vmem>>, vector<1x8x4xf32>
    %20 = vector.shape_cast %19 : vector<1x8x4xf32> to vector<8x4xf32>
    %cst_17 = arith.constant dense<0.000000e+00> : vector<8x256xf32>
    %21 = tpu.matmul %20, %18, %cst_17 {dimension_numbers = #tpu.dot_dimension_numbers<[1], [0], [0], [1], [0, 0, 1, 1], [], []>} : vector<8x4xf32>, vector<4x256xf32>, vector<8x256xf32> -> vector<8x256xf32>
    %22 = arith.addf %13, %21 : vector<8x256xf32>
    %c15_i32 = arith.constant 15 : i32
    %23 = tpu.dynamic_rotate %1 by %c15_i32 dim 1 : vector<4x256xf32>, i32 -> vector<4x256xf32>
    %c2 = arith.constant 2 : index
    %c0_18 = arith.constant 0 : index
    %c0_19 = arith.constant 0 : index
    %24 = vector.load %arg10[%c2, %c0_18, %c0_19] : memref<9x1x256xf32, #tpu.memory_space<vmem>>, vector<1x1x256xf32>
    %25 = vector.shape_cast %24 : vector<1x1x256xf32> to vector<1x256xf32>
    %26 = vector.broadcast %25 : vector<1x256xf32> to vector<4x256xf32>
    %27 = arith.mulf %23, %26 : vector<4x256xf32>
    %c2_20 = arith.constant 2 : index
    %c0_21 = arith.constant 0 : index
    %c0_22 = arith.constant 0 : index
    %28 = vector.load %arg2[%c2_20, %c0_21, %c0_22] : memref<9x8x4xf32, #tpu.memory_space<vmem>>, vector<1x8x4xf32>
    %29 = vector.shape_cast %28 : vector<1x8x4xf32> to vector<8x4xf32>
    %cst_23 = arith.constant dense<0.000000e+00> : vector<8x256xf32>
    %30 = tpu.matmul %29, %27, %cst_23 {dimension_numbers = #tpu.dot_dimension_numbers<[1], [0], [0], [1], [0, 0, 1, 1], [], []>} : vector<8x4xf32>, vector<4x256xf32>, vector<8x256xf32> -> vector<8x256xf32>
    %31 = arith.addf %22, %30 : vector<8x256xf32>
    %c1_i32 = arith.constant 1 : i32
    %32 = tpu.dynamic_rotate %1 by %c1_i32 dim 1 : vector<4x256xf32>, i32 -> vector<4x256xf32>
    %c3 = arith.constant 3 : index
    %c0_24 = arith.constant 0 : index
    %c0_25 = arith.constant 0 : index
    %33 = vector.load %arg10[%c3, %c0_24, %c0_25] : memref<9x1x256xf32, #tpu.memory_space<vmem>>, vector<1x1x256xf32>
    %34 = vector.shape_cast %33 : vector<1x1x256xf32> to vector<1x256xf32>
    %35 = vector.broadcast %34 : vector<1x256xf32> to vector<4x256xf32>
    %36 = arith.mulf %32, %35 : vector<4x256xf32>
    %c3_26 = arith.constant 3 : index
    %c0_27 = arith.constant 0 : index
    %c0_28 = arith.constant 0 : index
    %37 = vector.load %arg2[%c3_26, %c0_27, %c0_28] : memref<9x8x4xf32, #tpu.memory_space<vmem>>, vector<1x8x4xf32>
    %38 = vector.shape_cast %37 : vector<1x8x4xf32> to vector<8x4xf32>
    %cst_29 = arith.constant dense<0.000000e+00> : vector<8x256xf32>
    %39 = tpu.matmul %38, %36, %cst_29 {dimension_numbers = #tpu.dot_dimension_numbers<[1], [0], [0], [1], [0, 0, 1, 1], [], []>} : vector<8x4xf32>, vector<4x256xf32>, vector<8x256xf32> -> vector<8x256xf32>
    %40 = arith.addf %31, %39 : vector<8x256xf32>
    %c4 = arith.constant 4 : index
    %c0_30 = arith.constant 0 : index
    %c0_31 = arith.constant 0 : index
    %41 = vector.load %arg2[%c4, %c0_30, %c0_31] : memref<9x8x4xf32, #tpu.memory_space<vmem>>, vector<1x8x4xf32>
    %42 = vector.shape_cast %41 : vector<1x8x4xf32> to vector<8x4xf32>
    %cst_32 = arith.constant dense<0.000000e+00> : vector<8x256xf32>
    %43 = tpu.matmul %42, %1, %cst_32 {dimension_numbers = #tpu.dot_dimension_numbers<[1], [0], [0], [1], [0, 0, 1, 1], [], []>} : vector<8x4xf32>, vector<4x256xf32>, vector<8x256xf32> -> vector<8x256xf32>
    %44 = arith.addf %40, %43 : vector<8x256xf32>
    %c255_i32 = arith.constant 255 : i32
    %45 = tpu.dynamic_rotate %1 by %c255_i32 dim 1 : vector<4x256xf32>, i32 -> vector<4x256xf32>
    %c5 = arith.constant 5 : index
    %c0_33 = arith.constant 0 : index
    %c0_34 = arith.constant 0 : index
    %46 = vector.load %arg10[%c5, %c0_33, %c0_34] : memref<9x1x256xf32, #tpu.memory_space<vmem>>, vector<1x1x256xf32>
    %47 = vector.shape_cast %46 : vector<1x1x256xf32> to vector<1x256xf32>
    %48 = vector.broadcast %47 : vector<1x256xf32> to vector<4x256xf32>
    %49 = arith.mulf %45, %48 : vector<4x256xf32>
    %c5_35 = arith.constant 5 : index
    %c0_36 = arith.constant 0 : index
    %c0_37 = arith.constant 0 : index
    %50 = vector.load %arg2[%c5_35, %c0_36, %c0_37] : memref<9x8x4xf32, #tpu.memory_space<vmem>>, vector<1x8x4xf32>
    %51 = vector.shape_cast %50 : vector<1x8x4xf32> to vector<8x4xf32>
    %cst_38 = arith.constant dense<0.000000e+00> : vector<8x256xf32>
    %52 = tpu.matmul %51, %49, %cst_38 {dimension_numbers = #tpu.dot_dimension_numbers<[1], [0], [0], [1], [0, 0, 1, 1], [], []>} : vector<8x4xf32>, vector<4x256xf32>, vector<8x256xf32> -> vector<8x256xf32>
    %53 = arith.addf %44, %52 : vector<8x256xf32>
    %c241_i32 = arith.constant 241 : i32
    %54 = tpu.dynamic_rotate %1 by %c241_i32 dim 1 : vector<4x256xf32>, i32 -> vector<4x256xf32>
    %c6 = arith.constant 6 : index
    %c0_39 = arith.constant 0 : index
    %c0_40 = arith.constant 0 : index
    %55 = vector.load %arg10[%c6, %c0_39, %c0_40] : memref<9x1x256xf32, #tpu.memory_space<vmem>>, vector<1x1x256xf32>
    %56 = vector.shape_cast %55 : vector<1x1x256xf32> to vector<1x256xf32>
    %57 = vector.broadcast %56 : vector<1x256xf32> to vector<4x256xf32>
    %58 = arith.mulf %54, %57 : vector<4x256xf32>
    %c6_41 = arith.constant 6 : index
    %c0_42 = arith.constant 0 : index
    %c0_43 = arith.constant 0 : index
    %59 = vector.load %arg2[%c6_41, %c0_42, %c0_43] : memref<9x8x4xf32, #tpu.memory_space<vmem>>, vector<1x8x4xf32>
    %60 = vector.shape_cast %59 : vector<1x8x4xf32> to vector<8x4xf32>
    %cst_44 = arith.constant dense<0.000000e+00> : vector<8x256xf32>
    %61 = tpu.matmul %60, %58, %cst_44 {dimension_numbers = #tpu.dot_dimension_numbers<[1], [0], [0], [1], [0, 0, 1, 1], [], []>} : vector<8x4xf32>, vector<4x256xf32>, vector<8x256xf32> -> vector<8x256xf32>
    %62 = arith.addf %53, %61 : vector<8x256xf32>
    %c240_i32 = arith.constant 240 : i32
    %63 = tpu.dynamic_rotate %1 by %c240_i32 dim 1 : vector<4x256xf32>, i32 -> vector<4x256xf32>
    %c7 = arith.constant 7 : index
    %c0_45 = arith.constant 0 : index
    %c0_46 = arith.constant 0 : index
    %64 = vector.load %arg10[%c7, %c0_45, %c0_46] : memref<9x1x256xf32, #tpu.memory_space<vmem>>, vector<1x1x256xf32>
    %65 = vector.shape_cast %64 : vector<1x1x256xf32> to vector<1x256xf32>
    %66 = vector.broadcast %65 : vector<1x256xf32> to vector<4x256xf32>
    %67 = arith.mulf %63, %66 : vector<4x256xf32>
    %c7_47 = arith.constant 7 : index
    %c0_48 = arith.constant 0 : index
    %c0_49 = arith.constant 0 : index
    %68 = vector.load %arg2[%c7_47, %c0_48, %c0_49] : memref<9x8x4xf32, #tpu.memory_space<vmem>>, vector<1x8x4xf32>
    %69 = vector.shape_cast %68 : vector<1x8x4xf32> to vector<8x4xf32>
    %cst_50 = arith.constant dense<0.000000e+00> : vector<8x256xf32>
    %70 = tpu.matmul %69, %67, %cst_50 {dimension_numbers = #tpu.dot_dimension_numbers<[1], [0], [0], [1], [0, 0, 1, 1], [], []>} : vector<8x4xf32>, vector<4x256xf32>, vector<8x256xf32> -> vector<8x256xf32>
    %71 = arith.addf %62, %70 : vector<8x256xf32>
    %c239_i32 = arith.constant 239 : i32
    %72 = tpu.dynamic_rotate %1 by %c239_i32 dim 1 : vector<4x256xf32>, i32 -> vector<4x256xf32>
    %c8 = arith.constant 8 : index
    %c0_51 = arith.constant 0 : index
    %c0_52 = arith.constant 0 : index
    %73 = vector.load %arg10[%c8, %c0_51, %c0_52] : memref<9x1x256xf32, #tpu.memory_space<vmem>>, vector<1x1x256xf32>
    %74 = vector.shape_cast %73 : vector<1x1x256xf32> to vector<1x256xf32>
    %75 = vector.broadcast %74 : vector<1x256xf32> to vector<4x256xf32>
    %76 = arith.mulf %72, %75 : vector<4x256xf32>
    %c8_53 = arith.constant 8 : index
    %c0_54 = arith.constant 0 : index
    %c0_55 = arith.constant 0 : index
    %77 = vector.load %arg2[%c8_53, %c0_54, %c0_55] : memref<9x8x4xf32, #tpu.memory_space<vmem>>, vector<1x8x4xf32>
    %78 = vector.shape_cast %77 : vector<1x8x4xf32> to vector<8x4xf32>
    %cst_56 = arith.constant dense<0.000000e+00> : vector<8x256xf32>
    %79 = tpu.matmul %78, %76, %cst_56 {dimension_numbers = #tpu.dot_dimension_numbers<[1], [0], [0], [1], [0, 0, 1, 1], [], []>} : vector<8x4xf32>, vector<4x256xf32>, vector<8x256xf32> -> vector<8x256xf32>
    %80 = arith.addf %71, %79 : vector<8x256xf32>
    %c0_57 = arith.constant 0 : index
    %c0_58 = arith.constant 0 : index
    %81 = vector.load %arg3[%c0_57, %c0_58] : memref<8x1xf32, #tpu.memory_space<vmem>>, vector<8x1xf32>
    %82 = vector.broadcast %81 : vector<8x1xf32> to vector<8x256xf32>
    %83 = arith.addf %80, %82 : vector<8x256xf32>
    %cst_59 = arith.constant 0.000000e+00 : f32
    %84 = vector.broadcast %cst_59 : f32 to vector<8x256xf32>
    %85 = arith.maximumf %83, %84 : vector<8x256xf32>
    %cst_60 = arith.constant 0.000000e+00 : f32
    %86 = vector.broadcast %cst_60 : f32 to vector<8x256xf32>
    %c17_i32_61 = arith.constant 17 : i32
    %87 = tpu.dynamic_rotate %3 by %c17_i32_61 dim 1 : vector<4x256xf32>, i32 -> vector<4x256xf32>
    %c0_62 = arith.constant 0 : index
    %c0_63 = arith.constant 0 : index
    %c0_64 = arith.constant 0 : index
    %88 = vector.load %arg10[%c0_62, %c0_63, %c0_64] : memref<9x1x256xf32, #tpu.memory_space<vmem>>, vector<1x1x256xf32>
    %89 = vector.shape_cast %88 : vector<1x1x256xf32> to vector<1x256xf32>
    %90 = vector.broadcast %89 : vector<1x256xf32> to vector<4x256xf32>
    %91 = arith.mulf %87, %90 : vector<4x256xf32>
    %c0_65 = arith.constant 0 : index
    %c0_66 = arith.constant 0 : index
    %c0_67 = arith.constant 0 : index
    %92 = vector.load %arg2[%c0_65, %c0_66, %c0_67] : memref<9x8x4xf32, #tpu.memory_space<vmem>>, vector<1x8x4xf32>
    %93 = vector.shape_cast %92 : vector<1x8x4xf32> to vector<8x4xf32>
    %cst_68 = arith.constant dense<0.000000e+00> : vector<8x256xf32>
    %94 = tpu.matmul %93, %91, %cst_68 {dimension_numbers = #tpu.dot_dimension_numbers<[1], [0], [0], [1], [0, 0, 1, 1], [], []>} : vector<8x4xf32>, vector<4x256xf32>, vector<8x256xf32> -> vector<8x256xf32>
    %95 = arith.addf %86, %94 : vector<8x256xf32>
    %c16_i32_69 = arith.constant 16 : i32
    %96 = tpu.dynamic_rotate %3 by %c16_i32_69 dim 1 : vector<4x256xf32>, i32 -> vector<4x256xf32>
    %c1_70 = arith.constant 1 : index
    %c0_71 = arith.constant 0 : index
    %c0_72 = arith.constant 0 : index
    %97 = vector.load %arg10[%c1_70, %c0_71, %c0_72] : memref<9x1x256xf32, #tpu.memory_space<vmem>>, vector<1x1x256xf32>
    %98 = vector.shape_cast %97 : vector<1x1x256xf32> to vector<1x256xf32>
    %99 = vector.broadcast %98 : vector<1x256xf32> to vector<4x256xf32>
    %100 = arith.mulf %96, %99 : vector<4x256xf32>
    %c1_73 = arith.constant 1 : index
    %c0_74 = arith.constant 0 : index
    %c0_75 = arith.constant 0 : index
    %101 = vector.load %arg2[%c1_73, %c0_74, %c0_75] : memref<9x8x4xf32, #tpu.memory_space<vmem>>, vector<1x8x4xf32>
    %102 = vector.shape_cast %101 : vector<1x8x4xf32> to vector<8x4xf32>
    %cst_76 = arith.constant dense<0.000000e+00> : vector<8x256xf32>
    %103 = tpu.matmul %102, %100, %cst_76 {dimension_numbers = #tpu.dot_dimension_numbers<[1], [0], [0], [1], [0, 0, 1, 1], [], []>} : vector<8x4xf32>, vector<4x256xf32>, vector<8x256xf32> -> vector<8x256xf32>
    %104 = arith.addf %95, %103 : vector<8x256xf32>
    %c15_i32_77 = arith.constant 15 : i32
    %105 = tpu.dynamic_rotate %3 by %c15_i32_77 dim 1 : vector<4x256xf32>, i32 -> vector<4x256xf32>
    %c2_78 = arith.constant 2 : index
    %c0_79 = arith.constant 0 : index
    %c0_80 = arith.constant 0 : index
    %106 = vector.load %arg10[%c2_78, %c0_79, %c0_80] : memref<9x1x256xf32, #tpu.memory_space<vmem>>, vector<1x1x256xf32>
    %107 = vector.shape_cast %106 : vector<1x1x256xf32> to vector<1x256xf32>
    %108 = vector.broadcast %107 : vector<1x256xf32> to vector<4x256xf32>
    %109 = arith.mulf %105, %108 : vector<4x256xf32>
    %c2_81 = arith.constant 2 : index
    %c0_82 = arith.constant 0 : index
    %c0_83 = arith.constant 0 : index
    %110 = vector.load %arg2[%c2_81, %c0_82, %c0_83] : memref<9x8x4xf32, #tpu.memory_space<vmem>>, vector<1x8x4xf32>
    %111 = vector.shape_cast %110 : vector<1x8x4xf32> to vector<8x4xf32>
    %cst_84 = arith.constant dense<0.000000e+00> : vector<8x256xf32>
    %112 = tpu.matmul %111, %109, %cst_84 {dimension_numbers = #tpu.dot_dimension_numbers<[1], [0], [0], [1], [0, 0, 1, 1], [], []>} : vector<8x4xf32>, vector<4x256xf32>, vector<8x256xf32> -> vector<8x256xf32>
    %113 = arith.addf %104, %112 : vector<8x256xf32>
    %c1_i32_85 = arith.constant 1 : i32
    %114 = tpu.dynamic_rotate %3 by %c1_i32_85 dim 1 : vector<4x256xf32>, i32 -> vector<4x256xf32>
    %c3_86 = arith.constant 3 : index
    %c0_87 = arith.constant 0 : index
    %c0_88 = arith.constant 0 : index
    %115 = vector.load %arg10[%c3_86, %c0_87, %c0_88] : memref<9x1x256xf32, #tpu.memory_space<vmem>>, vector<1x1x256xf32>
    %116 = vector.shape_cast %115 : vector<1x1x256xf32> to vector<1x256xf32>
    %117 = vector.broadcast %116 : vector<1x256xf32> to vector<4x256xf32>
    %118 = arith.mulf %114, %117 : vector<4x256xf32>
    %c3_89 = arith.constant 3 : index
    %c0_90 = arith.constant 0 : index
    %c0_91 = arith.constant 0 : index
    %119 = vector.load %arg2[%c3_89, %c0_90, %c0_91] : memref<9x8x4xf32, #tpu.memory_space<vmem>>, vector<1x8x4xf32>
    %120 = vector.shape_cast %119 : vector<1x8x4xf32> to vector<8x4xf32>
    %cst_92 = arith.constant dense<0.000000e+00> : vector<8x256xf32>
    %121 = tpu.matmul %120, %118, %cst_92 {dimension_numbers = #tpu.dot_dimension_numbers<[1], [0], [0], [1], [0, 0, 1, 1], [], []>} : vector<8x4xf32>, vector<4x256xf32>, vector<8x256xf32> -> vector<8x256xf32>
    %122 = arith.addf %113, %121 : vector<8x256xf32>
    %c4_93 = arith.constant 4 : index
    %c0_94 = arith.constant 0 : index
    %c0_95 = arith.constant 0 : index
    %123 = vector.load %arg2[%c4_93, %c0_94, %c0_95] : memref<9x8x4xf32, #tpu.memory_space<vmem>>, vector<1x8x4xf32>
    %124 = vector.shape_cast %123 : vector<1x8x4xf32> to vector<8x4xf32>
    %cst_96 = arith.constant dense<0.000000e+00> : vector<8x256xf32>
    %125 = tpu.matmul %124, %3, %cst_96 {dimension_numbers = #tpu.dot_dimension_numbers<[1], [0], [0], [1], [0, 0, 1, 1], [], []>} : vector<8x4xf32>, vector<4x256xf32>, vector<8x256xf32> -> vector<8x256xf32>
    %126 = arith.addf %122, %125 : vector<8x256xf32>
    %c255_i32_97 = arith.constant 255 : i32
    %127 = tpu.dynamic_rotate %3 by %c255_i32_97 dim 1 : vector<4x256xf32>, i32 -> vector<4x256xf32>
    %c5_98 = arith.constant 5 : index
    %c0_99 = arith.constant 0 : index
    %c0_100 = arith.constant 0 : index
    %128 = vector.load %arg10[%c5_98, %c0_99, %c0_100] : memref<9x1x256xf32, #tpu.memory_space<vmem>>, vector<1x1x256xf32>
    %129 = vector.shape_cast %128 : vector<1x1x256xf32> to vector<1x256xf32>
    %130 = vector.broadcast %129 : vector<1x256xf32> to vector<4x256xf32>
    %131 = arith.mulf %127, %130 : vector<4x256xf32>
    %c5_101 = arith.constant 5 : index
    %c0_102 = arith.constant 0 : index
    %c0_103 = arith.constant 0 : index
    %132 = vector.load %arg2[%c5_101, %c0_102, %c0_103] : memref<9x8x4xf32, #tpu.memory_space<vmem>>, vector<1x8x4xf32>
    %133 = vector.shape_cast %132 : vector<1x8x4xf32> to vector<8x4xf32>
    %cst_104 = arith.constant dense<0.000000e+00> : vector<8x256xf32>
    %134 = tpu.matmul %133, %131, %cst_104 {dimension_numbers = #tpu.dot_dimension_numbers<[1], [0], [0], [1], [0, 0, 1, 1], [], []>} : vector<8x4xf32>, vector<4x256xf32>, vector<8x256xf32> -> vector<8x256xf32>
    %135 = arith.addf %126, %134 : vector<8x256xf32>
    %c241_i32_105 = arith.constant 241 : i32
    %136 = tpu.dynamic_rotate %3 by %c241_i32_105 dim 1 : vector<4x256xf32>, i32 -> vector<4x256xf32>
    %c6_106 = arith.constant 6 : index
    %c0_107 = arith.constant 0 : index
    %c0_108 = arith.constant 0 : index
    %137 = vector.load %arg10[%c6_106, %c0_107, %c0_108] : memref<9x1x256xf32, #tpu.memory_space<vmem>>, vector<1x1x256xf32>
    %138 = vector.shape_cast %137 : vector<1x1x256xf32> to vector<1x256xf32>
    %139 = vector.broadcast %138 : vector<1x256xf32> to vector<4x256xf32>
    %140 = arith.mulf %136, %139 : vector<4x256xf32>
    %c6_109 = arith.constant 6 : index
    %c0_110 = arith.constant 0 : index
    %c0_111 = arith.constant 0 : index
    %141 = vector.load %arg2[%c6_109, %c0_110, %c0_111] : memref<9x8x4xf32, #tpu.memory_space<vmem>>, vector<1x8x4xf32>
    %142 = vector.shape_cast %141 : vector<1x8x4xf32> to vector<8x4xf32>
    %cst_112 = arith.constant dense<0.000000e+00> : vector<8x256xf32>
    %143 = tpu.matmul %142, %140, %cst_112 {dimension_numbers = #tpu.dot_dimension_numbers<[1], [0], [0], [1], [0, 0, 1, 1], [], []>} : vector<8x4xf32>, vector<4x256xf32>, vector<8x256xf32> -> vector<8x256xf32>
    %144 = arith.addf %135, %143 : vector<8x256xf32>
    %c240_i32_113 = arith.constant 240 : i32
    %145 = tpu.dynamic_rotate %3 by %c240_i32_113 dim 1 : vector<4x256xf32>, i32 -> vector<4x256xf32>
    %c7_114 = arith.constant 7 : index
    %c0_115 = arith.constant 0 : index
    %c0_116 = arith.constant 0 : index
    %146 = vector.load %arg10[%c7_114, %c0_115, %c0_116] : memref<9x1x256xf32, #tpu.memory_space<vmem>>, vector<1x1x256xf32>
    %147 = vector.shape_cast %146 : vector<1x1x256xf32> to vector<1x256xf32>
    %148 = vector.broadcast %147 : vector<1x256xf32> to vector<4x256xf32>
    %149 = arith.mulf %145, %148 : vector<4x256xf32>
    %c7_117 = arith.constant 7 : index
    %c0_118 = arith.constant 0 : index
    %c0_119 = arith.constant 0 : index
    %150 = vector.load %arg2[%c7_117, %c0_118, %c0_119] : memref<9x8x4xf32, #tpu.memory_space<vmem>>, vector<1x8x4xf32>
    %151 = vector.shape_cast %150 : vector<1x8x4xf32> to vector<8x4xf32>
    %cst_120 = arith.constant dense<0.000000e+00> : vector<8x256xf32>
    %152 = tpu.matmul %151, %149, %cst_120 {dimension_numbers = #tpu.dot_dimension_numbers<[1], [0], [0], [1], [0, 0, 1, 1], [], []>} : vector<8x4xf32>, vector<4x256xf32>, vector<8x256xf32> -> vector<8x256xf32>
    %153 = arith.addf %144, %152 : vector<8x256xf32>
    %c239_i32_121 = arith.constant 239 : i32
    %154 = tpu.dynamic_rotate %3 by %c239_i32_121 dim 1 : vector<4x256xf32>, i32 -> vector<4x256xf32>
    %c8_122 = arith.constant 8 : index
    %c0_123 = arith.constant 0 : index
    %c0_124 = arith.constant 0 : index
    %155 = vector.load %arg10[%c8_122, %c0_123, %c0_124] : memref<9x1x256xf32, #tpu.memory_space<vmem>>, vector<1x1x256xf32>
    %156 = vector.shape_cast %155 : vector<1x1x256xf32> to vector<1x256xf32>
    %157 = vector.broadcast %156 : vector<1x256xf32> to vector<4x256xf32>
    %158 = arith.mulf %154, %157 : vector<4x256xf32>
    %c8_125 = arith.constant 8 : index
    %c0_126 = arith.constant 0 : index
    %c0_127 = arith.constant 0 : index
    %159 = vector.load %arg2[%c8_125, %c0_126, %c0_127] : memref<9x8x4xf32, #tpu.memory_space<vmem>>, vector<1x8x4xf32>
    %160 = vector.shape_cast %159 : vector<1x8x4xf32> to vector<8x4xf32>
    %cst_128 = arith.constant dense<0.000000e+00> : vector<8x256xf32>
    %161 = tpu.matmul %160, %158, %cst_128 {dimension_numbers = #tpu.dot_dimension_numbers<[1], [0], [0], [1], [0, 0, 1, 1], [], []>} : vector<8x4xf32>, vector<4x256xf32>, vector<8x256xf32> -> vector<8x256xf32>
    %162 = arith.addf %153, %161 : vector<8x256xf32>
    %c0_129 = arith.constant 0 : index
    %c0_130 = arith.constant 0 : index
    %163 = vector.load %arg3[%c0_129, %c0_130] : memref<8x1xf32, #tpu.memory_space<vmem>>, vector<8x1xf32>
    %164 = vector.broadcast %163 : vector<8x1xf32> to vector<8x256xf32>
    %165 = arith.addf %162, %164 : vector<8x256xf32>
    %cst_131 = arith.constant 0.000000e+00 : f32
    %166 = vector.broadcast %cst_131 : f32 to vector<8x256xf32>
    %167 = arith.maximumf %165, %166 : vector<8x256xf32>
    %c0_132 = arith.constant 0 : index
    %c0_133 = arith.constant 0 : index
    %c0_134 = arith.constant 0 : index
    %168 = vector.load %arg11[%c0_132, %c0_133, %c0_134] : memref<2x1x256xf32, #tpu.memory_space<vmem>>, vector<1x1x256xf32>
    %169 = vector.shape_cast %168 : vector<1x1x256xf32> to vector<1x256xf32>
    %170 = vector.broadcast %169 : vector<1x256xf32> to vector<8x256xf32>
    %171 = arith.mulf %85, %170 : vector<8x256xf32>
    %cst_135 = arith.constant dense<0.000000e+00> : vector<8xf32>
    %172 = vector.multi_reduction <add>, %171, %cst_135 [1] : vector<8x256xf32> to vector<8xf32>
    %173 = vector.shape_cast %172 : vector<8xf32> to vector<8x1xf32>
    %174 = arith.mulf %171, %85 : vector<8x256xf32>
    %cst_136 = arith.constant dense<0.000000e+00> : vector<8xf32>
    %175 = vector.multi_reduction <add>, %174, %cst_136 [1] : vector<8x256xf32> to vector<8xf32>
    %176 = vector.shape_cast %175 : vector<8xf32> to vector<8x1xf32>
    %177 = vector.broadcast %169 : vector<1x256xf32> to vector<8x256xf32>
    %178 = arith.mulf %167, %177 : vector<8x256xf32>
    %cst_137 = arith.constant dense<0.000000e+00> : vector<8xf32>
    %179 = vector.multi_reduction <add>, %178, %cst_137 [1] : vector<8x256xf32> to vector<8xf32>
    %180 = vector.shape_cast %179 : vector<8xf32> to vector<8x1xf32>
    %181 = arith.mulf %178, %167 : vector<8x256xf32>
    %cst_138 = arith.constant dense<0.000000e+00> : vector<8xf32>
    %182 = vector.multi_reduction <add>, %181, %cst_138 [1] : vector<8x256xf32> to vector<8xf32>
    %183 = vector.shape_cast %182 : vector<8xf32> to vector<8x1xf32>
    %184 = arith.addf %173, %180 : vector<8x1xf32>
    %185 = arith.addf %176, %183 : vector<8x1xf32>
    %cst_139 = arith.constant 0.001953125 : f32
    %186 = vector.broadcast %cst_139 : f32 to vector<8x1xf32>
    %187 = arith.mulf %184, %186 : vector<8x1xf32>
    %cst_140 = arith.constant 0.001953125 : f32
    %188 = vector.broadcast %cst_140 : f32 to vector<8x1xf32>
    %189 = arith.mulf %185, %188 : vector<8x1xf32>
    %190 = arith.mulf %187, %187 : vector<8x1xf32>
    %191 = arith.subf %189, %190 : vector<8x1xf32>
    %cst_141 = arith.constant 0.000000e+00 : f32
    %192 = vector.broadcast %cst_141 : f32 to vector<8x1xf32>
    %193 = arith.maximumf %191, %192 : vector<8x1xf32>
    %c0_142 = arith.constant 0 : index
    %c0_143 = arith.constant 0 : index
    %194 = vector.load %arg6[%c0_142, %c0_143] : memref<8x1xf32, #tpu.memory_space<vmem>>, vector<8x1xf32>
    %cst_144 = arith.constant 9.99999974E-6 : f32
    %195 = vector.broadcast %cst_144 : f32 to vector<8x1xf32>
    %196 = arith.addf %193, %195 : vector<8x1xf32>
    %197 = math.rsqrt %196 : vector<8x1xf32>
    %198 = arith.mulf %194, %197 : vector<8x1xf32>
    %c0_145 = arith.constant 0 : index
    %c0_146 = arith.constant 0 : index
    %199 = vector.load %arg7[%c0_145, %c0_146] : memref<8x1xf32, #tpu.memory_space<vmem>>, vector<8x1xf32>
    %200 = arith.mulf %187, %198 : vector<8x1xf32>
    %201 = arith.subf %199, %200 : vector<8x1xf32>
    %202 = vector.broadcast %198 : vector<8x1xf32> to vector<8x256xf32>
    %203 = arith.mulf %85, %202 : vector<8x256xf32>
    %204 = vector.broadcast %201 : vector<8x1xf32> to vector<8x256xf32>
    %205 = arith.addf %203, %204 : vector<8x256xf32>
    %206 = vector.broadcast %198 : vector<8x1xf32> to vector<8x256xf32>
    %207 = arith.mulf %167, %206 : vector<8x256xf32>
    %208 = vector.broadcast %201 : vector<8x1xf32> to vector<8x256xf32>
    %209 = arith.addf %207, %208 : vector<8x256xf32>
    %cst_147 = arith.constant 0.000000e+00 : f32
    %210 = vector.broadcast %cst_147 : f32 to vector<8x256xf32>
    %c17_i32_148 = arith.constant 17 : i32
    %211 = tpu.dynamic_rotate %205 by %c17_i32_148 dim 1 : vector<8x256xf32>, i32 -> vector<8x256xf32>
    %c0_149 = arith.constant 0 : index
    %c0_150 = arith.constant 0 : index
    %c0_151 = arith.constant 0 : index
    %212 = vector.load %arg10[%c0_149, %c0_150, %c0_151] : memref<9x1x256xf32, #tpu.memory_space<vmem>>, vector<1x1x256xf32>
    %213 = vector.shape_cast %212 : vector<1x1x256xf32> to vector<1x256xf32>
    %214 = vector.broadcast %213 : vector<1x256xf32> to vector<8x256xf32>
    %215 = arith.mulf %211, %214 : vector<8x256xf32>
    %c0_152 = arith.constant 0 : index
    %c0_153 = arith.constant 0 : index
    %c0_154 = arith.constant 0 : index
    %216 = vector.load %arg4[%c0_152, %c0_153, %c0_154] : memref<9x8x8xf32, #tpu.memory_space<vmem>>, vector<1x8x8xf32>
    %217 = vector.shape_cast %216 : vector<1x8x8xf32> to vector<8x8xf32>
    %cst_155 = arith.constant dense<0.000000e+00> : vector<8x256xf32>
    %218 = tpu.matmul %217, %215, %cst_155 {dimension_numbers = #tpu.dot_dimension_numbers<[1], [0], [0], [1], [0, 0, 1, 1], [], []>} : vector<8x8xf32>, vector<8x256xf32>, vector<8x256xf32> -> vector<8x256xf32>
    %219 = arith.addf %210, %218 : vector<8x256xf32>
    %c16_i32_156 = arith.constant 16 : i32
    %220 = tpu.dynamic_rotate %205 by %c16_i32_156 dim 1 : vector<8x256xf32>, i32 -> vector<8x256xf32>
    %c1_157 = arith.constant 1 : index
    %c0_158 = arith.constant 0 : index
    %c0_159 = arith.constant 0 : index
    %221 = vector.load %arg10[%c1_157, %c0_158, %c0_159] : memref<9x1x256xf32, #tpu.memory_space<vmem>>, vector<1x1x256xf32>
    %222 = vector.shape_cast %221 : vector<1x1x256xf32> to vector<1x256xf32>
    %223 = vector.broadcast %222 : vector<1x256xf32> to vector<8x256xf32>
    %224 = arith.mulf %220, %223 : vector<8x256xf32>
    %c1_160 = arith.constant 1 : index
    %c0_161 = arith.constant 0 : index
    %c0_162 = arith.constant 0 : index
    %225 = vector.load %arg4[%c1_160, %c0_161, %c0_162] : memref<9x8x8xf32, #tpu.memory_space<vmem>>, vector<1x8x8xf32>
    %226 = vector.shape_cast %225 : vector<1x8x8xf32> to vector<8x8xf32>
    %cst_163 = arith.constant dense<0.000000e+00> : vector<8x256xf32>
    %227 = tpu.matmul %226, %224, %cst_163 {dimension_numbers = #tpu.dot_dimension_numbers<[1], [0], [0], [1], [0, 0, 1, 1], [], []>} : vector<8x8xf32>, vector<8x256xf32>, vector<8x256xf32> -> vector<8x256xf32>
    %228 = arith.addf %219, %227 : vector<8x256xf32>
    %c15_i32_164 = arith.constant 15 : i32
    %229 = tpu.dynamic_rotate %205 by %c15_i32_164 dim 1 : vector<8x256xf32>, i32 -> vector<8x256xf32>
    %c2_165 = arith.constant 2 : index
    %c0_166 = arith.constant 0 : index
    %c0_167 = arith.constant 0 : index
    %230 = vector.load %arg10[%c2_165, %c0_166, %c0_167] : memref<9x1x256xf32, #tpu.memory_space<vmem>>, vector<1x1x256xf32>
    %231 = vector.shape_cast %230 : vector<1x1x256xf32> to vector<1x256xf32>
    %232 = vector.broadcast %231 : vector<1x256xf32> to vector<8x256xf32>
    %233 = arith.mulf %229, %232 : vector<8x256xf32>
    %c2_168 = arith.constant 2 : index
    %c0_169 = arith.constant 0 : index
    %c0_170 = arith.constant 0 : index
    %234 = vector.load %arg4[%c2_168, %c0_169, %c0_170] : memref<9x8x8xf32, #tpu.memory_space<vmem>>, vector<1x8x8xf32>
    %235 = vector.shape_cast %234 : vector<1x8x8xf32> to vector<8x8xf32>
    %cst_171 = arith.constant dense<0.000000e+00> : vector<8x256xf32>
    %236 = tpu.matmul %235, %233, %cst_171 {dimension_numbers = #tpu.dot_dimension_numbers<[1], [0], [0], [1], [0, 0, 1, 1], [], []>} : vector<8x8xf32>, vector<8x256xf32>, vector<8x256xf32> -> vector<8x256xf32>
    %237 = arith.addf %228, %236 : vector<8x256xf32>
    %c1_i32_172 = arith.constant 1 : i32
    %238 = tpu.dynamic_rotate %205 by %c1_i32_172 dim 1 : vector<8x256xf32>, i32 -> vector<8x256xf32>
    %c3_173 = arith.constant 3 : index
    %c0_174 = arith.constant 0 : index
    %c0_175 = arith.constant 0 : index
    %239 = vector.load %arg10[%c3_173, %c0_174, %c0_175] : memref<9x1x256xf32, #tpu.memory_space<vmem>>, vector<1x1x256xf32>
    %240 = vector.shape_cast %239 : vector<1x1x256xf32> to vector<1x256xf32>
    %241 = vector.broadcast %240 : vector<1x256xf32> to vector<8x256xf32>
    %242 = arith.mulf %238, %241 : vector<8x256xf32>
    %c3_176 = arith.constant 3 : index
    %c0_177 = arith.constant 0 : index
    %c0_178 = arith.constant 0 : index
    %243 = vector.load %arg4[%c3_176, %c0_177, %c0_178] : memref<9x8x8xf32, #tpu.memory_space<vmem>>, vector<1x8x8xf32>
    %244 = vector.shape_cast %243 : vector<1x8x8xf32> to vector<8x8xf32>
    %cst_179 = arith.constant dense<0.000000e+00> : vector<8x256xf32>
    %245 = tpu.matmul %244, %242, %cst_179 {dimension_numbers = #tpu.dot_dimension_numbers<[1], [0], [0], [1], [0, 0, 1, 1], [], []>} : vector<8x8xf32>, vector<8x256xf32>, vector<8x256xf32> -> vector<8x256xf32>
    %246 = arith.addf %237, %245 : vector<8x256xf32>
    %c4_180 = arith.constant 4 : index
    %c0_181 = arith.constant 0 : index
    %c0_182 = arith.constant 0 : index
    %247 = vector.load %arg4[%c4_180, %c0_181, %c0_182] : memref<9x8x8xf32, #tpu.memory_space<vmem>>, vector<1x8x8xf32>
    %248 = vector.shape_cast %247 : vector<1x8x8xf32> to vector<8x8xf32>
    %cst_183 = arith.constant dense<0.000000e+00> : vector<8x256xf32>
    %249 = tpu.matmul %248, %205, %cst_183 {dimension_numbers = #tpu.dot_dimension_numbers<[1], [0], [0], [1], [0, 0, 1, 1], [], []>} : vector<8x8xf32>, vector<8x256xf32>, vector<8x256xf32> -> vector<8x256xf32>
    %250 = arith.addf %246, %249 : vector<8x256xf32>
    %c255_i32_184 = arith.constant 255 : i32
    %251 = tpu.dynamic_rotate %205 by %c255_i32_184 dim 1 : vector<8x256xf32>, i32 -> vector<8x256xf32>
    %c5_185 = arith.constant 5 : index
    %c0_186 = arith.constant 0 : index
    %c0_187 = arith.constant 0 : index
    %252 = vector.load %arg10[%c5_185, %c0_186, %c0_187] : memref<9x1x256xf32, #tpu.memory_space<vmem>>, vector<1x1x256xf32>
    %253 = vector.shape_cast %252 : vector<1x1x256xf32> to vector<1x256xf32>
    %254 = vector.broadcast %253 : vector<1x256xf32> to vector<8x256xf32>
    %255 = arith.mulf %251, %254 : vector<8x256xf32>
    %c5_188 = arith.constant 5 : index
    %c0_189 = arith.constant 0 : index
    %c0_190 = arith.constant 0 : index
    %256 = vector.load %arg4[%c5_188, %c0_189, %c0_190] : memref<9x8x8xf32, #tpu.memory_space<vmem>>, vector<1x8x8xf32>
    %257 = vector.shape_cast %256 : vector<1x8x8xf32> to vector<8x8xf32>
    %cst_191 = arith.constant dense<0.000000e+00> : vector<8x256xf32>
    %258 = tpu.matmul %257, %255, %cst_191 {dimension_numbers = #tpu.dot_dimension_numbers<[1], [0], [0], [1], [0, 0, 1, 1], [], []>} : vector<8x8xf32>, vector<8x256xf32>, vector<8x256xf32> -> vector<8x256xf32>
    %259 = arith.addf %250, %258 : vector<8x256xf32>
    %c241_i32_192 = arith.constant 241 : i32
    %260 = tpu.dynamic_rotate %205 by %c241_i32_192 dim 1 : vector<8x256xf32>, i32 -> vector<8x256xf32>
    %c6_193 = arith.constant 6 : index
    %c0_194 = arith.constant 0 : index
    %c0_195 = arith.constant 0 : index
    %261 = vector.load %arg10[%c6_193, %c0_194, %c0_195] : memref<9x1x256xf32, #tpu.memory_space<vmem>>, vector<1x1x256xf32>
    %262 = vector.shape_cast %261 : vector<1x1x256xf32> to vector<1x256xf32>
    %263 = vector.broadcast %262 : vector<1x256xf32> to vector<8x256xf32>
    %264 = arith.mulf %260, %263 : vector<8x256xf32>
    %c6_196 = arith.constant 6 : index
    %c0_197 = arith.constant 0 : index
    %c0_198 = arith.constant 0 : index
    %265 = vector.load %arg4[%c6_196, %c0_197, %c0_198] : memref<9x8x8xf32, #tpu.memory_space<vmem>>, vector<1x8x8xf32>
    %266 = vector.shape_cast %265 : vector<1x8x8xf32> to vector<8x8xf32>
    %cst_199 = arith.constant dense<0.000000e+00> : vector<8x256xf32>
    %267 = tpu.matmul %266, %264, %cst_199 {dimension_numbers = #tpu.dot_dimension_numbers<[1], [0], [0], [1], [0, 0, 1, 1], [], []>} : vector<8x8xf32>, vector<8x256xf32>, vector<8x256xf32> -> vector<8x256xf32>
    %268 = arith.addf %259, %267 : vector<8x256xf32>
    %c240_i32_200 = arith.constant 240 : i32
    %269 = tpu.dynamic_rotate %205 by %c240_i32_200 dim 1 : vector<8x256xf32>, i32 -> vector<8x256xf32>
    %c7_201 = arith.constant 7 : index
    %c0_202 = arith.constant 0 : index
    %c0_203 = arith.constant 0 : index
    %270 = vector.load %arg10[%c7_201, %c0_202, %c0_203] : memref<9x1x256xf32, #tpu.memory_space<vmem>>, vector<1x1x256xf32>
    %271 = vector.shape_cast %270 : vector<1x1x256xf32> to vector<1x256xf32>
    %272 = vector.broadcast %271 : vector<1x256xf32> to vector<8x256xf32>
    %273 = arith.mulf %269, %272 : vector<8x256xf32>
    %c7_204 = arith.constant 7 : index
    %c0_205 = arith.constant 0 : index
    %c0_206 = arith.constant 0 : index
    %274 = vector.load %arg4[%c7_204, %c0_205, %c0_206] : memref<9x8x8xf32, #tpu.memory_space<vmem>>, vector<1x8x8xf32>
    %275 = vector.shape_cast %274 : vector<1x8x8xf32> to vector<8x8xf32>
    %cst_207 = arith.constant dense<0.000000e+00> : vector<8x256xf32>
    %276 = tpu.matmul %275, %273, %cst_207 {dimension_numbers = #tpu.dot_dimension_numbers<[1], [0], [0], [1], [0, 0, 1, 1], [], []>} : vector<8x8xf32>, vector<8x256xf32>, vector<8x256xf32> -> vector<8x256xf32>
    %277 = arith.addf %268, %276 : vector<8x256xf32>
    %c239_i32_208 = arith.constant 239 : i32
    %278 = tpu.dynamic_rotate %205 by %c239_i32_208 dim 1 : vector<8x256xf32>, i32 -> vector<8x256xf32>
    %c8_209 = arith.constant 8 : index
    %c0_210 = arith.constant 0 : index
    %c0_211 = arith.constant 0 : index
    %279 = vector.load %arg10[%c8_209, %c0_210, %c0_211] : memref<9x1x256xf32, #tpu.memory_space<vmem>>, vector<1x1x256xf32>
    %280 = vector.shape_cast %279 : vector<1x1x256xf32> to vector<1x256xf32>
    %281 = vector.broadcast %280 : vector<1x256xf32> to vector<8x256xf32>
    %282 = arith.mulf %278, %281 : vector<8x256xf32>
    %c8_212 = arith.constant 8 : index
    %c0_213 = arith.constant 0 : index
    %c0_214 = arith.constant 0 : index
    %283 = vector.load %arg4[%c8_212, %c0_213, %c0_214] : memref<9x8x8xf32, #tpu.memory_space<vmem>>, vector<1x8x8xf32>
    %284 = vector.shape_cast %283 : vector<1x8x8xf32> to vector<8x8xf32>
    %cst_215 = arith.constant dense<0.000000e+00> : vector<8x256xf32>
    %285 = tpu.matmul %284, %282, %cst_215 {dimension_numbers = #tpu.dot_dimension_numbers<[1], [0], [0], [1], [0, 0, 1, 1], [], []>} : vector<8x8xf32>, vector<8x256xf32>, vector<8x256xf32> -> vector<8x256xf32>
    %286 = arith.addf %277, %285 : vector<8x256xf32>
    %c0_216 = arith.constant 0 : index
    %c0_217 = arith.constant 0 : index
    %287 = vector.load %arg5[%c0_216, %c0_217] : memref<8x1xf32, #tpu.memory_space<vmem>>, vector<8x1xf32>
    %288 = vector.broadcast %287 : vector<8x1xf32> to vector<8x256xf32>
    %289 = arith.addf %286, %288 : vector<8x256xf32>
    %cst_218 = arith.constant 0.000000e+00 : f32
    %290 = vector.broadcast %cst_218 : f32 to vector<8x256xf32>
    %291 = arith.maximumf %289, %290 : vector<8x256xf32>
    %cst_219 = arith.constant 0.000000e+00 : f32
    %292 = vector.broadcast %cst_219 : f32 to vector<8x256xf32>
    %c17_i32_220 = arith.constant 17 : i32
    %293 = tpu.dynamic_rotate %209 by %c17_i32_220 dim 1 : vector<8x256xf32>, i32 -> vector<8x256xf32>
    %c0_221 = arith.constant 0 : index
    %c0_222 = arith.constant 0 : index
    %c0_223 = arith.constant 0 : index
    %294 = vector.load %arg10[%c0_221, %c0_222, %c0_223] : memref<9x1x256xf32, #tpu.memory_space<vmem>>, vector<1x1x256xf32>
    %295 = vector.shape_cast %294 : vector<1x1x256xf32> to vector<1x256xf32>
    %296 = vector.broadcast %295 : vector<1x256xf32> to vector<8x256xf32>
    %297 = arith.mulf %293, %296 : vector<8x256xf32>
    %c0_224 = arith.constant 0 : index
    %c0_225 = arith.constant 0 : index
    %c0_226 = arith.constant 0 : index
    %298 = vector.load %arg4[%c0_224, %c0_225, %c0_226] : memref<9x8x8xf32, #tpu.memory_space<vmem>>, vector<1x8x8xf32>
    %299 = vector.shape_cast %298 : vector<1x8x8xf32> to vector<8x8xf32>
    %cst_227 = arith.constant dense<0.000000e+00> : vector<8x256xf32>
    %300 = tpu.matmul %299, %297, %cst_227 {dimension_numbers = #tpu.dot_dimension_numbers<[1], [0], [0], [1], [0, 0, 1, 1], [], []>} : vector<8x8xf32>, vector<8x256xf32>, vector<8x256xf32> -> vector<8x256xf32>
    %301 = arith.addf %292, %300 : vector<8x256xf32>
    %c16_i32_228 = arith.constant 16 : i32
    %302 = tpu.dynamic_rotate %209 by %c16_i32_228 dim 1 : vector<8x256xf32>, i32 -> vector<8x256xf32>
    %c1_229 = arith.constant 1 : index
    %c0_230 = arith.constant 0 : index
    %c0_231 = arith.constant 0 : index
    %303 = vector.load %arg10[%c1_229, %c0_230, %c0_231] : memref<9x1x256xf32, #tpu.memory_space<vmem>>, vector<1x1x256xf32>
    %304 = vector.shape_cast %303 : vector<1x1x256xf32> to vector<1x256xf32>
    %305 = vector.broadcast %304 : vector<1x256xf32> to vector<8x256xf32>
    %306 = arith.mulf %302, %305 : vector<8x256xf32>
    %c1_232 = arith.constant 1 : index
    %c0_233 = arith.constant 0 : index
    %c0_234 = arith.constant 0 : index
    %307 = vector.load %arg4[%c1_232, %c0_233, %c0_234] : memref<9x8x8xf32, #tpu.memory_space<vmem>>, vector<1x8x8xf32>
    %308 = vector.shape_cast %307 : vector<1x8x8xf32> to vector<8x8xf32>
    %cst_235 = arith.constant dense<0.000000e+00> : vector<8x256xf32>
    %309 = tpu.matmul %308, %306, %cst_235 {dimension_numbers = #tpu.dot_dimension_numbers<[1], [0], [0], [1], [0, 0, 1, 1], [], []>} : vector<8x8xf32>, vector<8x256xf32>, vector<8x256xf32> -> vector<8x256xf32>
    %310 = arith.addf %301, %309 : vector<8x256xf32>
    %c15_i32_236 = arith.constant 15 : i32
    %311 = tpu.dynamic_rotate %209 by %c15_i32_236 dim 1 : vector<8x256xf32>, i32 -> vector<8x256xf32>
    %c2_237 = arith.constant 2 : index
    %c0_238 = arith.constant 0 : index
    %c0_239 = arith.constant 0 : index
    %312 = vector.load %arg10[%c2_237, %c0_238, %c0_239] : memref<9x1x256xf32, #tpu.memory_space<vmem>>, vector<1x1x256xf32>
    %313 = vector.shape_cast %312 : vector<1x1x256xf32> to vector<1x256xf32>
    %314 = vector.broadcast %313 : vector<1x256xf32> to vector<8x256xf32>
    %315 = arith.mulf %311, %314 : vector<8x256xf32>
    %c2_240 = arith.constant 2 : index
    %c0_241 = arith.constant 0 : index
    %c0_242 = arith.constant 0 : index
    %316 = vector.load %arg4[%c2_240, %c0_241, %c0_242] : memref<9x8x8xf32, #tpu.memory_space<vmem>>, vector<1x8x8xf32>
    %317 = vector.shape_cast %316 : vector<1x8x8xf32> to vector<8x8xf32>
    %cst_243 = arith.constant dense<0.000000e+00> : vector<8x256xf32>
    %318 = tpu.matmul %317, %315, %cst_243 {dimension_numbers = #tpu.dot_dimension_numbers<[1], [0], [0], [1], [0, 0, 1, 1], [], []>} : vector<8x8xf32>, vector<8x256xf32>, vector<8x256xf32> -> vector<8x256xf32>
    %319 = arith.addf %310, %318 : vector<8x256xf32>
    %c1_i32_244 = arith.constant 1 : i32
    %320 = tpu.dynamic_rotate %209 by %c1_i32_244 dim 1 : vector<8x256xf32>, i32 -> vector<8x256xf32>
    %c3_245 = arith.constant 3 : index
    %c0_246 = arith.constant 0 : index
    %c0_247 = arith.constant 0 : index
    %321 = vector.load %arg10[%c3_245, %c0_246, %c0_247] : memref<9x1x256xf32, #tpu.memory_space<vmem>>, vector<1x1x256xf32>
    %322 = vector.shape_cast %321 : vector<1x1x256xf32> to vector<1x256xf32>
    %323 = vector.broadcast %322 : vector<1x256xf32> to vector<8x256xf32>
    %324 = arith.mulf %320, %323 : vector<8x256xf32>
    %c3_248 = arith.constant 3 : index
    %c0_249 = arith.constant 0 : index
    %c0_250 = arith.constant 0 : index
    %325 = vector.load %arg4[%c3_248, %c0_249, %c0_250] : memref<9x8x8xf32, #tpu.memory_space<vmem>>, vector<1x8x8xf32>
    %326 = vector.shape_cast %325 : vector<1x8x8xf32> to vector<8x8xf32>
    %cst_251 = arith.constant dense<0.000000e+00> : vector<8x256xf32>
    %327 = tpu.matmul %326, %324, %cst_251 {dimension_numbers = #tpu.dot_dimension_numbers<[1], [0], [0], [1], [0, 0, 1, 1], [], []>} : vector<8x8xf32>, vector<8x256xf32>, vector<8x256xf32> -> vector<8x256xf32>
    %328 = arith.addf %319, %327 : vector<8x256xf32>
    %c4_252 = arith.constant 4 : index
    %c0_253 = arith.constant 0 : index
    %c0_254 = arith.constant 0 : index
    %329 = vector.load %arg4[%c4_252, %c0_253, %c0_254] : memref<9x8x8xf32, #tpu.memory_space<vmem>>, vector<1x8x8xf32>
    %330 = vector.shape_cast %329 : vector<1x8x8xf32> to vector<8x8xf32>
    %cst_255 = arith.constant dense<0.000000e+00> : vector<8x256xf32>
    %331 = tpu.matmul %330, %209, %cst_255 {dimension_numbers = #tpu.dot_dimension_numbers<[1], [0], [0], [1], [0, 0, 1, 1], [], []>} : vector<8x8xf32>, vector<8x256xf32>, vector<8x256xf32> -> vector<8x256xf32>
    %332 = arith.addf %328, %331 : vector<8x256xf32>
    %c255_i32_256 = arith.constant 255 : i32
    %333 = tpu.dynamic_rotate %209 by %c255_i32_256 dim 1 : vector<8x256xf32>, i32 -> vector<8x256xf32>
    %c5_257 = arith.constant 5 : index
    %c0_258 = arith.constant 0 : index
    %c0_259 = arith.constant 0 : index
    %334 = vector.load %arg10[%c5_257, %c0_258, %c0_259] : memref<9x1x256xf32, #tpu.memory_space<vmem>>, vector<1x1x256xf32>
    %335 = vector.shape_cast %334 : vector<1x1x256xf32> to vector<1x256xf32>
    %336 = vector.broadcast %335 : vector<1x256xf32> to vector<8x256xf32>
    %337 = arith.mulf %333, %336 : vector<8x256xf32>
    %c5_260 = arith.constant 5 : index
    %c0_261 = arith.constant 0 : index
    %c0_262 = arith.constant 0 : index
    %338 = vector.load %arg4[%c5_260, %c0_261, %c0_262] : memref<9x8x8xf32, #tpu.memory_space<vmem>>, vector<1x8x8xf32>
    %339 = vector.shape_cast %338 : vector<1x8x8xf32> to vector<8x8xf32>
    %cst_263 = arith.constant dense<0.000000e+00> : vector<8x256xf32>
    %340 = tpu.matmul %339, %337, %cst_263 {dimension_numbers = #tpu.dot_dimension_numbers<[1], [0], [0], [1], [0, 0, 1, 1], [], []>} : vector<8x8xf32>, vector<8x256xf32>, vector<8x256xf32> -> vector<8x256xf32>
    %341 = arith.addf %332, %340 : vector<8x256xf32>
    %c241_i32_264 = arith.constant 241 : i32
    %342 = tpu.dynamic_rotate %209 by %c241_i32_264 dim 1 : vector<8x256xf32>, i32 -> vector<8x256xf32>
    %c6_265 = arith.constant 6 : index
    %c0_266 = arith.constant 0 : index
    %c0_267 = arith.constant 0 : index
    %343 = vector.load %arg10[%c6_265, %c0_266, %c0_267] : memref<9x1x256xf32, #tpu.memory_space<vmem>>, vector<1x1x256xf32>
    %344 = vector.shape_cast %343 : vector<1x1x256xf32> to vector<1x256xf32>
    %345 = vector.broadcast %344 : vector<1x256xf32> to vector<8x256xf32>
    %346 = arith.mulf %342, %345 : vector<8x256xf32>
    %c6_268 = arith.constant 6 : index
    %c0_269 = arith.constant 0 : index
    %c0_270 = arith.constant 0 : index
    %347 = vector.load %arg4[%c6_268, %c0_269, %c0_270] : memref<9x8x8xf32, #tpu.memory_space<vmem>>, vector<1x8x8xf32>
    %348 = vector.shape_cast %347 : vector<1x8x8xf32> to vector<8x8xf32>
    %cst_271 = arith.constant dense<0.000000e+00> : vector<8x256xf32>
    %349 = tpu.matmul %348, %346, %cst_271 {dimension_numbers = #tpu.dot_dimension_numbers<[1], [0], [0], [1], [0, 0, 1, 1], [], []>} : vector<8x8xf32>, vector<8x256xf32>, vector<8x256xf32> -> vector<8x256xf32>
    %350 = arith.addf %341, %349 : vector<8x256xf32>
    %c240_i32_272 = arith.constant 240 : i32
    %351 = tpu.dynamic_rotate %209 by %c240_i32_272 dim 1 : vector<8x256xf32>, i32 -> vector<8x256xf32>
    %c7_273 = arith.constant 7 : index
    %c0_274 = arith.constant 0 : index
    %c0_275 = arith.constant 0 : index
    %352 = vector.load %arg10[%c7_273, %c0_274, %c0_275] : memref<9x1x256xf32, #tpu.memory_space<vmem>>, vector<1x1x256xf32>
    %353 = vector.shape_cast %352 : vector<1x1x256xf32> to vector<1x256xf32>
    %354 = vector.broadcast %353 : vector<1x256xf32> to vector<8x256xf32>
    %355 = arith.mulf %351, %354 : vector<8x256xf32>
    %c7_276 = arith.constant 7 : index
    %c0_277 = arith.constant 0 : index
    %c0_278 = arith.constant 0 : index
    %356 = vector.load %arg4[%c7_276, %c0_277, %c0_278] : memref<9x8x8xf32, #tpu.memory_space<vmem>>, vector<1x8x8xf32>
    %357 = vector.shape_cast %356 : vector<1x8x8xf32> to vector<8x8xf32>
    %cst_279 = arith.constant dense<0.000000e+00> : vector<8x256xf32>
    %358 = tpu.matmul %357, %355, %cst_279 {dimension_numbers = #tpu.dot_dimension_numbers<[1], [0], [0], [1], [0, 0, 1, 1], [], []>} : vector<8x8xf32>, vector<8x256xf32>, vector<8x256xf32> -> vector<8x256xf32>
    %359 = arith.addf %350, %358 : vector<8x256xf32>
    %c239_i32_280 = arith.constant 239 : i32
    %360 = tpu.dynamic_rotate %209 by %c239_i32_280 dim 1 : vector<8x256xf32>, i32 -> vector<8x256xf32>
    %c8_281 = arith.constant 8 : index
    %c0_282 = arith.constant 0 : index
    %c0_283 = arith.constant 0 : index
    %361 = vector.load %arg10[%c8_281, %c0_282, %c0_283] : memref<9x1x256xf32, #tpu.memory_space<vmem>>, vector<1x1x256xf32>
    %362 = vector.shape_cast %361 : vector<1x1x256xf32> to vector<1x256xf32>
    %363 = vector.broadcast %362 : vector<1x256xf32> to vector<8x256xf32>
    %364 = arith.mulf %360, %363 : vector<8x256xf32>
    %c8_284 = arith.constant 8 : index
    %c0_285 = arith.constant 0 : index
    %c0_286 = arith.constant 0 : index
    %365 = vector.load %arg4[%c8_284, %c0_285, %c0_286] : memref<9x8x8xf32, #tpu.memory_space<vmem>>, vector<1x8x8xf32>
    %366 = vector.shape_cast %365 : vector<1x8x8xf32> to vector<8x8xf32>
    %cst_287 = arith.constant dense<0.000000e+00> : vector<8x256xf32>
    %367 = tpu.matmul %366, %364, %cst_287 {dimension_numbers = #tpu.dot_dimension_numbers<[1], [0], [0], [1], [0, 0, 1, 1], [], []>} : vector<8x8xf32>, vector<8x256xf32>, vector<8x256xf32> -> vector<8x256xf32>
    %368 = arith.addf %359, %367 : vector<8x256xf32>
    %c0_288 = arith.constant 0 : index
    %c0_289 = arith.constant 0 : index
    %369 = vector.load %arg5[%c0_288, %c0_289] : memref<8x1xf32, #tpu.memory_space<vmem>>, vector<8x1xf32>
    %370 = vector.broadcast %369 : vector<8x1xf32> to vector<8x256xf32>
    %371 = arith.addf %368, %370 : vector<8x256xf32>
    %cst_290 = arith.constant 0.000000e+00 : f32
    %372 = vector.broadcast %cst_290 : f32 to vector<8x256xf32>
    %373 = arith.maximumf %371, %372 : vector<8x256xf32>
    %c1_291 = arith.constant 1 : index
    %c0_292 = arith.constant 0 : index
    %c0_293 = arith.constant 0 : index
    %374 = vector.load %arg11[%c1_291, %c0_292, %c0_293] : memref<2x1x256xf32, #tpu.memory_space<vmem>>, vector<1x1x256xf32>
    %375 = vector.shape_cast %374 : vector<1x1x256xf32> to vector<1x256xf32>
    %376 = vector.broadcast %375 : vector<1x256xf32> to vector<8x256xf32>
    %377 = arith.mulf %291, %376 : vector<8x256xf32>
    %cst_294 = arith.constant dense<0.000000e+00> : vector<8xf32>
    %378 = vector.multi_reduction <add>, %377, %cst_294 [1] : vector<8x256xf32> to vector<8xf32>
    %379 = vector.shape_cast %378 : vector<8xf32> to vector<8x1xf32>
    %380 = arith.mulf %377, %291 : vector<8x256xf32>
    %cst_295 = arith.constant dense<0.000000e+00> : vector<8xf32>
    %381 = vector.multi_reduction <add>, %380, %cst_295 [1] : vector<8x256xf32> to vector<8xf32>
    %382 = vector.shape_cast %381 : vector<8xf32> to vector<8x1xf32>
    %383 = vector.broadcast %375 : vector<1x256xf32> to vector<8x256xf32>
    %384 = arith.mulf %373, %383 : vector<8x256xf32>
    %cst_296 = arith.constant dense<0.000000e+00> : vector<8xf32>
    %385 = vector.multi_reduction <add>, %384, %cst_296 [1] : vector<8x256xf32> to vector<8xf32>
    %386 = vector.shape_cast %385 : vector<8xf32> to vector<8x1xf32>
    %387 = arith.mulf %384, %373 : vector<8x256xf32>
    %cst_297 = arith.constant dense<0.000000e+00> : vector<8xf32>
    %388 = vector.multi_reduction <add>, %387, %cst_297 [1] : vector<8x256xf32> to vector<8xf32>
    %389 = vector.shape_cast %388 : vector<8xf32> to vector<8x1xf32>
    %390 = arith.addf %379, %386 : vector<8x1xf32>
    %391 = arith.addf %382, %389 : vector<8x1xf32>
    %cst_298 = arith.constant 0.001953125 : f32
    %392 = vector.broadcast %cst_298 : f32 to vector<8x1xf32>
    %393 = arith.mulf %390, %392 : vector<8x1xf32>
    %cst_299 = arith.constant 0.001953125 : f32
    %394 = vector.broadcast %cst_299 : f32 to vector<8x1xf32>
    %395 = arith.mulf %391, %394 : vector<8x1xf32>
    %396 = arith.mulf %393, %393 : vector<8x1xf32>
    %397 = arith.subf %395, %396 : vector<8x1xf32>
    %cst_300 = arith.constant 0.000000e+00 : f32
    %398 = vector.broadcast %cst_300 : f32 to vector<8x1xf32>
    %399 = arith.maximumf %397, %398 : vector<8x1xf32>
    %c0_301 = arith.constant 0 : index
    %c0_302 = arith.constant 0 : index
    %400 = vector.load %arg8[%c0_301, %c0_302] : memref<8x1xf32, #tpu.memory_space<vmem>>, vector<8x1xf32>
    %cst_303 = arith.constant 9.99999974E-6 : f32
    %401 = vector.broadcast %cst_303 : f32 to vector<8x1xf32>
    %402 = arith.addf %399, %401 : vector<8x1xf32>
    %403 = math.rsqrt %402 : vector<8x1xf32>
    %404 = arith.mulf %400, %403 : vector<8x1xf32>
    %c0_304 = arith.constant 0 : index
    %c0_305 = arith.constant 0 : index
    %405 = vector.load %arg9[%c0_304, %c0_305] : memref<8x1xf32, #tpu.memory_space<vmem>>, vector<8x1xf32>
    %406 = arith.mulf %393, %404 : vector<8x1xf32>
    %407 = arith.subf %405, %406 : vector<8x1xf32>
    %408 = vector.broadcast %404 : vector<8x1xf32> to vector<8x256xf32>
    %409 = arith.mulf %291, %408 : vector<8x256xf32>
    %410 = vector.broadcast %407 : vector<8x1xf32> to vector<8x256xf32>
    %411 = arith.addf %409, %410 : vector<8x256xf32>
    %412 = vector.broadcast %404 : vector<8x1xf32> to vector<8x256xf32>
    %413 = arith.mulf %373, %412 : vector<8x256xf32>
    %414 = vector.broadcast %407 : vector<8x1xf32> to vector<8x256xf32>
    %415 = arith.addf %413, %414 : vector<8x256xf32>
    %c0_306 = arith.constant 0 : index
    %c0_307 = arith.constant 0 : index
    %c0_308 = arith.constant 0 : index
    %416 = vector.load %arg12[%c0_306, %c0_307, %c0_308] : memref<2x8x256xf32, #tpu.memory_space<vmem>>, vector<1x8x256xf32>
    %417 = vector.shape_cast %416 : vector<1x8x256xf32> to vector<8x256xf32>
    %418 = vector.shape_cast %411 : vector<8x256xf32> to vector<1x8x256xf32>
    tpu.vector_store %arg12[%c0_306, %c0_307, %c0_308], %418 {strides = array<i32>} : memref<2x8x256xf32, #tpu.memory_space<vmem>>, vector<1x8x256xf32>,
    %c1_309 = arith.constant 1 : index
    %c0_310 = arith.constant 0 : index
    %c0_311 = arith.constant 0 : index
    %419 = vector.load %arg12[%c1_309, %c0_310, %c0_311] : memref<2x8x256xf32, #tpu.memory_space<vmem>>, vector<1x8x256xf32>
    %420 = vector.shape_cast %419 : vector<1x8x256xf32> to vector<8x256xf32>
    %421 = vector.shape_cast %415 : vector<8x256xf32> to vector<1x8x256xf32>
    tpu.vector_store %arg12[%c1_309, %c0_310, %c0_311], %421 {strides = array<i32>} : memref<2x8x256xf32, #tpu.memory_space<vmem>>, vector<1x8x256xf32>,
    return
  }
  func.func @transform_0(%arg0: i32) -> (i32, i32, i32) {
    %c0_i32 = arith.constant 0 : i32
    %c0_i32_0 = arith.constant 0 : i32
    %c0_i32_1 = arith.constant 0 : i32
    %c0_i32_2 = arith.constant 0 : i32
    return %c0_i32, %c0_i32_0, %c0_i32_1 : i32, i32, i32
  }
  func.func @transform_1(%arg0: i32) -> (i32, i32, i32) {
    %c0_i32 = arith.constant 0 : i32
    %c0_i32_0 = arith.constant 0 : i32
    %c0_i32_1 = arith.constant 0 : i32
    %c0_i32_2 = arith.constant 0 : i32
    return %c0_i32, %c0_i32_0, %c0_i32_1 : i32, i32, i32
  }
  func.func @transform_2(%arg0: i32) -> (i32, i32) {
    %c0_i32 = arith.constant 0 : i32
    %c0_i32_0 = arith.constant 0 : i32
    %c0_i32_1 = arith.constant 0 : i32
    return %c0_i32, %c0_i32_0 : i32, i32
  }
  func.func @transform_3(%arg0: i32) -> (i32, i32, i32) {
    %c0_i32 = arith.constant 0 : i32
    %c0_i32_0 = arith.constant 0 : i32
    %c0_i32_1 = arith.constant 0 : i32
    %c0_i32_2 = arith.constant 0 : i32
    return %c0_i32, %c0_i32_0, %c0_i32_1 : i32, i32, i32
  }
  func.func @transform_4(%arg0: i32) -> (i32, i32) {
    %c0_i32 = arith.constant 0 : i32
    %c0_i32_0 = arith.constant 0 : i32
    %c0_i32_1 = arith.constant 0 : i32
    return %c0_i32, %c0_i32_0 : i32, i32
  }
  func.func @transform_5(%arg0: i32) -> (i32, i32) {
    %c0_i32 = arith.constant 0 : i32
    %c0_i32_0 = arith.constant 0 : i32
    %c0_i32_1 = arith.constant 0 : i32
    return %c0_i32, %c0_i32_0 : i32, i32
  }
  func.func @transform_6(%arg0: i32) -> (i32, i32) {
    %c0_i32 = arith.constant 0 : i32
    %c0_i32_0 = arith.constant 0 : i32
    %c0_i32_1 = arith.constant 0 : i32
    return %c0_i32, %c0_i32_0 : i32, i32
  }
  func.func @transform_7(%arg0: i32) -> (i32, i32) {
    %c0_i32 = arith.constant 0 : i32
    %c0_i32_0 = arith.constant 0 : i32
    %c0_i32_1 = arith.constant 0 : i32
    return %c0_i32, %c0_i32_0 : i32, i32
  }
  func.func @transform_8(%arg0: i32) -> (i32, i32) {
    %c0_i32 = arith.constant 0 : i32
    %c0_i32_0 = arith.constant 0 : i32
    %c0_i32_1 = arith.constant 0 : i32
    return %c0_i32, %c0_i32_0 : i32, i32
  }
  func.func @transform_9(%arg0: i32) -> (i32, i32, i32) {
    %c0_i32 = arith.constant 0 : i32
    %c0_i32_0 = arith.constant 0 : i32
    %c0_i32_1 = arith.constant 0 : i32
    %c0_i32_2 = arith.constant 0 : i32
    return %c0_i32, %c0_i32_0, %c0_i32_1 : i32, i32, i32
  }
  func.func @transform_10(%arg0: i32) -> (i32, i32, i32) {
    %c0_i32 = arith.constant 0 : i32
    %c0_i32_0 = arith.constant 0 : i32
    %c0_i32_1 = arith.constant 0 : i32
    %c0_i32_2 = arith.constant 0 : i32
    return %c0_i32, %c0_i32_0, %c0_i32_1 : i32, i32, i32
  }
  func.func @transform_11(%arg0: i32) -> (i32, i32, i32) {
    %c0_i32 = arith.constant 0 : i32
    %c0_i32_0 = arith.constant 0 : i32
    %c0_i32_1 = arith.constant 0 : i32
    %c0_i32_2 = arith.constant 0 : i32
    return %c0_i32, %c0_i32_0, %c0_i32_1 : i32, i32, i32
  }
}

</mosaic_0001>

<llo_original>
// kernel: block_forward.1
$region0: #{block_forward.1}
  #allocation0 [shape = 'u32[]', space=smem, size = 0x4, offset = 0x4, fixed_abs, tag = 'smem constant byte address 0x4 - core index']
  #allocation1 [shape = 'u32[144,128]{1,0:T(1,128)}', space=vmem, size = 0x12000, scoped, tag = 'internal scratch']
  %s0 = inlined_call_operand.vmem [shape: f32[2,4,256], index: 0, kind: input, shape index: {}]
  %s1 = inlined_call_operand.vmem [shape: f32[9,8,4], index: 1, kind: input, shape index: {}]
  %s2 = inlined_call_operand.vmem [shape: f32[8,1], index: 2, kind: input, shape index: {}]
  %s3 = inlined_call_operand.vmem [shape: f32[9,8,8], index: 3, kind: input, shape index: {}]
  %s4 = inlined_call_operand.vmem [shape: f32[8,1], index: 4, kind: input, shape index: {}]
  %s5 = inlined_call_operand.vmem [shape: f32[8,1], index: 5, kind: input, shape index: {}]
  %s6 = inlined_call_operand.vmem [shape: f32[8,1], index: 6, kind: input, shape index: {}]
  %s7 = inlined_call_operand.vmem [shape: f32[8,1], index: 7, kind: input, shape index: {}]
  %s8 = inlined_call_operand.vmem [shape: f32[8,1], index: 8, kind: input, shape index: {}]
  %s9 = inlined_call_operand.vmem [shape: f32[9,1,256], index: 9, kind: input, shape index: {}]
  %s10 = inlined_call_operand.vmem [shape: f32[2,1,256], index: 10, kind: input, shape index: {}]
  %s11 = inlined_call_operand.vmem [shape: f32[2,8,256], index: 11, kind: output, shape index: {}]
  %s12 = sld [smem:[#allocation0]]
  $region54: #{block_forward.1} parent=0
    _
  %s14 = ssub.s32 1, %s12
  %s15 = scalar_select 0, %s14, %s12
  // Predicated region
  $region2: #{block_forward.1} parent=0 // pred_check
    _
  $region3: #{block_forward.1} parent=0 // pred_check_branch
    %17 = sbr.rel (0) target = $region5
  $region4: #{block_forward.1} parent=0 // pred_region
    _
  $region5: #{block_forward.1} parent=0 // pred_fallthru
    _
  // Predicated region
  $region6: #{block_forward.1} parent=0 // pred_check
    _
  $region7: #{block_forward.1} parent=0 // pred_check_branch
    %19 = sbr.rel (0) target = $region9
  $region8: #{block_forward.1} parent=0 // pred_region
    _
  $region9: #{block_forward.1} parent=0 // pred_fallthru
    _
  // Predicated region
  $region10: #{block_forward.1} parent=0 // pred_check
    _
  $region11: #{block_forward.1} parent=0 // pred_check_branch
    %21 = sbr.rel (0) target = $region13
  $region12: #{block_forward.1} parent=0 // pred_region
    _
  $region13: #{block_forward.1} parent=0 // pred_fallthru
    _
  // Predicated region
  $region14: #{block_forward.1} parent=0 // pred_check
    _
  $region15: #{block_forward.1} parent=0 // pred_check_branch
    %23 = sbr.rel (0) target = $region17
  $region16: #{block_forward.1} parent=0 // pred_region
    _
  $region17: #{block_forward.1} parent=0 // pred_fallthru
    _
  // Predicated region
  $region18: #{block_forward.1} parent=0 // pred_check
    _
  $region19: #{block_forward.1} parent=0 // pred_check_branch
    %25 = sbr.rel (0) target = $region21
  $region20: #{block_forward.1} parent=0 // pred_region
    _
  $region21: #{block_forward.1} parent=0 // pred_fallthru
    _
  // Predicated region
  $region22: #{block_forward.1} parent=0 // pred_check
    _
  $region23: #{block_forward.1} parent=0 // pred_check_branch
    %27 = sbr.rel (0) target = $region25
  $region24: #{block_forward.1} parent=0 // pred_region
    _
  $region25: #{block_forward.1} parent=0 // pred_fallthru
    _
  // Predicated region
  $region26: #{block_forward.1} parent=0 // pred_check
    _
  $region27: #{block_forward.1} parent=0 // pred_check_branch
    %29 = sbr.rel (0) target = $region29
  $region28: #{block_forward.1} parent=0 // pred_region
    _
  $region29: #{block_forward.1} parent=0 // pred_fallthru
    _
  // Predicated region
  $region30: #{block_forward.1} parent=0 // pred_check
    _
  $region31: #{block_forward.1} parent=0 // pred_check_branch
    %31 = sbr.rel (0) target = $region33
  $region32: #{block_forward.1} parent=0 // pred_region
    _
  $region33: #{block_forward.1} parent=0 // pred_fallthru
    _
  // Predicated region
  $region34: #{block_forward.1} parent=0 // pred_check
    _
  $region35: #{block_forward.1} parent=0 // pred_check_branch
    %33 = sbr.rel (0) target = $region37
  $region36: #{block_forward.1} parent=0 // pred_region
    _
  $region37: #{block_forward.1} parent=0 // pred_fallthru
    _
  // Predicated region
  $region38: #{block_forward.1} parent=0 // pred_check
    _
  $region39: #{block_forward.1} parent=0 // pred_check_branch
    %35 = sbr.rel (0) target = $region41
  $region40: #{block_forward.1} parent=0 // pred_region
    _
  $region41: #{block_forward.1} parent=0 // pred_fallthru
    _
  // Predicated region
  $region42: #{block_forward.1} parent=0 // pred_check
    _
  $region43: #{block_forward.1} parent=0 // pred_check_branch
    %37 = sbr.rel (0) target = $region45
  $region44: #{block_forward.1} parent=0 // pred_region
    _
  $region45: #{block_forward.1} parent=0 // pred_fallthru
    _
  %v38 = vld [vmem:[%s0] sm:$0xff]
  %s39 = scalar_lea.vmem %s0, 8
  %v40 = vld [vmem:[%s39] sm:$0xff]
  %v42 = vcombine.high %v38, %v38
  %44 = vrot.lane.b32.xlu0 %v38, 17
  %v45 = vpop.permute.xlu0 %44
  %46 = vrot.lane.b32.xlu0 %v42, 17
  %v47 = vpop.permute.xlu0 %46
  %v48 = vlaneseq
  %v49 = vand.u32 %v48, 127
  %vm50 = vcmp.lt.s32.totalorder %v49, 17
  %v51 = vsel %vm50, %v45, %v47
  %v52 = vsel %vm50, %v47, %v45
  %v53 = vld [vmem:[%s9] sm:$0x3]
  %v55 = vlaneseq
  %v56 = vshrl.u32 %v55, 7
  %v57 = vsub.s32 0, %v56
  %v58 = vrot.slane %v53, %v57
  %v59 = vlaneseq
  %v60 = vshrl.u32 %v59, 7
  %v61 = vsub.s32 1, %v60
  %v62 = vrot.slane %v53, %v61
  %v65 = vmul.f32 %v52, %v58
  %v66 = vmul.f32 %v51, %v62
  %v67 = vld [vmem:[%s1] sm:$0xff]
  %68 = vrot.lane.b32.xlu0 %v38, 16
  %v69 = vpop.permute.xlu0 %68
  %70 = vrot.lane.b32.xlu0 %v42, 16
  %v71 = vpop.permute.xlu0 %70
  %vm72 = vcmp.lt.s32.totalorder %v49, 16
  %v73 = vsel %vm72, %v69, %v71
  %v74 = vsel %vm72, %v71, %v69
  %s75 = scalar_lea.vmem %s9, 2
  %v76 = vld [vmem:[%s75] sm:$0x3]
  %v78 = vlaneseq
  %v79 = vshrl.u32 %v78, 7
  %v80 = vsub.s32 0, %v79
  %v81 = vrot.slane %v76, %v80
  %v82 = vlaneseq
  %v83 = vshrl.u32 %v82, 7
  %v84 = vsub.s32 1, %v83
  %v85 = vrot.slane %v76, %v84
  %v88 = vmul.f32 %v74, %v81
  %v89 = vmul.f32 %v73, %v85
  %s90 = scalar_lea.vmem %s1, 8
  %v91 = vld [vmem:[%s90] sm:$0xff]
  %vm92 = vcmask 31744
  %v94 = vsel %vm92, %v91, 0
  %vm96 = vcmask 1043456
  %v98 = vsel %vm96, %v88, 0
  %v101 = vsel %vm96, %v89, 0
  %103 = vmatprep.subr.mxu0 %v101
  %104 = vmatpush1.msra.mxu0 %v98
  %105 = vmatprep.subr.mxu0 0.0
  %106 = vmatpush1.msra.mxu0 0.0
  %107 = vmatprep.subr.mxu0 0.0
  %108 = vmatpush1.msra.mxu0 0.0
  %109 = vmatprep.subr.mxu0 0.0
  %110 = vmatpush1.msra.mxu0 0.0
  %111 = vmatprep.subr.mxu0 0.0
  %112 = vmatpush1.msra.mxu0 0.0
  %113 = vmatprep.subr.mxu0 0.0
  %114 = vmatpush1.msra.mxu0 0.0
  %115 = vmatprep.subr.mxu0 0.0
  %116 = vmatpush1.msra.mxu0 0.0
  %117 = vmatprep.subr.mxu0 0.0
  %118 = vmatpush1.msra.mxu0 0.0
  %119 = vmatprep.subr.mxu0 0.0
  %120 = vmatpush1.msra.mxu0 0.0
  %121 = vmatprep.subr.mxu0 0.0
  %122 = vmatpush1.msra.mxu0 0.0
  %123 = vmatprep.subr.mxu0 0.0
  %124 = vmatpush1.msra.mxu0 0.0
  %125 = vmatprep.subr.mxu0 0.0
  %126 = vmatpush1.msra.mxu0 0.0
  %127 = vmatprep.subr.mxu0 0.0
  %128 = vmatpush1.msra.mxu0 0.0
  %129 = vmatprep.subr.mxu0 0.0
  %130 = vmatpush1.msra.mxu0 0.0
  %131 = vmatprep.subr.mxu0 0.0
  %132 = vmatpush1.msra.mxu0 0.0
  %133 = vmatprep.subr.mxu0 0.0
  %134 = vmatpush1.msra.mxu0 0.0
  %135 = vmatprep.subr.mxu0 0.0
  %136 = vmatpush1.msra.mxu0 0.0
  %137 = vmatprep.subr.mxu0 0.0
  %138 = vmatpush1.msra.mxu0 0.0
  %139 = vmatprep.subr.mxu0 0.0
  %140 = vmatpush1.msra.mxu0 0.0
  %141 = vmatprep.subr.mxu0 0.0
  %142 = vmatpush1.msra.mxu0 0.0
  %143 = vmatprep.subr.mxu0 0.0
  %144 = vmatpush1.msra.mxu0 0.0
  %145 = vmatprep.subr.mxu0 0.0
  %146 = vmatpush1.msra.mxu0 0.0
  %147 = vmatprep.subr.mxu0 0.0
  %148 = vmatpush1.msra.mxu0 0.0
  %149 = vmatprep.subr.mxu0 0.0
  %150 = vmatpush1.msra.mxu0 0.0
  %151 = vmatprep.subr.mxu0 0.0
  %152 = vmatpush1.msra.mxu0 0.0
  %153 = vmatprep.subr.mxu0 0.0
  %154 = vmatpush1.msra.mxu0 0.0
  %155 = vmatprep.subr.mxu0 0.0
  %156 = vmatpush1.msra.mxu0 0.0
  %157 = vmatprep.subr.mxu0 0.0
  %158 = vmatpush1.msra.mxu0 0.0
  %159 = vmatprep.subr.mxu0 0.0
  %160 = vmatpush1.msra.mxu0 0.0
  %161 = vmatprep.subr.mxu0 0.0
  %162 = vmatpush1.msra.mxu0 0.0
  %163 = vmatprep.subr.mxu0 0.0
  %164 = vmatpush1.msra.mxu0 0.0
  %165 = vmatprep.subr.mxu0 0.0
  %166 = vmatpush1.msra.mxu0 0.0
  %167 = vmatprep.mubr.f32.mxu0 0.0
  %168 = vmatmul.mubr.f32.gmra.mrb[0].mxu0 %v94
  %v169 = vpop.f32.mrb[0].mxu0
  %v170 = vadd.f32 0.0, %v169
  %v171 = vpop.f32.mrb[0].mxu0
  %v172 = vadd.f32 0.0, %v171
  %173 = vdwg.mxu0
  %v175 = vsel %vm92, %v67, 0
  %v178 = vsel %vm96, %v65, 0
  %v181 = vsel %vm96, %v66, 0
  %183 = vmatprep.subr.mxu0 %v181
  %184 = vmatpush1.msra.mxu0 %v178
  %185 = vmatprep.subr.mxu0 0.0
  %186 = vmatpush1.msra.mxu0 0.0
  %187 = vmatprep.subr.mxu0 0.0
  %188 = vmatpush1.msra.mxu0 0.0
  %189 = vmatprep.subr.mxu0 0.0
  %190 = vmatpush1.msra.mxu0 0.0
  %191 = vmatprep.subr.mxu0 0.0
  %192 = vmatpush1.msra.mxu0 0.0
  %193 = vmatprep.subr.mxu0 0.0
  %194 = vmatpush1.msra.mxu0 0.0
  %195 = vmatprep.subr.mxu0 0.0
  %196 = vmatpush1.msra.mxu0 0.0
  %197 = vmatprep.subr.mxu0 0.0
  %198 = vmatpush1.msra.mxu0 0.0
  %199 = vmatprep.subr.mxu0 0.0
  %200 = vmatpush1.msra.mxu0 0.0
  %201 = vmatprep.subr.mxu0 0.0
  %202 = vmatpush1.msra.mxu0 0.0
  %203 = vmatprep.subr.mxu0 0.0
  %204 = vmatpush1.msra.mxu0 0.0
  %205 = vmatprep.subr.mxu0 0.0
  %206 = vmatpush1.msra.mxu0 0.0
  %207 = vmatprep.subr.mxu0 0.0
  %208 = vmatpush1.msra.mxu0 0.0
  %209 = vmatprep.subr.mxu0 0.0
  %210 = vmatpush1.msra.mxu0 0.0
  %211 = vmatprep.subr.mxu0 0.0
  %212 = vmatpush1.msra.mxu0 0.0
  %213 = vmatprep.subr.mxu0 0.0
  %214 = vmatpush1.msra.mxu0 0.0
  %215 = vmatprep.subr.mxu0 0.0
  %216 = vmatpush1.msra.mxu0 0.0
  %217 = vmatprep.subr.mxu0 0.0
  %218 = vmatpush1.msra.mxu0 0.0
  %219 = vmatprep.subr.mxu0 0.0
  %220 = vmatpush1.msra.mxu0 0.0
  %221 = vmatprep.subr.mxu0 0.0
  %222 = vmatpush1.msra.mxu0 0.0
  %223 = vmatprep.subr.mxu0 0.0
  %224 = vmatpush1.msra.mxu0 0.0
  %225 = vmatprep.subr.mxu0 0.0
  %226 = vmatpush1.msra.mxu0 0.0
  %227 = vmatprep.subr.mxu0 0.0
  %228 = vmatpush1.msra.mxu0 0.0
  %229 = vmatprep.subr.mxu0 0.0
  %230 = vmatpush1.msra.mxu0 0.0
  %231 = vmatprep.subr.mxu0 0.0
  %232 = vmatpush1.msra.mxu0 0.0
  %233 = vmatprep.subr.mxu0 0.0
  %234 = vmatpush1.msra.mxu0 0.0
  %235 = vmatprep.subr.mxu0 0.0
  %236 = vmatpush1.msra.mxu0 0.0
  %237 = vmatprep.subr.mxu0 0.0
  %238 = vmatpush1.msra.mxu0 0.0
  %239 = vmatprep.subr.mxu0 0.0
  %240 = vmatpush1.msra.mxu0 0.0
  %241 = vmatprep.subr.mxu0 0.0
  %242 = vmatpush1.msra.mxu0 0.0
  %243 = vmatprep.subr.mxu0 0.0
  %244 = vmatpush1.msra.mxu0 0.0
  %245 = vmatprep.subr.mxu0 0.0
  %246 = vmatpush1.msra.mxu0 0.0
  %247 = vmatprep.mubr.f32.mxu0 0.0
  %248 = vmatmul.mubr.f32.gmra.mrb[0].mxu0 %v175
  %v249 = vpop.f32.mrb[0].mxu0
  %v250 = vadd.f32 %v170, %v249
  %v251 = vpop.f32.mrb[0].mxu0
  %v252 = vadd.f32 %v172, %v251
  %253 = vdwg.mxu0
  %254 = vrot.lane.b32.xlu0 %v38, 15
  %v255 = vpop.permute.xlu0 %254
  %256 = vrot.lane.b32.xlu0 %v42, 15
  %v257 = vpop.permute.xlu0 %256
  %vm258 = vcmp.lt.s32.totalorder %v49, 15
  %v259 = vsel %vm258, %v255, %v257
  %v260 = vsel %vm258, %v257, %v255
  %s261 = scalar_lea.vmem %s9, 4
  %v262 = vld [vmem:[%s261] sm:$0x3]
  %v264 = vlaneseq
  %v265 = vshrl.u32 %v264, 7
  %v266 = vsub.s32 0, %v265
  %v267 = vrot.slane %v262, %v266
  %v268 = vlaneseq
  %v269 = vshrl.u32 %v268, 7
  %v270 = vsub.s32 1, %v269
  %v271 = vrot.slane %v262, %v270
  %v274 = vmul.f32 %v260, %v267
  %v275 = vmul.f32 %v259, %v271
  %s276 = scalar_lea.vmem %s1, 16
  %v277 = vld [vmem:[%s276] sm:$0xff]
  %v279 = vsel %vm92, %v277, 0
  %v282 = vsel %vm96, %v274, 0
  %v285 = vsel %vm96, %v275, 0
  %287 = vmatprep.subr.mxu0 %v285
  %288 = vmatpush1.msra.mxu0 %v282
  %289 = vmatprep.subr.mxu0 0.0
  %290 = vmatpush1.msra.mxu0 0.0
  %291 = vmatprep.subr.mxu0 0.0
  %292 = vmatpush1.msra.mxu0 0.0
  %293 = vmatprep.subr.mxu0 0.0
  %294 = vmatpush1.msra.mxu0 0.0
  %295 = vmatprep.subr.mxu0 0.0
  %296 = vmatpush1.msra.mxu0 0.0
  %297 = vmatprep.subr.mxu0 0.0
  %298 = vmatpush1.msra.mxu0 0.0
  %299 = vmatprep.subr.mxu0 0.0
  %300 = vmatpush1.msra.mxu0 0.0
  %301 = vmatprep.subr.mxu0 0.0
  %302 = vmatpush1.msra.mxu0 0.0
  %303 = vmatprep.subr.mxu0 0.0
  %304 = vmatpush1.msra.mxu0 0.0
  %305 = vmatprep.subr.mxu0 0.0
  %306 = vmatpush1.msra.mxu0 0.0
  %307 = vmatprep.subr.mxu0 0.0
  %308 = vmatpush1.msra.mxu0 0.0
  %309 = vmatprep.subr.mxu0 0.0
  %310 = vmatpush1.msra.mxu0 0.0
  %311 = vmatprep.subr.mxu0 0.0
  %312 = vmatpush1.msra.mxu0 0.0
  %313 = vmatprep.subr.mxu0 0.0
  %314 = vmatpush1.msra.mxu0 0.0
  %315 = vmatprep.subr.mxu0 0.0
  %316 = vmatpush1.msra.mxu0 0.0
  %317 = vmatprep.subr.mxu0 0.0
  %318 = vmatpush1.msra.mxu0 0.0
  %319 = vmatprep.subr.mxu0 0.0
  %320 = vmatpush1.msra.mxu0 0.0
  %321 = vmatprep.subr.mxu0 0.0
  %322 = vmatpush1.msra.mxu0 0.0
  %323 = vmatprep.subr.mxu0 0.0
  %324 = vmatpush1.msra.mxu0 0.0
  %325 = vmatprep.subr.mxu0 0.0
  %326 = vmatpush1.msra.mxu0 0.0
  %327 = vmatprep.subr.mxu0 0.0
  %328 = vmatpush1.msra.mxu0 0.0
  %329 = vmatprep.subr.mxu0 0.0
  %330 = vmatpush1.msra.mxu0 0.0
  %331 = vmatprep.subr.mxu0 0.0
  %332 = vmatpush1.msra.mxu0 0.0
  %333 = vmatprep.subr.mxu0 0.0
  %334 = vmatpush1.msra.mxu0 0.0
  %335 = vmatprep.subr.mxu0 0.0
  %336 = vmatpush1.msra.mxu0 0.0
  %337 = vmatprep.subr.mxu0 0.0
  %338 = vmatpush1.msra.mxu0 0.0
  %339 = vmatprep.subr.mxu0 0.0
  %340 = vmatpush1.msra.mxu0 0.0
  %341 = vmatprep.subr.mxu0 0.0
  %342 = vmatpush1.msra.mxu0 0.0
  %343 = vmatprep.subr.mxu0 0.0
  %344 = vmatpush1.msra.mxu0 0.0
  %345 = vmatprep.subr.mxu0 0.0
  %346 = vmatpush1.msra.mxu0 0.0
  %347 = vmatprep.subr.mxu0 0.0
  %348 = vmatpush1.msra.mxu0 0.0
  %349 = vmatprep.subr.mxu0 0.0
  %350 = vmatpush1.msra.mxu0 0.0
  %351 = vmatprep.mubr.f32.mxu0 0.0
  %352 = vmatmul.mubr.f32.gmra.mrb[0].mxu0 %v279
  %v353 = vpop.f32.mrb[0].mxu0
  %v354 = vadd.f32 0.0, %v353
  %v355 = vpop.f32.mrb[0].mxu0
  %v356 = vadd.f32 0.0, %v355
  %357 = vdwg.mxu0
  %v358 = vadd.f32 %v250, %v354
  %v359 = vadd.f32 %v252, %v356
  %360 = vrot.lane.b32.xlu0 %v38, 1
  %v361 = vpop.permute.xlu0 %360
  %362 = vrot.lane.b32.xlu0 %v42, 1
  %v363 = vpop.permute.xlu0 %362
  %vm364 = vcmp.lt.s32.totalorder %v49, 1
  %v365 = vsel %vm364, %v361, %v363
  %v366 = vsel %vm364, %v363, %v361
  %s367 = scalar_lea.vmem %s9, 6
  %v368 = vld [vmem:[%s367] sm:$0x3]
  %v370 = vlaneseq
  %v371 = vshrl.u32 %v370, 7
  %v372 = vsub.s32 0, %v371
  %v373 = vrot.slane %v368, %v372
  %v374 = vlaneseq
  %v375 = vshrl.u32 %v374, 7
  %v376 = vsub.s32 1, %v375
  %v377 = vrot.slane %v368, %v376
  %v380 = vmul.f32 %v366, %v373
  %v381 = vmul.f32 %v365, %v377
  %s382 = scalar_lea.vmem %s1, 24
  %v383 = vld [vmem:[%s382] sm:$0xff]
  %v385 = vsel %vm92, %v383, 0
  %v388 = vsel %vm96, %v380, 0
  %v391 = vsel %vm96, %v381, 0
  %393 = vmatprep.subr.mxu0 %v391
  %394 = vmatpush1.msra.mxu0 %v388
  %395 = vmatprep.subr.mxu0 0.0
  %396 = vmatpush1.msra.mxu0 0.0
  %397 = vmatprep.subr.mxu0 0.0
  %398 = vmatpush1.msra.mxu0 0.0
  %399 = vmatprep.subr.mxu0 0.0
  %400 = vmatpush1.msra.mxu0 0.0
  %401 = vmatprep.subr.mxu0 0.0
  %402 = vmatpush1.msra.mxu0 0.0
  %403 = vmatprep.subr.mxu0 0.0
  %404 = vmatpush1.msra.mxu0 0.0
  %405 = vmatprep.subr.mxu0 0.0
  %406 = vmatpush1.msra.mxu0 0.0
  %407 = vmatprep.subr.mxu0 0.0
  %408 = vmatpush1.msra.mxu0 0.0
  %409 = vmatprep.subr.mxu0 0.0
  %410 = vmatpush1.msra.mxu0 0.0
  %411 = vmatprep.subr.mxu0 0.0
  %412 = vmatpush1.msra.mxu0 0.0
  %413 = vmatprep.subr.mxu0 0.0
  %414 = vmatpush1.msra.mxu0 0.0
  %415 = vmatprep.subr.mxu0 0.0
  %416 = vmatpush1.msra.mxu0 0.0
  %417 = vmatprep.subr.mxu0 0.0
  %418 = vmatpush1.msra.mxu0 0.0
  %419 = vmatprep.subr.mxu0 0.0
  %420 = vmatpush1.msra.mxu0 0.0
  %421 = vmatprep.subr.mxu0 0.0
  %422 = vmatpush1.msra.mxu0 0.0
  %423 = vmatprep.subr.mxu0 0.0
  %424 = vmatpush1.msra.mxu0 0.0
  %425 = vmatprep.subr.mxu0 0.0
  %426 = vmatpush1.msra.mxu0 0.0
  %427 = vmatprep.subr.mxu0 0.0
  %428 = vmatpush1.msra.mxu0 0.0
  %429 = vmatprep.subr.mxu0 0.0
  %430 = vmatpush1.msra.mxu0 0.0
  %431 = vmatprep.subr.mxu0 0.0
  %432 = vmatpush1.msra.mxu0 0.0
  %433 = vmatprep.subr.mxu0 0.0
  %434 = vmatpush1.msra.mxu0 0.0
  %435 = vmatprep.subr.mxu0 0.0
  %436 = vmatpush1.msra.mxu0 0.0
  %437 = vmatprep.subr.mxu0 0.0
  %438 = vmatpush1.msra.mxu0 0.0
  %439 = vmatprep.subr.mxu0 0.0
  %440 = vmatpush1.msra.mxu0 0.0
  %441 = vmatprep.subr.mxu0 0.0
  %442 = vmatpush1.msra.mxu0 0.0
  %443 = vmatprep.subr.mxu0 0.0
  %444 = vmatpush1.msra.mxu0 0.0
  %445 = vmatprep.subr.mxu0 0.0
  %446 = vmatpush1.msra.mxu0 0.0
  %447 = vmatprep.subr.mxu0 0.0
  %448 = vmatpush1.msra.mxu0 0.0
  %449 = vmatprep.subr.mxu0 0.0
  %450 = vmatpush1.msra.mxu0 0.0
  %451 = vmatprep.subr.mxu0 0.0
  %452 = vmatpush1.msra.mxu0 0.0
  %453 = vmatprep.subr.mxu0 0.0
  %454 = vmatpush1.msra.mxu0 0.0
  %455 = vmatprep.subr.mxu0 0.0
  %456 = vmatpush1.msra.mxu0 0.0
  %457 = vmatprep.mubr.f32.mxu0 0.0
  %458 = vmatmul.mubr.f32.gmra.mrb[0].mxu0 %v385
  %v459 = vpop.f32.mrb[0].mxu0
  %v460 = vadd.f32 0.0, %v459
  %v461 = vpop.f32.mrb[0].mxu0
  %v462 = vadd.f32 0.0, %v461
  %463 = vdwg.mxu0
  %v464 = vadd.f32 %v358, %v460
  %v465 = vadd.f32 %v359, %v462
  %s466 = scalar_lea.vmem %s1, 32
  %v467 = vld [vmem:[%s466] sm:$0xff]
  %v469 = vsel %vm92, %v467, 0
  %v471 = vsel %vm96, %v38, 0
  %v473 = vsel %vm96, %v42, 0
  %475 = vmatprep.subr.mxu0 %v473
  %476 = vmatpush1.msra.mxu0 %v471
  %477 = vmatprep.subr.mxu0 0.0
  %478 = vmatpush1.msra.mxu0 0.0
  %479 = vmatprep.subr.mxu0 0.0
  %480 = vmatpush1.msra.mxu0 0.0
  %481 = vmatprep.subr.mxu0 0.0
  %482 = vmatpush1.msra.mxu0 0.0
  %483 = vmatprep.subr.mxu0 0.0
  %484 = vmatpush1.msra.mxu0 0.0
  %485 = vmatprep.subr.mxu0 0.0
  %486 = vmatpush1.msra.mxu0 0.0
  %487 = vmatprep.subr.mxu0 0.0
  %488 = vmatpush1.msra.mxu0 0.0
  %489 = vmatprep.subr.mxu0 0.0
  %490 = vmatpush1.msra.mxu0 0.0
  %491 = vmatprep.subr.mxu0 0.0
  %492 = vmatpush1.msra.mxu0 0.0
  %493 = vmatprep.subr.mxu0 0.0
  %494 = vmatpush1.msra.mxu0 0.0
  %495 = vmatprep.subr.mxu0 0.0
  %496 = vmatpush1.msra.mxu0 0.0
  %497 = vmatprep.subr.mxu0 0.0
  %498 = vmatpush1.msra.mxu0 0.0
  %499 = vmatprep.subr.mxu0 0.0
  %500 = vmatpush1.msra.mxu0 0.0
  %501 = vmatprep.subr.mxu0 0.0
  %502 = vmatpush1.msra.mxu0 0.0
  %503 = vmatprep.subr.mxu0 0.0
  %504 = vmatpush1.msra.mxu0 0.0
  %505 = vmatprep.subr.mxu0 0.0
  %506 = vmatpush1.msra.mxu0 0.0
  %507 = vmatprep.subr.mxu0 0.0
  %508 = vmatpush1.msra.mxu0 0.0
  %509 = vmatprep.subr.mxu0 0.0
  %510 = vmatpush1.msra.mxu0 0.0
  %511 = vmatprep.subr.mxu0 0.0
  %512 = vmatpush1.msra.mxu0 0.0
  %513 = vmatprep.subr.mxu0 0.0
  %514 = vmatpush1.msra.mxu0 0.0
  %515 = vmatprep.subr.mxu0 0.0
  %516 = vmatpush1.msra.mxu0 0.0
  %517 = vmatprep.subr.mxu0 0.0
  %518 = vmatpush1.msra.mxu0 0.0
  %519 = vmatprep.subr.mxu0 0.0
  %520 = vmatpush1.msra.mxu0 0.0
  %521 = vmatprep.subr.mxu0 0.0
  %522 = vmatpush1.msra.mxu0 0.0
  %523 = vmatprep.subr.mxu0 0.0
  %524 = vmatpush1.msra.mxu0 0.0
  %525 = vmatprep.subr.mxu0 0.0
  %526 = vmatpush1.msra.mxu0 0.0
  %527 = vmatprep.subr.mxu0 0.0
  %528 = vmatpush1.msra.mxu0 0.0
  %529 = vmatprep.subr.mxu0 0.0
  %530 = vmatpush1.msra.mxu0 0.0
  %531 = vmatprep.subr.mxu0 0.0
  %532 = vmatpush1.msra.mxu0 0.0
  %533 = vmatprep.subr.mxu0 0.0
  %534 = vmatpush1.msra.mxu0 0.0
  %535 = vmatprep.subr.mxu0 0.0
  %536 = vmatpush1.msra.mxu0 0.0
  %537 = vmatprep.subr.mxu0 0.0
  %538 = vmatpush1.msra.mxu0 0.0
  %539 = vmatprep.mubr.f32.mxu0 0.0
  %540 = vmatmul.mubr.f32.gmra.mrb[0].mxu0 %v469
  %v541 = vpop.f32.mrb[0].mxu0
  %v542 = vadd.f32 0.0, %v541
  %v543 = vpop.f32.mrb[0].mxu0
  %v544 = vadd.f32 0.0, %v543
  %545 = vdwg.mxu0
  %v546 = vadd.f32 %v464, %v542
  %v547 = vadd.f32 %v465, %v544
  %548 = vrot.lane.b32.xlu0 %v38, 127
  %v549 = vpop.permute.xlu0 %548
  %550 = vrot.lane.b32.xlu0 %v42, 127
  %v551 = vpop.permute.xlu0 %550
  %vm552 = vcmp.lt.s32.totalorder %v49, 127
  %v553 = vsel %vm552, %v549, %v551
  %v554 = vsel %vm552, %v551, %v549
  %s555 = scalar_lea.vmem %s9, 10
  %v556 = vld [vmem:[%s555] sm:$0x3]
  %v558 = vlaneseq
  %v559 = vshrl.u32 %v558, 7
  %v560 = vsub.s32 0, %v559
  %v561 = vrot.slane %v556, %v560
  %v562 = vlaneseq
  %v563 = vshrl.u32 %v562, 7
  %v564 = vsub.s32 1, %v563
  %v565 = vrot.slane %v556, %v564
  %v568 = vmul.f32 %v553, %v561
  %v569 = vmul.f32 %v554, %v565
  %s570 = scalar_lea.vmem %s1, 40
  %v571 = vld [vmem:[%s570] sm:$0xff]
  %v573 = vsel %vm92, %v571, 0
  %v576 = vsel %vm96, %v568, 0
  %v579 = vsel %vm96, %v569, 0
  %581 = vmatprep.subr.mxu0 %v579
  %582 = vmatpush1.msra.mxu0 %v576
  %583 = vmatprep.subr.mxu0 0.0
  %584 = vmatpush1.msra.mxu0 0.0
  %585 = vmatprep.subr.mxu0 0.0
  %586 = vmatpush1.msra.mxu0 0.0
  %587 = vmatprep.subr.mxu0 0.0
  %588 = vmatpush1.msra.mxu0 0.0
  %589 = vmatprep.subr.mxu0 0.0
  %590 = vmatpush1.msra.mxu0 0.0
  %591 = vmatprep.subr.mxu0 0.0
  %592 = vmatpush1.msra.mxu0 0.0
  %593 = vmatprep.subr.mxu0 0.0
  %594 = vmatpush1.msra.mxu0 0.0
  %595 = vmatprep.subr.mxu0 0.0
  %596 = vmatpush1.msra.mxu0 0.0
  %597 = vmatprep.subr.mxu0 0.0
  %598 = vmatpush1.msra.mxu0 0.0
  %599 = vmatprep.subr.mxu0 0.0
  %600 = vmatpush1.msra.mxu0 0.0
  %601 = vmatprep.subr.mxu0 0.0
  %602 = vmatpush1.msra.mxu0 0.0
  %603 = vmatprep.subr.mxu0 0.0
  %604 = vmatpush1.msra.mxu0 0.0
  %605 = vmatprep.subr.mxu0 0.0
  %606 = vmatpush1.msra.mxu0 0.0
  %607 = vmatprep.subr.mxu0 0.0
  %608 = vmatpush1.msra.mxu0 0.0
  %609 = vmatprep.subr.mxu0 0.0
  %610 = vmatpush1.msra.mxu0 0.0
  %611 = vmatprep.subr.mxu0 0.0
  %612 = vmatpush1.msra.mxu0 0.0
  %613 = vmatprep.subr.mxu0 0.0
  %614 = vmatpush1.msra.mxu0 0.0
  %615 = vmatprep.subr.mxu0 0.0
  %616 = vmatpush1.msra.mxu0 0.0
  %617 = vmatprep.subr.mxu0 0.0
  %618 = vmatpush1.msra.mxu0 0.0
  %619 = vmatprep.subr.mxu0 0.0
  %620 = vmatpush1.msra.mxu0 0.0
  %621 = vmatprep.subr.mxu0 0.0
  %622 = vmatpush1.msra.mxu0 0.0
  %623 = vmatprep.subr.mxu0 0.0
  %624 = vmatpush1.msra.mxu0 0.0
  %625 = vmatprep.subr.mxu0 0.0
  %626 = vmatpush1.msra.mxu0 0.0
  %627 = vmatprep.subr.mxu0 0.0
  %628 = vmatpush1.msra.mxu0 0.0
  %629 = vmatprep.subr.mxu0 0.0
  %630 = vmatpush1.msra.mxu0 0.0
  %631 = vmatprep.subr.mxu0 0.0
  %632 = vmatpush1.msra.mxu0 0.0
  %633 = vmatprep.subr.mxu0 0.0
  %634 = vmatpush1.msra.mxu0 0.0
  %635 = vmatprep.subr.mxu0 0.0
  %636 = vmatpush1.msra.mxu0 0.0
  %637 = vmatprep.subr.mxu0 0.0
  %638 = vmatpush1.msra.mxu0 0.0
  %639 = vmatprep.subr.mxu0 0.0
  %640 = vmatpush1.msra.mxu0 0.0
  %641 = vmatprep.subr.mxu0 0.0
  %642 = vmatpush1.msra.mxu0 0.0
  %643 = vmatprep.subr.mxu0 0.0
  %644 = vmatpush1.msra.mxu0 0.0
  %645 = vmatprep.mubr.f32.mxu0 0.0
  %646 = vmatmul.mubr.f32.gmra.mrb[0].mxu0 %v573
  %v647 = vpop.f32.mrb[0].mxu0
  %v648 = vadd.f32 0.0, %v647
  %v649 = vpop.f32.mrb[0].mxu0
  %v650 = vadd.f32 0.0, %v649
  %651 = vdwg.mxu0
  %v652 = vadd.f32 %v546, %v648
  %v653 = vadd.f32 %v547, %v650
  %654 = vrot.lane.b32.xlu0 %v38, 113
  %v655 = vpop.permute.xlu0 %654
  %656 = vrot.lane.b32.xlu0 %v42, 113
  %v657 = vpop.permute.xlu0 %656
  %vm658 = vcmp.lt.s32.totalorder %v49, 113
  %v659 = vsel %vm658, %v655, %v657
  %v660 = vsel %vm658, %v657, %v655
  %s661 = scalar_lea.vmem %s9, 12
  %v662 = vld [vmem:[%s661] sm:$0x3]
  %v664 = vlaneseq
  %v665 = vshrl.u32 %v664, 7
  %v666 = vsub.s32 0, %v665
  %v667 = vrot.slane %v662, %v666
  %v668 = vlaneseq
  %v669 = vshrl.u32 %v668, 7
  %v670 = vsub.s32 1, %v669
  %v671 = vrot.slane %v662, %v670
  %v674 = vmul.f32 %v659, %v667
  %v675 = vmul.f32 %v660, %v671
  %s676 = scalar_lea.vmem %s1, 48
  %v677 = vld [vmem:[%s676] sm:$0xff]
  %v679 = vsel %vm92, %v677, 0
  %v682 = vsel %vm96, %v674, 0
  %v685 = vsel %vm96, %v675, 0
  %687 = vmatprep.subr.mxu0 %v685
  %688 = vmatpush1.msra.mxu0 %v682
  %689 = vmatprep.subr.mxu0 0.0
  %690 = vmatpush1.msra.mxu0 0.0
  %691 = vmatprep.subr.mxu0 0.0
  %692 = vmatpush1.msra.mxu0 0.0
  %693 = vmatprep.subr.mxu0 0.0
  %694 = vmatpush1.msra.mxu0 0.0
  %695 = vmatprep.subr.mxu0 0.0
  %696 = vmatpush1.msra.mxu0 0.0
  %697 = vmatprep.subr.mxu0 0.0
  %698 = vmatpush1.msra.mxu0 0.0
  %699 = vmatprep.subr.mxu0 0.0
  %700 = vmatpush1.msra.mxu0 0.0
  %701 = vmatprep.subr.mxu0 0.0
  %702 = vmatpush1.msra.mxu0 0.0
  %703 = vmatprep.subr.mxu0 0.0
  %704 = vmatpush1.msra.mxu0 0.0
  %705 = vmatprep.subr.mxu0 0.0
  %706 = vmatpush1.msra.mxu0 0.0
  %707 = vmatprep.subr.mxu0 0.0
  %708 = vmatpush1.msra.mxu0 0.0
  %709 = vmatprep.subr.mxu0 0.0
  %710 = vmatpush1.msra.mxu0 0.0
  %711 = vmatprep.subr.mxu0 0.0
  %712 = vmatpush1.msra.mxu0 0.0
  %713 = vmatprep.subr.mxu0 0.0
  %714 = vmatpush1.msra.mxu0 0.0
  %715 = vmatprep.subr.mxu0 0.0
  %716 = vmatpush1.msra.mxu0 0.0
  %717 = vmatprep.subr.mxu0 0.0
  %718 = vmatpush1.msra.mxu0 0.0
  %719 = vmatprep.subr.mxu0 0.0
  %720 = vmatpush1.msra.mxu0 0.0
  %721 = vmatprep.subr.mxu0 0.0
  %722 = vmatpush1.msra.mxu0 0.0
  %723 = vmatprep.subr.mxu0 0.0
  %724 = vmatpush1.msra.mxu0 0.0
  %725 = vmatprep.subr.mxu0 0.0
  %726 = vmatpush1.msra.mxu0 0.0
  %727 = vmatprep.subr.mxu0 0.0
  %728 = vmatpush1.msra.mxu0 0.0
  %729 = vmatprep.subr.mxu0 0.0
  %730 = vmatpush1.msra.mxu0 0.0
  %731 = vmatprep.subr.mxu0 0.0
  %732 = vmatpush1.msra.mxu0 0.0
  %733 = vmatprep.subr.mxu0 0.0
  %734 = vmatpush1.msra.mxu0 0.0
  %735 = vmatprep.subr.mxu0 0.0
  %736 = vmatpush1.msra.mxu0 0.0
  %737 = vmatprep.subr.mxu0 0.0
  %738 = vmatpush1.msra.mxu0 0.0
  %739 = vmatprep.subr.mxu0 0.0
  %740 = vmatpush1.msra.mxu0 0.0
  %741 = vmatprep.subr.mxu0 0.0
  %742 = vmatpush1.msra.mxu0 0.0
  %743 = vmatprep.subr.mxu0 0.0
  %744 = vmatpush1.msra.mxu0 0.0
  %745 = vmatprep.subr.mxu0 0.0
  %746 = vmatpush1.msra.mxu0 0.0
  %747 = vmatprep.subr.mxu0 0.0
  %748 = vmatpush1.msra.mxu0 0.0
  %749 = vmatprep.subr.mxu0 0.0
  %750 = vmatpush1.msra.mxu0 0.0
  %751 = vmatprep.mubr.f32.mxu0 0.0
  %752 = vmatmul.mubr.f32.gmra.mrb[0].mxu0 %v679
  %v753 = vpop.f32.mrb[0].mxu0
  %v754 = vadd.f32 0.0, %v753
  %v755 = vpop.f32.mrb[0].mxu0
  %v756 = vadd.f32 0.0, %v755
  %757 = vdwg.mxu0
  %v758 = vadd.f32 %v652, %v754
  %v759 = vadd.f32 %v653, %v756
  %760 = vrot.lane.b32.xlu0 %v38, 112
  %v761 = vpop.permute.xlu0 %760
  %762 = vrot.lane.b32.xlu0 %v42, 112
  %v763 = vpop.permute.xlu0 %762
  %vm764 = vcmp.lt.s32.totalorder %v49, 112
  %v765 = vsel %vm764, %v761, %v763
  %v766 = vsel %vm764, %v763, %v761
  %s767 = scalar_lea.vmem %s9, 14
  %v768 = vld [vmem:[%s767] sm:$0x3]
  %v770 = vlaneseq
  %v771 = vshrl.u32 %v770, 7
  %v772 = vsub.s32 0, %v771
  %v773 = vrot.slane %v768, %v772
  %v774 = vlaneseq
  %v775 = vshrl.u32 %v774, 7
  %v776 = vsub.s32 1, %v775
  %v777 = vrot.slane %v768, %v776
  %v780 = vmul.f32 %v765, %v773
  %v781 = vmul.f32 %v766, %v777
  %s782 = scalar_lea.vmem %s1, 56
  %v783 = vld [vmem:[%s782] sm:$0xff]
  %v785 = vsel %vm92, %v783, 0
  %v788 = vsel %vm96, %v780, 0
  %v791 = vsel %vm96, %v781, 0
  %793 = vmatprep.subr.mxu0 %v791
  %794 = vmatpush1.msra.mxu0 %v788
  %795 = vmatprep.subr.mxu0 0.0
  %796 = vmatpush1.msra.mxu0 0.0
  %797 = vmatprep.subr.mxu0 0.0
  %798 = vmatpush1.msra.mxu0 0.0
  %799 = vmatprep.subr.mxu0 0.0
  %800 = vmatpush1.msra.mxu0 0.0
  %801 = vmatprep.subr.mxu0 0.0
  %802 = vmatpush1.msra.mxu0 0.0
  %803 = vmatprep.subr.mxu0 0.0
  %804 = vmatpush1.msra.mxu0 0.0
  %805 = vmatprep.subr.mxu0 0.0
  %806 = vmatpush1.msra.mxu0 0.0
  %807 = vmatprep.subr.mxu0 0.0
  %808 = vmatpush1.msra.mxu0 0.0
  %809 = vmatprep.subr.mxu0 0.0
  %810 = vmatpush1.msra.mxu0 0.0
  %811 = vmatprep.subr.mxu0 0.0
  %812 = vmatpush1.msra.mxu0 0.0
  %813 = vmatprep.subr.mxu0 0.0
  %814 = vmatpush1.msra.mxu0 0.0
  %815 = vmatprep.subr.mxu0 0.0
  %816 = vmatpush1.msra.mxu0 0.0
  %817 = vmatprep.subr.mxu0 0.0
  %818 = vmatpush1.msra.mxu0 0.0
  %819 = vmatprep.subr.mxu0 0.0
  %820 = vmatpush1.msra.mxu0 0.0
  %821 = vmatprep.subr.mxu0 0.0
  %822 = vmatpush1.msra.mxu0 0.0
  %823 = vmatprep.subr.mxu0 0.0
  %824 = vmatpush1.msra.mxu0 0.0
  %825 = vmatprep.subr.mxu0 0.0
  %826 = vmatpush1.msra.mxu0 0.0
  %827 = vmatprep.subr.mxu0 0.0
  %828 = vmatpush1.msra.mxu0 0.0
  %829 = vmatprep.subr.mxu0 0.0
  %830 = vmatpush1.msra.mxu0 0.0
  %831 = vmatprep.subr.mxu0 0.0
  %832 = vmatpush1.msra.mxu0 0.0
  %833 = vmatprep.subr.mxu0 0.0
  %834 = vmatpush1.msra.mxu0 0.0
  %835 = vmatprep.subr.mxu0 0.0
  %836 = vmatpush1.msra.mxu0 0.0
  %837 = vmatprep.subr.mxu0 0.0
  %838 = vmatpush1.msra.mxu0 0.0
  %839 = vmatprep.subr.mxu0 0.0
  %840 = vmatpush1.msra.mxu0 0.0
  %841 = vmatprep.subr.mxu0 0.0
  %842 = vmatpush1.msra.mxu0 0.0
  %843 = vmatprep.subr.mxu0 0.0
  %844 = vmatpush1.msra.mxu0 0.0
  %845 = vmatprep.subr.mxu0 0.0
  %846 = vmatpush1.msra.mxu0 0.0
  %847 = vmatprep.subr.mxu0 0.0
  %848 = vmatpush1.msra.mxu0 0.0
  %849 = vmatprep.subr.mxu0 0.0
  %850 = vmatpush1.msra.mxu0 0.0
  %851 = vmatprep.subr.mxu0 0.0
  %852 = vmatpush1.msra.mxu0 0.0
  %853 = vmatprep.subr.mxu0 0.0
  %854 = vmatpush1.msra.mxu0 0.0
  %855 = vmatprep.subr.mxu0 0.0
  %856 = vmatpush1.msra.mxu0 0.0
  %857 = vmatprep.mubr.f32.mxu0 0.0
  %858 = vmatmul.mubr.f32.gmra.mrb[0].mxu0 %v785
  %v859 = vpop.f32.mrb[0].mxu0
  %v860 = vadd.f32 0.0, %v859
  %v861 = vpop.f32.mrb[0].mxu0
  %v862 = vadd.f32 0.0, %v861
  %863 = vdwg.mxu0
  %v864 = vadd.f32 %v758, %v860
  %v865 = vadd.f32 %v759, %v862
  %866 = vrot.lane.b32.xlu0 %v38, 111
  %v867 = vpop.permute.xlu0 %866
  %868 = vrot.lane.b32.xlu0 %v42, 111
  %v869 = vpop.permute.xlu0 %868
  %vm870 = vcmp.lt.s32.totalorder %v49, 111
  %v871 = vsel %vm870, %v867, %v869
  %v872 = vsel %vm870, %v869, %v867
  %s873 = scalar_lea.vmem %s9, 16
  %v874 = vld [vmem:[%s873] sm:$0x3]
  %v876 = vlaneseq
  %v877 = vshrl.u32 %v876, 7
  %v878 = vsub.s32 0, %v877
  %v879 = vrot.slane %v874, %v878
  %v880 = vlaneseq
  %v881 = vshrl.u32 %v880, 7
  %v882 = vsub.s32 1, %v881
  %v883 = vrot.slane %v874, %v882
  %v886 = vmul.f32 %v871, %v879
  %v887 = vmul.f32 %v872, %v883
  %s888 = scalar_lea.vmem %s1, 64
  %v889 = vld [vmem:[%s888] sm:$0xff]
  %v891 = vsel %vm92, %v889, 0
  %v894 = vsel %vm96, %v886, 0
  %v897 = vsel %vm96, %v887, 0
  %899 = vmatprep.subr.mxu0 %v897
  %900 = vmatpush1.msra.mxu0 %v894
  %901 = vmatprep.subr.mxu0 0.0
  %902 = vmatpush1.msra.mxu0 0.0
  %903 = vmatprep.subr.mxu0 0.0
  %904 = vmatpush1.msra.mxu0 0.0
  %905 = vmatprep.subr.mxu0 0.0
  %906 = vmatpush1.msra.mxu0 0.0
  %907 = vmatprep.subr.mxu0 0.0
  %908 = vmatpush1.msra.mxu0 0.0
  %909 = vmatprep.subr.mxu0 0.0
  %910 = vmatpush1.msra.mxu0 0.0
  %911 = vmatprep.subr.mxu0 0.0
  %912 = vmatpush1.msra.mxu0 0.0
  %913 = vmatprep.subr.mxu0 0.0
  %914 = vmatpush1.msra.mxu0 0.0
  %915 = vmatprep.subr.mxu0 0.0
  %916 = vmatpush1.msra.mxu0 0.0
  %917 = vmatprep.subr.mxu0 0.0
  %918 = vmatpush1.msra.mxu0 0.0
  %919 = vmatprep.subr.mxu0 0.0
  %920 = vmatpush1.msra.mxu0 0.0
  %921 = vmatprep.subr.mxu0 0.0
  %922 = vmatpush1.msra.mxu0 0.0
  %923 = vmatprep.subr.mxu0 0.0
  %924 = vmatpush1.msra.mxu0 0.0
  %925 = vmatprep.subr.mxu0 0.0
  %926 = vmatpush1.msra.mxu0 0.0
  %927 = vmatprep.subr.mxu0 0.0
  %928 = vmatpush1.msra.mxu0 0.0
  %929 = vmatprep.subr.mxu0 0.0
  %930 = vmatpush1.msra.mxu0 0.0
  %931 = vmatprep.subr.mxu0 0.0
  %932 = vmatpush1.msra.mxu0 0.0
  %933 = vmatprep.subr.mxu0 0.0
  %934 = vmatpush1.msra.mxu0 0.0
  %935 = vmatprep.subr.mxu0 0.0
  %936 = vmatpush1.msra.mxu0 0.0
  %937 = vmatprep.subr.mxu0 0.0
  %938 = vmatpush1.msra.mxu0 0.0
  %939 = vmatprep.subr.mxu0 0.0
  %940 = vmatpush1.msra.mxu0 0.0
  %941 = vmatprep.subr.mxu0 0.0
  %942 = vmatpush1.msra.mxu0 0.0
  %943 = vmatprep.subr.mxu0 0.0
  %944 = vmatpush1.msra.mxu0 0.0
  %945 = vmatprep.subr.mxu0 0.0
  %946 = vmatpush1.msra.mxu0 0.0
  %947 = vmatprep.subr.mxu0 0.0
  %948 = vmatpush1.msra.mxu0 0.0
  %949 = vmatprep.subr.mxu0 0.0
  %950 = vmatpush1.msra.mxu0 0.0
  %951 = vmatprep.subr.mxu0 0.0
  %952 = vmatpush1.msra.mxu0 0.0
  %953 = vmatprep.subr.mxu0 0.0
  %954 = vmatpush1.msra.mxu0 0.0
  %955 = vmatprep.subr.mxu0 0.0
  %956 = vmatpush1.msra.mxu0 0.0
  %957 = vmatprep.subr.mxu0 0.0
  %958 = vmatpush1.msra.mxu0 0.0
  %959 = vmatprep.subr.mxu0 0.0
  %960 = vmatpush1.msra.mxu0 0.0
  %961 = vmatprep.subr.mxu0 0.0
  %962 = vmatpush1.msra.mxu0 0.0
  %963 = vmatprep.mubr.f32.mxu0 0.0
  %964 = vmatmul.mubr.f32.gmra.mrb[0].mxu0 %v891
  %v965 = vpop.f32.mrb[0].mxu0
  %v966 = vadd.f32 0.0, %v965
  %v967 = vpop.f32.mrb[0].mxu0
  %v968 = vadd.f32 0.0, %v967
  %969 = vdwg.mxu0
  %v970 = vadd.f32 %v864, %v966
  %v971 = vadd.f32 %v865, %v968
  %v972 = vld [vmem:[%s2] sm:$0xff]
  %974 = vset.pattern.permute.xlu0 0
  %975 = vperm.xlu0 %974, %v972
  %v976 = vpop.permute.xlu0 %975
  %v978 = vadd.f32 %v970, %v976
  %v979 = vadd.f32 %v971, %v976
  %v980 = vmax.f32 %v978, 0.0
  %v981 = vmax.f32 %v979, 0.0
  %v983 = vcombine.high %v40, %v40
  %985 = vrot.lane.b32.xlu0 %v40, 17
  %v986 = vpop.permute.xlu0 %985
  %987 = vrot.lane.b32.xlu0 %v983, 17
  %v988 = vpop.permute.xlu0 %987
  %v989 = vsel %vm50, %v986, %v988
  %v990 = vsel %vm50, %v988, %v986
  %v991 = vmul.f32 %v990, %v58
  %v992 = vmul.f32 %v989, %v62
  %993 = vrot.lane.b32.xlu0 %v40, 16
  %v994 = vpop.permute.xlu0 %993
  %995 = vrot.lane.b32.xlu0 %v983, 16
  %v996 = vpop.permute.xlu0 %995
  %v997 = vsel %vm72, %v994, %v996
  %v998 = vsel %vm72, %v996, %v994
  %v999 = vmul.f32 %v998, %v81
  %v1000 = vmul.f32 %v997, %v85
  %v1002 = vsel %vm96, %v999, 0
  %v1005 = vsel %vm96, %v1000, 0
  %1007 = vmatprep.subr.mxu0 %v1005
  %1008 = vmatpush1.msra.mxu0 %v1002
  %1009 = vmatprep.subr.mxu0 0.0
  %1010 = vmatpush1.msra.mxu0 0.0
  %1011 = vmatprep.subr.mxu0 0.0
  %1012 = vmatpush1.msra.mxu0 0.0
  %1013 = vmatprep.subr.mxu0 0.0
  %1014 = vmatpush1.msra.mxu0 0.0
  %1015 = vmatprep.subr.mxu0 0.0
  %1016 = vmatpush1.msra.mxu0 0.0
  %1017 = vmatprep.subr.mxu0 0.0
  %1018 = vmatpush1.msra.mxu0 0.0
  %1019 = vmatprep.subr.mxu0 0.0
  %1020 = vmatpush1.msra.mxu0 0.0
  %1021 = vmatprep.subr.mxu0 0.0
  %1022 = vmatpush1.msra.mxu0 0.0
  %1023 = vmatprep.subr.mxu0 0.0
  %1024 = vmatpush1.msra.mxu0 0.0
  %1025 = vmatprep.subr.mxu0 0.0
  %1026 = vmatpush1.msra.mxu0 0.0
  %1027 = vmatprep.subr.mxu0 0.0
  %1028 = vmatpush1.msra.mxu0 0.0
  %1029 = vmatprep.subr.mxu0 0.0
  %1030 = vmatpush1.msra.mxu0 0.0
  %1031 = vmatprep.subr.mxu0 0.0
  %1032 = vmatpush1.msra.mxu0 0.0
  %1033 = vmatprep.subr.mxu0 0.0
  %1034 = vmatpush1.msra.mxu0 0.0
  %1035 = vmatprep.subr.mxu0 0.0
  %1036 = vmatpush1.msra.mxu0 0.0
  %1037 = vmatprep.subr.mxu0 0.0
  %1038 = vmatpush1.msra.mxu0 0.0
  %1039 = vmatprep.subr.mxu0 0.0
  %1040 = vmatpush1.msra.mxu0 0.0
  %1041 = vmatprep.subr.mxu0 0.0
  %1042 = vmatpush1.msra.mxu0 0.0
  %1043 = vmatprep.subr.mxu0 0.0
  %1044 = vmatpush1.msra.mxu0 0.0
  %1045 = vmatprep.subr.mxu0 0.0
  %1046 = vmatpush1.msra.mxu0 0.0
  %1047 = vmatprep.subr.mxu0 0.0
  %1048 = vmatpush1.msra.mxu0 0.0
  %1049 = vmatprep.subr.mxu0 0.0
  %1050 = vmatpush1.msra.mxu0 0.0
  %1051 = vmatprep.subr.mxu0 0.0
  %1052 = vmatpush1.msra.mxu0 0.0
  %1053 = vmatprep.subr.mxu0 0.0
  %1054 = vmatpush1.msra.mxu0 0.0
  %1055 = vmatprep.subr.mxu0 0.0
  %1056 = vmatpush1.msra.mxu0 0.0
  %1057 = vmatprep.subr.mxu0 0.0
  %1058 = vmatpush1.msra.mxu0 0.0
  %1059 = vmatprep.subr.mxu0 0.0
  %1060 = vmatpush1.msra.mxu0 0.0
  %1061 = vmatprep.subr.mxu0 0.0
  %1062 = vmatpush1.msra.mxu0 0.0
  %1063 = vmatprep.subr.mxu0 0.0
  %1064 = vmatpush1.msra.mxu0 0.0
  %1065 = vmatprep.subr.mxu0 0.0
  %1066 = vmatpush1.msra.mxu0 0.0
  %1067 = vmatprep.subr.mxu0 0.0
  %1068 = vmatpush1.msra.mxu0 0.0
  %1069 = vmatprep.subr.mxu0 0.0
  %1070 = vmatpush1.msra.mxu0 0.0
  %1071 = vmatprep.mubr.f32.mxu0 0.0
  %1072 = vmatmul.mubr.f32.gmra.mrb[0].mxu0 %v94
  %v1073 = vpop.f32.mrb[0].mxu0
  %v1074 = vadd.f32 0.0, %v1073
  %v1075 = vpop.f32.mrb[0].mxu0
  %v1076 = vadd.f32 0.0, %v1075
  %1077 = vdwg.mxu0
  %v1079 = vsel %vm96, %v991, 0
  %v1082 = vsel %vm96, %v992, 0
  %1084 = vmatprep.subr.mxu0 %v1082
  %1085 = vmatpush1.msra.mxu0 %v1079
  %1086 = vmatprep.subr.mxu0 0.0
  %1087 = vmatpush1.msra.mxu0 0.0
  %1088 = vmatprep.subr.mxu0 0.0
  %1089 = vmatpush1.msra.mxu0 0.0
  %1090 = vmatprep.subr.mxu0 0.0
  %1091 = vmatpush1.msra.mxu0 0.0
  %1092 = vmatprep.subr.mxu0 0.0
  %1093 = vmatpush1.msra.mxu0 0.0
  %1094 = vmatprep.subr.mxu0 0.0
  %1095 = vmatpush1.msra.mxu0 0.0
  %1096 = vmatprep.subr.mxu0 0.0
  %1097 = vmatpush1.msra.mxu0 0.0
  %1098 = vmatprep.subr.mxu0 0.0
  %1099 = vmatpush1.msra.mxu0 0.0
  %1100 = vmatprep.subr.mxu0 0.0
  %1101 = vmatpush1.msra.mxu0 0.0
  %1102 = vmatprep.subr.mxu0 0.0
  %1103 = vmatpush1.msra.mxu0 0.0
  %1104 = vmatprep.subr.mxu0 0.0
  %1105 = vmatpush1.msra.mxu0 0.0
  %1106 = vmatprep.subr.mxu0 0.0
  %1107 = vmatpush1.msra.mxu0 0.0
  %1108 = vmatprep.subr.mxu0 0.0
  %1109 = vmatpush1.msra.mxu0 0.0
  %1110 = vmatprep.subr.mxu0 0.0
  %1111 = vmatpush1.msra.mxu0 0.0
  %1112 = vmatprep.subr.mxu0 0.0
  %1113 = vmatpush1.msra.mxu0 0.0
  %1114 = vmatprep.subr.mxu0 0.0
  %1115 = vmatpush1.msra.mxu0 0.0
  %1116 = vmatprep.subr.mxu0 0.0
  %1117 = vmatpush1.msra.mxu0 0.0
  %1118 = vmatprep.subr.mxu0 0.0
  %1119 = vmatpush1.msra.mxu0 0.0
  %1120 = vmatprep.subr.mxu0 0.0
  %1121 = vmatpush1.msra.mxu0 0.0
  %1122 = vmatprep.subr.mxu0 0.0
  %1123 = vmatpush1.msra.mxu0 0.0
  %1124 = vmatprep.subr.mxu0 0.0
  %1125 = vmatpush1.msra.mxu0 0.0
  %1126 = vmatprep.subr.mxu0 0.0
  %1127 = vmatpush1.msra.mxu0 0.0
  %1128 = vmatprep.subr.mxu0 0.0
  %1129 = vmatpush1.msra.mxu0 0.0
  %1130 = vmatprep.subr.mxu0 0.0
  %1131 = vmatpush1.msra.mxu0 0.0
  %1132 = vmatprep.subr.mxu0 0.0
  %1133 = vmatpush1.msra.mxu0 0.0
  %1134 = vmatprep.subr.mxu0 0.0
  %1135 = vmatpush1.msra.mxu0 0.0
  %1136 = vmatprep.subr.mxu0 0.0
  %1137 = vmatpush1.msra.mxu0 0.0
  %1138 = vmatprep.subr.mxu0 0.0
  %1139 = vmatpush1.msra.mxu0 0.0
  %1140 = vmatprep.subr.mxu0 0.0
  %1141 = vmatpush1.msra.mxu0 0.0
  %1142 = vmatprep.subr.mxu0 0.0
  %1143 = vmatpush1.msra.mxu0 0.0
  %1144 = vmatprep.subr.mxu0 0.0
  %1145 = vmatpush1.msra.mxu0 0.0
  %1146 = vmatprep.subr.mxu0 0.0
  %1147 = vmatpush1.msra.mxu0 0.0
  %1148 = vmatprep.mubr.f32.mxu0 0.0
  %1149 = vmatmul.mubr.f32.gmra.mrb[0].mxu0 %v175
  %v1150 = vpop.f32.mrb[0].mxu0
  %v1151 = vadd.f32 %v1074, %v1150
  %v1152 = vpop.f32.mrb[0].mxu0
  %v1153 = vadd.f32 %v1076, %v1152
  %1154 = vdwg.mxu0
  %1155 = vrot.lane.b32.xlu0 %v40, 15
  %v1156 = vpop.permute.xlu0 %1155
  %1157 = vrot.lane.b32.xlu0 %v983, 15
  %v1158 = vpop.permute.xlu0 %1157
  %v1159 = vsel %vm258, %v1156, %v1158
  %v1160 = vsel %vm258, %v1158, %v1156
  %v1161 = vmul.f32 %v1160, %v267
  %v1162 = vmul.f32 %v1159, %v271
  %v1164 = vsel %vm96, %v1161, 0
  %v1167 = vsel %vm96, %v1162, 0
  %1169 = vmatprep.subr.mxu0 %v1167
  %1170 = vmatpush1.msra.mxu0 %v1164
  %1171 = vmatprep.subr.mxu0 0.0
  %1172 = vmatpush1.msra.mxu0 0.0
  %1173 = vmatprep.subr.mxu0 0.0
  %1174 = vmatpush1.msra.mxu0 0.0
  %1175 = vmatprep.subr.mxu0 0.0
  %1176 = vmatpush1.msra.mxu0 0.0
  %1177 = vmatprep.subr.mxu0 0.0
  %1178 = vmatpush1.msra.mxu0 0.0
  %1179 = vmatprep.subr.mxu0 0.0
  %1180 = vmatpush1.msra.mxu0 0.0
  %1181 = vmatprep.subr.mxu0 0.0
  %1182 = vmatpush1.msra.mxu0 0.0
  %1183 = vmatprep.subr.mxu0 0.0
  %1184 = vmatpush1.msra.mxu0 0.0
  %1185 = vmatprep.subr.mxu0 0.0
  %1186 = vmatpush1.msra.mxu0 0.0
  %1187 = vmatprep.subr.mxu0 0.0
  %1188 = vmatpush1.msra.mxu0 0.0
  %1189 = vmatprep.subr.mxu0 0.0
  %1190 = vmatpush1.msra.mxu0 0.0
  %1191 = vmatprep.subr.mxu0 0.0
  %1192 = vmatpush1.msra.mxu0 0.0
  %1193 = vmatprep.subr.mxu0 0.0
  %1194 = vmatpush1.msra.mxu0 0.0
  %1195 = vmatprep.subr.mxu0 0.0
  %1196 = vmatpush1.msra.mxu0 0.0
  %1197 = vmatprep.subr.mxu0 0.0
  %1198 = vmatpush1.msra.mxu0 0.0
  %1199 = vmatprep.subr.mxu0 0.0
  %1200 = vmatpush1.msra.mxu0 0.0
  %1201 = vmatprep.subr.mxu0 0.0
  %1202 = vmatpush1.msra.mxu0 0.0
  %1203 = vmatprep.subr.mxu0 0.0
  %1204 = vmatpush1.msra.mxu0 0.0
  %1205 = vmatprep.subr.mxu0 0.0
  %1206 = vmatpush1.msra.mxu0 0.0
  %1207 = vmatprep.subr.mxu0 0.0
  %1208 = vmatpush1.msra.mxu0 0.0
  %1209 = vmatprep.subr.mxu0 0.0
  %1210 = vmatpush1.msra.mxu0 0.0
  %1211 = vmatprep.subr.mxu0 0.0
  %1212 = vmatpush1.msra.mxu0 0.0
  %1213 = vmatprep.subr.mxu0 0.0
  %1214 = vmatpush1.msra.mxu0 0.0
  %1215 = vmatprep.subr.mxu0 0.0
  %1216 = vmatpush1.msra.mxu0 0.0
  %1217 = vmatprep.subr.mxu0 0.0
  %1218 = vmatpush1.msra.mxu0 0.0
  %1219 = vmatprep.subr.mxu0 0.0
  %1220 = vmatpush1.msra.mxu0 0.0
  %1221 = vmatprep.subr.mxu0 0.0
  %1222 = vmatpush1.msra.mxu0 0.0
  %1223 = vmatprep.subr.mxu0 0.0
  %1224 = vmatpush1.msra.mxu0 0.0
  %1225 = vmatprep.subr.mxu0 0.0
  %1226 = vmatpush1.msra.mxu0 0.0
  %1227 = vmatprep.subr.mxu0 0.0
  %1228 = vmatpush1.msra.mxu0 0.0
  %1229 = vmatprep.subr.mxu0 0.0
  %1230 = vmatpush1.msra.mxu0 0.0
  %1231 = vmatprep.subr.mxu0 0.0
  %1232 = vmatpush1.msra.mxu0 0.0
  %1233 = vmatprep.mubr.f32.mxu0 0.0
  %1234 = vmatmul.mubr.f32.gmra.mrb[0].mxu0 %v279
  %v1235 = vpop.f32.mrb[0].mxu0
  %v1236 = vadd.f32 0.0, %v1235
  %v1237 = vpop.f32.mrb[0].mxu0
  %v1238 = vadd.f32 0.0, %v1237
  %1239 = vdwg.mxu0
  %v1240 = vadd.f32 %v1151, %v1236
  %v1241 = vadd.f32 %v1153, %v1238
  %1242 = vrot.lane.b32.xlu0 %v40, 1
  %v1243 = vpop.permute.xlu0 %1242
  %1244 = vrot.lane.b32.xlu0 %v983, 1
  %v1245 = vpop.permute.xlu0 %1244
  %v1246 = vsel %vm364, %v1243, %v1245
  %v1247 = vsel %vm364, %v1245, %v1243
  %v1248 = vmul.f32 %v1247, %v373
  %v1249 = vmul.f32 %v1246, %v377
  %v1251 = vsel %vm96, %v1248, 0
  %v1254 = vsel %vm96, %v1249, 0
  %1256 = vmatprep.subr.mxu0 %v1254
  %1257 = vmatpush1.msra.mxu0 %v1251
  %1258 = vmatprep.subr.mxu0 0.0
  %1259 = vmatpush1.msra.mxu0 0.0
  %1260 = vmatprep.subr.mxu0 0.0
  %1261 = vmatpush1.msra.mxu0 0.0
  %1262 = vmatprep.subr.mxu0 0.0
  %1263 = vmatpush1.msra.mxu0 0.0
  %1264 = vmatprep.subr.mxu0 0.0
  %1265 = vmatpush1.msra.mxu0 0.0
  %1266 = vmatprep.subr.mxu0 0.0
  %1267 = vmatpush1.msra.mxu0 0.0
  %1268 = vmatprep.subr.mxu0 0.0
  %1269 = vmatpush1.msra.mxu0 0.0
  %1270 = vmatprep.subr.mxu0 0.0
  %1271 = vmatpush1.msra.mxu0 0.0
  %1272 = vmatprep.subr.mxu0 0.0
  %1273 = vmatpush1.msra.mxu0 0.0
  %1274 = vmatprep.subr.mxu0 0.0
  %1275 = vmatpush1.msra.mxu0 0.0
  %1276 = vmatprep.subr.mxu0 0.0
  %1277 = vmatpush1.msra.mxu0 0.0
  %1278 = vmatprep.subr.mxu0 0.0
  %1279 = vmatpush1.msra.mxu0 0.0
  %1280 = vmatprep.subr.mxu0 0.0
  %1281 = vmatpush1.msra.mxu0 0.0
  %1282 = vmatprep.subr.mxu0 0.0
  %1283 = vmatpush1.msra.mxu0 0.0
  %1284 = vmatprep.subr.mxu0 0.0
  %1285 = vmatpush1.msra.mxu0 0.0
  %1286 = vmatprep.subr.mxu0 0.0
  %1287 = vmatpush1.msra.mxu0 0.0
  %1288 = vmatprep.subr.mxu0 0.0
  %1289 = vmatpush1.msra.mxu0 0.0
  %1290 = vmatprep.subr.mxu0 0.0
  %1291 = vmatpush1.msra.mxu0 0.0
  %1292 = vmatprep.subr.mxu0 0.0
  %1293 = vmatpush1.msra.mxu0 0.0
  %1294 = vmatprep.subr.mxu0 0.0
  %1295 = vmatpush1.msra.mxu0 0.0
  %1296 = vmatprep.subr.mxu0 0.0
  %1297 = vmatpush1.msra.mxu0 0.0
  %1298 = vmatprep.subr.mxu0 0.0
  %1299 = vmatpush1.msra.mxu0 0.0
  %1300 = vmatprep.subr.mxu0 0.0
  %1301 = vmatpush1.msra.mxu0 0.0
  %1302 = vmatprep.subr.mxu0 0.0
  %1303 = vmatpush1.msra.mxu0 0.0
  %1304 = vmatprep.subr.mxu0 0.0
  %1305 = vmatpush1.msra.mxu0 0.0
  %1306 = vmatprep.subr.mxu0 0.0
  %1307 = vmatpush1.msra.mxu0 0.0
  %1308 = vmatprep.subr.mxu0 0.0
  %1309 = vmatpush1.msra.mxu0 0.0
  %1310 = vmatprep.subr.mxu0 0.0
  %1311 = vmatpush1.msra.mxu0 0.0
  %1312 = vmatprep.subr.mxu0 0.0
  %1313 = vmatpush1.msra.mxu0 0.0
  %1314 = vmatprep.subr.mxu0 0.0
  %1315 = vmatpush1.msra.mxu0 0.0
  %1316 = vmatprep.subr.mxu0 0.0
  %1317 = vmatpush1.msra.mxu0 0.0
  %1318 = vmatprep.subr.mxu0 0.0
  %1319 = vmatpush1.msra.mxu0 0.0
  %1320 = vmatprep.mubr.f32.mxu0 0.0
  %1321 = vmatmul.mubr.f32.gmra.mrb[0].mxu0 %v385
  %v1322 = vpop.f32.mrb[0].mxu0
  %v1323 = vadd.f32 0.0, %v1322
  %v1324 = vpop.f32.mrb[0].mxu0
  %v1325 = vadd.f32 0.0, %v1324
  %1326 = vdwg.mxu0
  %v1327 = vadd.f32 %v1240, %v1323
  %v1328 = vadd.f32 %v1241, %v1325
  %v1329 = vsel %vm96, %v40, 0
  %v1331 = vsel %vm96, %v983, 0
  %1333 = vmatprep.subr.mxu0 %v1331
  %1334 = vmatpush1.msra.mxu0 %v1329
  %1335 = vmatprep.subr.mxu0 0.0
  %1336 = vmatpush1.msra.mxu0 0.0
  %1337 = vmatprep.subr.mxu0 0.0
  %1338 = vmatpush1.msra.mxu0 0.0
  %1339 = vmatprep.subr.mxu0 0.0
  %1340 = vmatpush1.msra.mxu0 0.0
  %1341 = vmatprep.subr.mxu0 0.0
  %1342 = vmatpush1.msra.mxu0 0.0
  %1343 = vmatprep.subr.mxu0 0.0
  %1344 = vmatpush1.msra.mxu0 0.0
  %1345 = vmatprep.subr.mxu0 0.0
  %1346 = vmatpush1.msra.mxu0 0.0
  %1347 = vmatprep.subr.mxu0 0.0
  %1348 = vmatpush1.msra.mxu0 0.0
  %1349 = vmatprep.subr.mxu0 0.0
  %1350 = vmatpush1.msra.mxu0 0.0
  %1351 = vmatprep.subr.mxu0 0.0
  %1352 = vmatpush1.msra.mxu0 0.0
  %1353 = vmatprep.subr.mxu0 0.0
  %1354 = vmatpush1.msra.mxu0 0.0
  %1355 = vmatprep.subr.mxu0 0.0
  %1356 = vmatpush1.msra.mxu0 0.0
  %1357 = vmatprep.subr.mxu0 0.0
  %1358 = vmatpush1.msra.mxu0 0.0
  %1359 = vmatprep.subr.mxu0 0.0
  %1360 = vmatpush1.msra.mxu0 0.0
  %1361 = vmatprep.subr.mxu0 0.0
  %1362 = vmatpush1.msra.mxu0 0.0
  %1363 = vmatprep.subr.mxu0 0.0
  %1364 = vmatpush1.msra.mxu0 0.0
  %1365 = vmatprep.subr.mxu0 0.0
  %1366 = vmatpush1.msra.mxu0 0.0
  %1367 = vmatprep.subr.mxu0 0.0
  %1368 = vmatpush1.msra.mxu0 0.0
  %1369 = vmatprep.subr.mxu0 0.0
  %1370 = vmatpush1.msra.mxu0 0.0
  %1371 = vmatprep.subr.mxu0 0.0
  %1372 = vmatpush1.msra.mxu0 0.0
  %1373 = vmatprep.subr.mxu0 0.0
  %1374 = vmatpush1.msra.mxu0 0.0
  %1375 = vmatprep.subr.mxu0 0.0
  %1376 = vmatpush1.msra.mxu0 0.0
  %1377 = vmatprep.subr.mxu0 0.0
  %1378 = vmatpush1.msra.mxu0 0.0
  %1379 = vmatprep.subr.mxu0 0.0
  %1380 = vmatpush1.msra.mxu0 0.0
  %1381 = vmatprep.subr.mxu0 0.0
  %1382 = vmatpush1.msra.mxu0 0.0
  %1383 = vmatprep.subr.mxu0 0.0
  %1384 = vmatpush1.msra.mxu0 0.0
  %1385 = vmatprep.subr.mxu0 0.0
  %1386 = vmatpush1.msra.mxu0 0.0
  %1387 = vmatprep.subr.mxu0 0.0
  %1388 = vmatpush1.msra.mxu0 0.0
  %1389 = vmatprep.subr.mxu0 0.0
  %1390 = vmatpush1.msra.mxu0 0.0
  %1391 = vmatprep.subr.mxu0 0.0
  %1392 = vmatpush1.msra.mxu0 0.0
  %1393 = vmatprep.subr.mxu0 0.0
  %1394 = vmatpush1.msra.mxu0 0.0
  %1395 = vmatprep.subr.mxu0 0.0
  %1396 = vmatpush1.msra.mxu0 0.0
  %1397 = vmatprep.mubr.f32.mxu0 0.0
  %1398 = vmatmul.mubr.f32.gmra.mrb[0].mxu0 %v469
  %v1399 = vpop.f32.mrb[0].mxu0
  %v1400 = vadd.f32 0.0, %v1399
  %v1401 = vpop.f32.mrb[0].mxu0
  %v1402 = vadd.f32 0.0, %v1401
  %1403 = vdwg.mxu0
  %v1404 = vadd.f32 %v1327, %v1400
  %v1405 = vadd.f32 %v1328, %v1402
  %1406 = vrot.lane.b32.xlu0 %v40, 127
  %v1407 = vpop.permute.xlu0 %1406
  %1408 = vrot.lane.b32.xlu0 %v983, 127
  %v1409 = vpop.permute.xlu0 %1408
  %v1410 = vsel %vm552, %v1407, %v1409
  %v1411 = vsel %vm552, %v1409, %v1407
  %v1412 = vmul.f32 %v1410, %v561
  %v1413 = vmul.f32 %v1411, %v565
  %v1415 = vsel %vm96, %v1412, 0
  %v1418 = vsel %vm96, %v1413, 0
  %1420 = vmatprep.subr.mxu0 %v1418
  %1421 = vmatpush1.msra.mxu0 %v1415
  %1422 = vmatprep.subr.mxu0 0.0
  %1423 = vmatpush1.msra.mxu0 0.0
  %1424 = vmatprep.subr.mxu0 0.0
  %1425 = vmatpush1.msra.mxu0 0.0
  %1426 = vmatprep.subr.mxu0 0.0
  %1427 = vmatpush1.msra.mxu0 0.0
  %1428 = vmatprep.subr.mxu0 0.0
  %1429 = vmatpush1.msra.mxu0 0.0
  %1430 = vmatprep.subr.mxu0 0.0
  %1431 = vmatpush1.msra.mxu0 0.0
  %1432 = vmatprep.subr.mxu0 0.0
  %1433 = vmatpush1.msra.mxu0 0.0
  %1434 = vmatprep.subr.mxu0 0.0
  %1435 = vmatpush1.msra.mxu0 0.0
  %1436 = vmatprep.subr.mxu0 0.0
  %1437 = vmatpush1.msra.mxu0 0.0
  %1438 = vmatprep.subr.mxu0 0.0
  %1439 = vmatpush1.msra.mxu0 0.0
  %1440 = vmatprep.subr.mxu0 0.0
  %1441 = vmatpush1.msra.mxu0 0.0
  %1442 = vmatprep.subr.mxu0 0.0
  %1443 = vmatpush1.msra.mxu0 0.0
  %1444 = vmatprep.subr.mxu0 0.0
  %1445 = vmatpush1.msra.mxu0 0.0
  %1446 = vmatprep.subr.mxu0 0.0
  %1447 = vmatpush1.msra.mxu0 0.0
  %1448 = vmatprep.subr.mxu0 0.0
  %1449 = vmatpush1.msra.mxu0 0.0
  %1450 = vmatprep.subr.mxu0 0.0
  %1451 = vmatpush1.msra.mxu0 0.0
  %1452 = vmatprep.subr.mxu0 0.0
  %1453 = vmatpush1.msra.mxu0 0.0
  %1454 = vmatprep.subr.mxu0 0.0
  %1455 = vmatpush1.msra.mxu0 0.0
  %1456 = vmatprep.subr.mxu0 0.0
  %1457 = vmatpush1.msra.mxu0 0.0
  %1458 = vmatprep.subr.mxu0 0.0
  %1459 = vmatpush1.msra.mxu0 0.0
  %1460 = vmatprep.subr.mxu0 0.0
  %1461 = vmatpush1.msra.mxu0 0.0
  %1462 = vmatprep.subr.mxu0 0.0
  %1463 = vmatpush1.msra.mxu0 0.0
  %1464 = vmatprep.subr.mxu0 0.0
  %1465 = vmatpush1.msra.mxu0 0.0
  %1466 = vmatprep.subr.mxu0 0.0
  %1467 = vmatpush1.msra.mxu0 0.0
  %1468 = vmatprep.subr.mxu0 0.0
  %1469 = vmatpush1.msra.mxu0 0.0
  %1470 = vmatprep.subr.mxu0 0.0
  %1471 = vmatpush1.msra.mxu0 0.0
  %1472 = vmatprep.subr.mxu0 0.0
  %1473 = vmatpush1.msra.mxu0 0.0
  %1474 = vmatprep.subr.mxu0 0.0
  %1475 = vmatpush1.msra.mxu0 0.0
  %1476 = vmatprep.subr.mxu0 0.0
  %1477 = vmatpush1.msra.mxu0 0.0
  %1478 = vmatprep.subr.mxu0 0.0
  %1479 = vmatpush1.msra.mxu0 0.0
  %1480 = vmatprep.subr.mxu0 0.0
  %1481 = vmatpush1.msra.mxu0 0.0
  %1482 = vmatprep.subr.mxu0 0.0
  %1483 = vmatpush1.msra.mxu0 0.0
  %1484 = vmatprep.mubr.f32.mxu0 0.0
  %1485 = vmatmul.mubr.f32.gmra.mrb[0].mxu0 %v573
  %v1486 = vpop.f32.mrb[0].mxu0
  %v1487 = vadd.f32 0.0, %v1486
  %v1488 = vpop.f32.mrb[0].mxu0
  %v1489 = vadd.f32 0.0, %v1488
  %1490 = vdwg.mxu0
  %v1491 = vadd.f32 %v1404, %v1487
  %v1492 = vadd.f32 %v1405, %v1489
  %1493 = vrot.lane.b32.xlu0 %v40, 113
  %v1494 = vpop.permute.xlu0 %1493
  %1495 = vrot.lane.b32.xlu0 %v983, 113
  %v1496 = vpop.permute.xlu0 %1495
  %v1497 = vsel %vm658, %v1494, %v1496
  %v1498 = vsel %vm658, %v1496, %v1494
  %v1499 = vmul.f32 %v1497, %v667
  %v1500 = vmul.f32 %v1498, %v671
  %v1502 = vsel %vm96, %v1499, 0
  %v1505 = vsel %vm96, %v1500, 0
  %1507 = vmatprep.subr.mxu0 %v1505
  %1508 = vmatpush1.msra.mxu0 %v1502
  %1509 = vmatprep.subr.mxu0 0.0
  %1510 = vmatpush1.msra.mxu0 0.0
  %1511 = vmatprep.subr.mxu0 0.0
  %1512 = vmatpush1.msra.mxu0 0.0
  %1513 = vmatprep.subr.mxu0 0.0
  %1514 = vmatpush1.msra.mxu0 0.0
  %1515 = vmatprep.subr.mxu0 0.0
  %1516 = vmatpush1.msra.mxu0 0.0
  %1517 = vmatprep.subr.mxu0 0.0
  %1518 = vmatpush1.msra.mxu0 0.0
  %1519 = vmatprep.subr.mxu0 0.0
  %1520 = vmatpush1.msra.mxu0 0.0
  %1521 = vmatprep.subr.mxu0 0.0
  %1522 = vmatpush1.msra.mxu0 0.0
  %1523 = vmatprep.subr.mxu0 0.0
  %1524 = vmatpush1.msra.mxu0 0.0
  %1525 = vmatprep.subr.mxu0 0.0
  %1526 = vmatpush1.msra.mxu0 0.0
  %1527 = vmatprep.subr.mxu0 0.0
  %1528 = vmatpush1.msra.mxu0 0.0
  %1529 = vmatprep.subr.mxu0 0.0
  %1530 = vmatpush1.msra.mxu0 0.0
  %1531 = vmatprep.subr.mxu0 0.0
  %1532 = vmatpush1.msra.mxu0 0.0
  %1533 = vmatprep.subr.mxu0 0.0
  %1534 = vmatpush1.msra.mxu0 0.0
  %1535 = vmatprep.subr.mxu0 0.0
  %1536 = vmatpush1.msra.mxu0 0.0
  %1537 = vmatprep.subr.mxu0 0.0
  %1538 = vmatpush1.msra.mxu0 0.0
  %1539 = vmatprep.subr.mxu0 0.0
  %1540 = vmatpush1.msra.mxu0 0.0
  %1541 = vmatprep.subr.mxu0 0.0
  %1542 = vmatpush1.msra.mxu0 0.0
  %1543 = vmatprep.subr.mxu0 0.0
  %1544 = vmatpush1.msra.mxu0 0.0
  %1545 = vmatprep.subr.mxu0 0.0
  %1546 = vmatpush1.msra.mxu0 0.0
  %1547 = vmatprep.subr.mxu0 0.0
  %1548 = vmatpush1.msra.mxu0 0.0
  %1549 = vmatprep.subr.mxu0 0.0
  %1550 = vmatpush1.msra.mxu0 0.0
  %1551 = vmatprep.subr.mxu0 0.0
  %1552 = vmatpush1.msra.mxu0 0.0
  %1553 = vmatprep.subr.mxu0 0.0
  %1554 = vmatpush1.msra.mxu0 0.0
  %1555 = vmatprep.subr.mxu0 0.0
  %1556 = vmatpush1.msra.mxu0 0.0
  %1557 = vmatprep.subr.mxu0 0.0
  %1558 = vmatpush1.msra.mxu0 0.0
  %1559 = vmatprep.subr.mxu0 0.0
  %1560 = vmatpush1.msra.mxu0 0.0
  %1561 = vmatprep.subr.mxu0 0.0
  %1562 = vmatpush1.msra.mxu0 0.0
  %1563 = vmatprep.subr.mxu0 0.0
  %1564 = vmatpush1.msra.mxu0 0.0
  %1565 = vmatprep.subr.mxu0 0.0
  %1566 = vmatpush1.msra.mxu0 0.0
  %1567 = vmatprep.subr.mxu0 0.0
  %1568 = vmatpush1.msra.mxu0 0.0
  %1569 = vmatprep.subr.mxu0 0.0
  %1570 = vmatpush1.msra.mxu0 0.0
  %1571 = vmatprep.mubr.f32.mxu0 0.0
  %1572 = vmatmul.mubr.f32.gmra.mrb[0].mxu0 %v679
  %v1573 = vpop.f32.mrb[0].mxu0
  %v1574 = vadd.f32 0.0, %v1573
  %v1575 = vpop.f32.mrb[0].mxu0
  %v1576 = vadd.f32 0.0, %v1575
  %1577 = vdwg.mxu0
  %v1578 = vadd.f32 %v1491, %v1574
  %v1579 = vadd.f32 %v1492, %v1576
  %1580 = vrot.lane.b32.xlu0 %v40, 112
  %v1581 = vpop.permute.xlu0 %1580
  %1582 = vrot.lane.b32.xlu0 %v983, 112
  %v1583 = vpop.permute.xlu0 %1582
  %v1584 = vsel %vm764, %v1581, %v1583
  %v1585 = vsel %vm764, %v1583, %v1581
  %v1586 = vmul.f32 %v1584, %v773
  %v1587 = vmul.f32 %v1585, %v777
  %v1589 = vsel %vm96, %v1586, 0
  %v1592 = vsel %vm96, %v1587, 0
  %1594 = vmatprep.subr.mxu0 %v1592
  %1595 = vmatpush1.msra.mxu0 %v1589
  %1596 = vmatprep.subr.mxu0 0.0
  %1597 = vmatpush1.msra.mxu0 0.0
  %1598 = vmatprep.subr.mxu0 0.0
  %1599 = vmatpush1.msra.mxu0 0.0
  %1600 = vmatprep.subr.mxu0 0.0
  %1601 = vmatpush1.msra.mxu0 0.0
  %1602 = vmatprep.subr.mxu0 0.0
  %1603 = vmatpush1.msra.mxu0 0.0
  %1604 = vmatprep.subr.mxu0 0.0
  %1605 = vmatpush1.msra.mxu0 0.0
  %1606 = vmatprep.subr.mxu0 0.0
  %1607 = vmatpush1.msra.mxu0 0.0
  %1608 = vmatprep.subr.mxu0 0.0
  %1609 = vmatpush1.msra.mxu0 0.0
  %1610 = vmatprep.subr.mxu0 0.0
  %1611 = vmatpush1.msra.mxu0 0.0
  %1612 = vmatprep.subr.mxu0 0.0
  %1613 = vmatpush1.msra.mxu0 0.0
  %1614 = vmatprep.subr.mxu0 0.0
  %1615 = vmatpush1.msra.mxu0 0.0
  %1616 = vmatprep.subr.mxu0 0.0
  %1617 = vmatpush1.msra.mxu0 0.0
  %1618 = vmatprep.subr.mxu0 0.0
  %1619 = vmatpush1.msra.mxu0 0.0
  %1620 = vmatprep.subr.mxu0 0.0
  %1621 = vmatpush1.msra.mxu0 0.0
  %1622 = vmatprep.subr.mxu0 0.0
  %1623 = vmatpush1.msra.mxu0 0.0
  %1624 = vmatprep.subr.mxu0 0.0
  %1625 = vmatpush1.msra.mxu0 0.0
  %1626 = vmatprep.subr.mxu0 0.0
  %1627 = vmatpush1.msra.mxu0 0.0
  %1628 = vmatprep.subr.mxu0 0.0
  %1629 = vmatpush1.msra.mxu0 0.0
  %1630 = vmatprep.subr.mxu0 0.0
  %1631 = vmatpush1.msra.mxu0 0.0
  %1632 = vmatprep.subr.mxu0 0.0
  %1633 = vmatpush1.msra.mxu0 0.0
  %1634 = vmatprep.subr.mxu0 0.0
  %1635 = vmatpush1.msra.mxu0 0.0
  %1636 = vmatprep.subr.mxu0 0.0
  %1637 = vmatpush1.msra.mxu0 0.0
  %1638 = vmatprep.subr.mxu0 0.0
  %1639 = vmatpush1.msra.mxu0 0.0
  %1640 = vmatprep.subr.mxu0 0.0
  %1641 = vmatpush1.msra.mxu0 0.0
  %1642 = vmatprep.subr.mxu0 0.0
  %1643 = vmatpush1.msra.mxu0 0.0
  %1644 = vmatprep.subr.mxu0 0.0
  %1645 = vmatpush1.msra.mxu0 0.0
  %1646 = vmatprep.subr.mxu0 0.0
  %1647 = vmatpush1.msra.mxu0 0.0
  %1648 = vmatprep.subr.mxu0 0.0
  %1649 = vmatpush1.msra.mxu0 0.0
  %1650 = vmatprep.subr.mxu0 0.0
  %1651 = vmatpush1.msra.mxu0 0.0
  %1652 = vmatprep.subr.mxu0 0.0
  %1653 = vmatpush1.msra.mxu0 0.0
  %1654 = vmatprep.subr.mxu0 0.0
  %1655 = vmatpush1.msra.mxu0 0.0
  %1656 = vmatprep.subr.mxu0 0.0
  %1657 = vmatpush1.msra.mxu0 0.0
  %1658 = vmatprep.mubr.f32.mxu0 0.0
  %1659 = vmatmul.mubr.f32.gmra.mrb[0].mxu0 %v785
  %v1660 = vpop.f32.mrb[0].mxu0
  %v1661 = vadd.f32 0.0, %v1660
  %v1662 = vpop.f32.mrb[0].mxu0
  %v1663 = vadd.f32 0.0, %v1662
  %1664 = vdwg.mxu0
  %v1665 = vadd.f32 %v1578, %v1661
  %v1666 = vadd.f32 %v1579, %v1663
  %1667 = vrot.lane.b32.xlu0 %v40, 111
  %v1668 = vpop.permute.xlu0 %1667
  %1669 = vrot.lane.b32.xlu0 %v983, 111
  %v1670 = vpop.permute.xlu0 %1669
  %v1671 = vsel %vm870, %v1668, %v1670
  %v1672 = vsel %vm870, %v1670, %v1668
  %v1673 = vmul.f32 %v1671, %v879
  %v1674 = vmul.f32 %v1672, %v883
  %v1676 = vsel %vm96, %v1673, 0
  %v1679 = vsel %vm96, %v1674, 0
  %1681 = vmatprep.subr.mxu0 %v1679
  %1682 = vmatpush1.msra.mxu0 %v1676
  %1683 = vmatprep.subr.mxu0 0.0
  %1684 = vmatpush1.msra.mxu0 0.0
  %1685 = vmatprep.subr.mxu0 0.0
  %1686 = vmatpush1.msra.mxu0 0.0
  %1687 = vmatprep.subr.mxu0 0.0
  %1688 = vmatpush1.msra.mxu0 0.0
  %1689 = vmatprep.subr.mxu0 0.0
  %1690 = vmatpush1.msra.mxu0 0.0
  %1691 = vmatprep.subr.mxu0 0.0
  %1692 = vmatpush1.msra.mxu0 0.0
  %1693 = vmatprep.subr.mxu0 0.0
  %1694 = vmatpush1.msra.mxu0 0.0
  %1695 = vmatprep.subr.mxu0 0.0
  %1696 = vmatpush1.msra.mxu0 0.0
  %1697 = vmatprep.subr.mxu0 0.0
  %1698 = vmatpush1.msra.mxu0 0.0
  %1699 = vmatprep.subr.mxu0 0.0
  %1700 = vmatpush1.msra.mxu0 0.0
  %1701 = vmatprep.subr.mxu0 0.0
  %1702 = vmatpush1.msra.mxu0 0.0
  %1703 = vmatprep.subr.mxu0 0.0
  %1704 = vmatpush1.msra.mxu0 0.0
  %1705 = vmatprep.subr.mxu0 0.0
  %1706 = vmatpush1.msra.mxu0 0.0
  %1707 = vmatprep.subr.mxu0 0.0
  %1708 = vmatpush1.msra.mxu0 0.0
  %1709 = vmatprep.subr.mxu0 0.0
  %1710 = vmatpush1.msra.mxu0 0.0
  %1711 = vmatprep.subr.mxu0 0.0
  %1712 = vmatpush1.msra.mxu0 0.0
  %1713 = vmatprep.subr.mxu0 0.0
  %1714 = vmatpush1.msra.mxu0 0.0
  %1715 = vmatprep.subr.mxu0 0.0
  %1716 = vmatpush1.msra.mxu0 0.0
  %1717 = vmatprep.subr.mxu0 0.0
  %1718 = vmatpush1.msra.mxu0 0.0
  %1719 = vmatprep.subr.mxu0 0.0
  %1720 = vmatpush1.msra.mxu0 0.0
  %1721 = vmatprep.subr.mxu0 0.0
  %1722 = vmatpush1.msra.mxu0 0.0
  %1723 = vmatprep.subr.mxu0 0.0
  %1724 = vmatpush1.msra.mxu0 0.0
  %1725 = vmatprep.subr.mxu0 0.0
  %1726 = vmatpush1.msra.mxu0 0.0
  %1727 = vmatprep.subr.mxu0 0.0
  %1728 = vmatpush1.msra.mxu0 0.0
  %1729 = vmatprep.subr.mxu0 0.0
  %1730 = vmatpush1.msra.mxu0 0.0
  %1731 = vmatprep.subr.mxu0 0.0
  %1732 = vmatpush1.msra.mxu0 0.0
  %1733 = vmatprep.subr.mxu0 0.0
  %1734 = vmatpush1.msra.mxu0 0.0
  %1735 = vmatprep.subr.mxu0 0.0
  %1736 = vmatpush1.msra.mxu0 0.0
  %1737 = vmatprep.subr.mxu0 0.0
  %1738 = vmatpush1.msra.mxu0 0.0
  %1739 = vmatprep.subr.mxu0 0.0
  %1740 = vmatpush1.msra.mxu0 0.0
  %1741 = vmatprep.subr.mxu0 0.0
  %1742 = vmatpush1.msra.mxu0 0.0
  %1743 = vmatprep.subr.mxu0 0.0
  %1744 = vmatpush1.msra.mxu0 0.0
  %1745 = vmatprep.mubr.f32.mxu0 0.0
  %1746 = vmatmul.mubr.f32.gmra.mrb[0].mxu0 %v891
  %v1747 = vpop.f32.mrb[0].mxu0
  %v1748 = vadd.f32 0.0, %v1747
  %v1749 = vpop.f32.mrb[0].mxu0
  %v1750 = vadd.f32 0.0, %v1749
  %1751 = vdwg.mxu0
  %v1752 = vadd.f32 %v1665, %v1748
  %v1753 = vadd.f32 %v1666, %v1750
  %v1754 = vadd.f32 %v1752, %v976
  %v1755 = vadd.f32 %v1753, %v976
  %v1756 = vmax.f32 %v1754, 0.0
  %v1757 = vmax.f32 %v1755, 0.0
  %v1758 = vld [vmem:[%s10] sm:$0x3]
  %v1760 = vlaneseq
  %v1761 = vshrl.u32 %v1760, 7
  %v1762 = vsub.s32 0, %v1761
  %v1763 = vrot.slane %v1758, %v1762
  %v1764 = vlaneseq
  %v1765 = vshrl.u32 %v1764, 7
  %v1766 = vsub.s32 1, %v1765
  %v1767 = vrot.slane %v1758, %v1766
  %v1770 = vmul.f32 %v980, %v1763
  %v1771 = vmul.f32 %v981, %v1767
  %v1772 = vadd.f32 %v1770, %v1771
  %1773 = vadd.xlane.f32.xlu0 %v1772
  %v1774 = vpop.xlane.xlu0 %1773
  %v1775 = vmul.f32 %v1770, %v980
  %v1776 = vmul.f32 %v1771, %v981
  %v1777 = vadd.f32 %v1775, %v1776
  %1778 = vadd.xlane.f32.xlu0 %v1777
  %v1779 = vpop.xlane.xlu0 %1778
  %v1780 = vmul.f32 %v1756, %v1763
  %v1781 = vmul.f32 %v1757, %v1767
  %v1782 = vadd.f32 %v1780, %v1781
  %1783 = vadd.xlane.f32.xlu0 %v1782
  %v1784 = vpop.xlane.xlu0 %1783
  %v1785 = vmul.f32 %v1780, %v1756
  %v1786 = vmul.f32 %v1781, %v1757
  %v1787 = vadd.f32 %v1785, %v1786
  %1788 = vadd.xlane.f32.xlu0 %v1787
  %v1789 = vpop.xlane.xlu0 %1788
  %v1790 = vadd.f32 %v1774, %v1784
  %v1791 = vadd.f32 %v1779, %v1789
  %v1792 = vmul.f32 %v1790, 0.001953125
  %v1793 = vmul.f32 %v1791, 0.001953125
  %v1794 = vmul.f32 %v1792, %v1792
  %v1795 = vsub.f32 %v1793, %v1794
  %v1796 = vmax.f32 %v1795, 0.0
  %v1797 = vld [vmem:[%s5] sm:$0xff]
  %v1798 = vadd.f32 %v1796, 1e-05
  %v1799 = vrsqrt.pop %v1798
  %v1800 = vmul.f32 %v1797, %v1799
  %v1801 = vld [vmem:[%s6] sm:$0xff]
  %v1802 = vmul.f32 %v1792, %v1800
  %v1803 = vsub.f32 %v1801, %v1802
  %1805 = vset.pattern.permute.xlu0 0
  %1806 = vperm.xlu0 %1805, %v1800
  %v1807 = vpop.permute.xlu0 %1806
  %v1809 = vmul.f32 %v980, %v1807
  %v1810 = vmul.f32 %v981, %v1807
  %1812 = vset.pattern.permute.xlu0 0
  %1813 = vperm.xlu0 %1812, %v1803
  %v1814 = vpop.permute.xlu0 %1813
  %v1816 = vadd.f32 %v1809, %v1814
  %v1817 = vadd.f32 %v1810, %v1814
  %v1818 = vmul.f32 %v1756, %v1807
  %v1819 = vmul.f32 %v1757, %v1807
  %v1820 = vadd.f32 %v1818, %v1814
  %v1821 = vadd.f32 %v1819, %v1814
  %1822 = vrot.lane.b32.xlu0 %v1816, 17
  %v1823 = vpop.permute.xlu0 %1822
  %1824 = vrot.lane.b32.xlu0 %v1817, 17
  %v1825 = vpop.permute.xlu0 %1824
  %v1826 = vsel %vm50, %v1823, %v1825
  %v1827 = vsel %vm50, %v1825, %v1823
  %v1828 = vmul.f32 %v1827, %v58
  %v1829 = vmul.f32 %v1826, %v62
  %v1830 = vld [vmem:[%s3] sm:$0xff]
  %1831 = vrot.lane.b32.xlu0 %v1816, 16
  %v1832 = vpop.permute.xlu0 %1831
  %1833 = vrot.lane.b32.xlu0 %v1817, 16
  %v1834 = vpop.permute.xlu0 %1833
  %v1835 = vsel %vm72, %v1832, %v1834
  %v1836 = vsel %vm72, %v1834, %v1832
  %v1837 = vmul.f32 %v1836, %v81
  %v1838 = vmul.f32 %v1835, %v85
  %s1839 = scalar_lea.vmem %s3, 8
  %v1840 = vld [vmem:[%s1839] sm:$0xff]
  %vm1841 = vcmask 64512
  %v1843 = vsel %vm1841, %v1840, 0
  %1845 = vmatprep.subr.mxu0 %v1838
  %1846 = vmatpush1.msra.mxu0 %v1837
  %1847 = vmatprep.subr.mxu0 0.0
  %1848 = vmatpush1.msra.mxu0 0.0
  %1849 = vmatprep.subr.mxu0 0.0
  %1850 = vmatpush1.msra.mxu0 0.0
  %1851 = vmatprep.subr.mxu0 0.0
  %1852 = vmatpush1.msra.mxu0 0.0
  %1853 = vmatprep.subr.mxu0 0.0
  %1854 = vmatpush1.msra.mxu0 0.0
  %1855 = vmatprep.subr.mxu0 0.0
  %1856 = vmatpush1.msra.mxu0 0.0
  %1857 = vmatprep.subr.mxu0 0.0
  %1858 = vmatpush1.msra.mxu0 0.0
  %1859 = vmatprep.subr.mxu0 0.0
  %1860 = vmatpush1.msra.mxu0 0.0
  %1861 = vmatprep.subr.mxu0 0.0
  %1862 = vmatpush1.msra.mxu0 0.0
  %1863 = vmatprep.subr.mxu0 0.0
  %1864 = vmatpush1.msra.mxu0 0.0
  %1865 = vmatprep.subr.mxu0 0.0
  %1866 = vmatpush1.msra.mxu0 0.0
  %1867 = vmatprep.subr.mxu0 0.0
  %1868 = vmatpush1.msra.mxu0 0.0
  %1869 = vmatprep.subr.mxu0 0.0
  %1870 = vmatpush1.msra.mxu0 0.0
  %1871 = vmatprep.subr.mxu0 0.0
  %1872 = vmatpush1.msra.mxu0 0.0
  %1873 = vmatprep.subr.mxu0 0.0
  %1874 = vmatpush1.msra.mxu0 0.0
  %1875 = vmatprep.subr.mxu0 0.0
  %1876 = vmatpush1.msra.mxu0 0.0
  %1877 = vmatprep.subr.mxu0 0.0
  %1878 = vmatpush1.msra.mxu0 0.0
  %1879 = vmatprep.subr.mxu0 0.0
  %1880 = vmatpush1.msra.mxu0 0.0
  %1881 = vmatprep.subr.mxu0 0.0
  %1882 = vmatpush1.msra.mxu0 0.0
  %1883 = vmatprep.subr.mxu0 0.0
  %1884 = vmatpush1.msra.mxu0 0.0
  %1885 = vmatprep.subr.mxu0 0.0
  %1886 = vmatpush1.msra.mxu0 0.0
  %1887 = vmatprep.subr.mxu0 0.0
  %1888 = vmatpush1.msra.mxu0 0.0
  %1889 = vmatprep.subr.mxu0 0.0
  %1890 = vmatpush1.msra.mxu0 0.0
  %1891 = vmatprep.subr.mxu0 0.0
  %1892 = vmatpush1.msra.mxu0 0.0
  %1893 = vmatprep.subr.mxu0 0.0
  %1894 = vmatpush1.msra.mxu0 0.0
  %1895 = vmatprep.subr.mxu0 0.0
  %1896 = vmatpush1.msra.mxu0 0.0
  %1897 = vmatprep.subr.mxu0 0.0
  %1898 = vmatpush1.msra.mxu0 0.0
  %1899 = vmatprep.subr.mxu0 0.0
  %1900 = vmatpush1.msra.mxu0 0.0
  %1901 = vmatprep.subr.mxu0 0.0
  %1902 = vmatpush1.msra.mxu0 0.0
  %1903 = vmatprep.subr.mxu0 0.0
  %1904 = vmatpush1.msra.mxu0 0.0
  %1905 = vmatprep.subr.mxu0 0.0
  %1906 = vmatpush1.msra.mxu0 0.0
  %1907 = vmatprep.subr.mxu0 0.0
  %1908 = vmatpush1.msra.mxu0 0.0
  %1909 = vmatprep.mubr.f32.mxu0 0.0
  %1910 = vmatmul.mubr.f32.gmra.mrb[0].mxu0 %v1843
  %v1911 = vpop.f32.mrb[0].mxu0
  %v1912 = vadd.f32 0.0, %v1911
  %v1913 = vpop.f32.mrb[0].mxu0
  %v1914 = vadd.f32 0.0, %v1913
  %1915 = vdwg.mxu0
  %v1917 = vsel %vm1841, %v1830, 0
  %1919 = vmatprep.subr.mxu0 %v1829
  %1920 = vmatpush1.msra.mxu0 %v1828
  %1921 = vmatprep.subr.mxu0 0.0
  %1922 = vmatpush1.msra.mxu0 0.0
  %1923 = vmatprep.subr.mxu0 0.0
  %1924 = vmatpush1.msra.mxu0 0.0
  %1925 = vmatprep.subr.mxu0 0.0
  %1926 = vmatpush1.msra.mxu0 0.0
  %1927 = vmatprep.subr.mxu0 0.0
  %1928 = vmatpush1.msra.mxu0 0.0
  %1929 = vmatprep.subr.mxu0 0.0
  %1930 = vmatpush1.msra.mxu0 0.0
  %1931 = vmatprep.subr.mxu0 0.0
  %1932 = vmatpush1.msra.mxu0 0.0
  %1933 = vmatprep.subr.mxu0 0.0
  %1934 = vmatpush1.msra.mxu0 0.0
  %1935 = vmatprep.subr.mxu0 0.0
  %1936 = vmatpush1.msra.mxu0 0.0
  %1937 = vmatprep.subr.mxu0 0.0
  %1938 = vmatpush1.msra.mxu0 0.0
  %1939 = vmatprep.subr.mxu0 0.0
  %1940 = vmatpush1.msra.mxu0 0.0
  %1941 = vmatprep.subr.mxu0 0.0
  %1942 = vmatpush1.msra.mxu0 0.0
  %1943 = vmatprep.subr.mxu0 0.0
  %1944 = vmatpush1.msra.mxu0 0.0
  %1945 = vmatprep.subr.mxu0 0.0
  %1946 = vmatpush1.msra.mxu0 0.0
  %1947 = vmatprep.subr.mxu0 0.0
  %1948 = vmatpush1.msra.mxu0 0.0
  %1949 = vmatprep.subr.mxu0 0.0
  %1950 = vmatpush1.msra.mxu0 0.0
  %1951 = vmatprep.subr.mxu0 0.0
  %1952 = vmatpush1.msra.mxu0 0.0
  %1953 = vmatprep.subr.mxu0 0.0
  %1954 = vmatpush1.msra.mxu0 0.0
  %1955 = vmatprep.subr.mxu0 0.0
  %1956 = vmatpush1.msra.mxu0 0.0
  %1957 = vmatprep.subr.mxu0 0.0
  %1958 = vmatpush1.msra.mxu0 0.0
  %1959 = vmatprep.subr.mxu0 0.0
  %1960 = vmatpush1.msra.mxu0 0.0
  %1961 = vmatprep.subr.mxu0 0.0
  %1962 = vmatpush1.msra.mxu0 0.0
  %1963 = vmatprep.subr.mxu0 0.0
  %1964 = vmatpush1.msra.mxu0 0.0
  %1965 = vmatprep.subr.mxu0 0.0
  %1966 = vmatpush1.msra.mxu0 0.0
  %1967 = vmatprep.subr.mxu0 0.0
  %1968 = vmatpush1.msra.mxu0 0.0
  %1969 = vmatprep.subr.mxu0 0.0
  %1970 = vmatpush1.msra.mxu0 0.0
  %1971 = vmatprep.subr.mxu0 0.0
  %1972 = vmatpush1.msra.mxu0 0.0
  %1973 = vmatprep.subr.mxu0 0.0
  %1974 = vmatpush1.msra.mxu0 0.0
  %1975 = vmatprep.subr.mxu0 0.0
  %1976 = vmatpush1.msra.mxu0 0.0
  %1977 = vmatprep.subr.mxu0 0.0
  %1978 = vmatpush1.msra.mxu0 0.0
  %1979 = vmatprep.subr.mxu0 0.0
  %1980 = vmatpush1.msra.mxu0 0.0
  %1981 = vmatprep.subr.mxu0 0.0
  %1982 = vmatpush1.msra.mxu0 0.0
  %1983 = vmatprep.mubr.f32.mxu0 0.0
  %1984 = vmatmul.mubr.f32.gmra.mrb[0].mxu0 %v1917
  %v1985 = vpop.f32.mrb[0].mxu0
  %v1986 = vadd.f32 %v1912, %v1985
  %v1987 = vpop.f32.mrb[0].mxu0
  %v1988 = vadd.f32 %v1914, %v1987
  %1989 = vdwg.mxu0
  %1990 = vrot.lane.b32.xlu0 %v1816, 15
  %v1991 = vpop.permute.xlu0 %1990
  %1992 = vrot.lane.b32.xlu0 %v1817, 15
  %v1993 = vpop.permute.xlu0 %1992
  %v1994 = vsel %vm258, %v1991, %v1993
  %v1995 = vsel %vm258, %v1993, %v1991
  %v1996 = vmul.f32 %v1995, %v267
  %v1997 = vmul.f32 %v1994, %v271
  %s1998 = scalar_lea.vmem %s3, 16
  %v1999 = vld [vmem:[%s1998] sm:$0xff]
  %v2001 = vsel %vm1841, %v1999, 0
  %2003 = vmatprep.subr.mxu0 %v1997
  %2004 = vmatpush1.msra.mxu0 %v1996
  %2005 = vmatprep.subr.mxu0 0.0
  %2006 = vmatpush1.msra.mxu0 0.0
  %2007 = vmatprep.subr.mxu0 0.0
  %2008 = vmatpush1.msra.mxu0 0.0
  %2009 = vmatprep.subr.mxu0 0.0
  %2010 = vmatpush1.msra.mxu0 0.0
  %2011 = vmatprep.subr.mxu0 0.0
  %2012 = vmatpush1.msra.mxu0 0.0
  %2013 = vmatprep.subr.mxu0 0.0
  %2014 = vmatpush1.msra.mxu0 0.0
  %2015 = vmatprep.subr.mxu0 0.0
  %2016 = vmatpush1.msra.mxu0 0.0
  %2017 = vmatprep.subr.mxu0 0.0
  %2018 = vmatpush1.msra.mxu0 0.0
  %2019 = vmatprep.subr.mxu0 0.0
  %2020 = vmatpush1.msra.mxu0 0.0
  %2021 = vmatprep.subr.mxu0 0.0
  %2022 = vmatpush1.msra.mxu0 0.0
  %2023 = vmatprep.subr.mxu0 0.0
  %2024 = vmatpush1.msra.mxu0 0.0
  %2025 = vmatprep.subr.mxu0 0.0
  %2026 = vmatpush1.msra.mxu0 0.0
  %2027 = vmatprep.subr.mxu0 0.0
  %2028 = vmatpush1.msra.mxu0 0.0
  %2029 = vmatprep.subr.mxu0 0.0
  %2030 = vmatpush1.msra.mxu0 0.0
  %2031 = vmatprep.subr.mxu0 0.0
  %2032 = vmatpush1.msra.mxu0 0.0
  %2033 = vmatprep.subr.mxu0 0.0
  %2034 = vmatpush1.msra.mxu0 0.0
  %2035 = vmatprep.subr.mxu0 0.0
  %2036 = vmatpush1.msra.mxu0 0.0
  %2037 = vmatprep.subr.mxu0 0.0
  %2038 = vmatpush1.msra.mxu0 0.0
  %2039 = vmatprep.subr.mxu0 0.0
  %2040 = vmatpush1.msra.mxu0 0.0
  %2041 = vmatprep.subr.mxu0 0.0
  %2042 = vmatpush1.msra.mxu0 0.0
  %2043 = vmatprep.subr.mxu0 0.0
  %2044 = vmatpush1.msra.mxu0 0.0
  %2045 = vmatprep.subr.mxu0 0.0
  %2046 = vmatpush1.msra.mxu0 0.0
  %2047 = vmatprep.subr.mxu0 0.0
  %2048 = vmatpush1.msra.mxu0 0.0
  %2049 = vmatprep.subr.mxu0 0.0
  %2050 = vmatpush1.msra.mxu0 0.0
  %2051 = vmatprep.subr.mxu0 0.0
  %2052 = vmatpush1.msra.mxu0 0.0
  %2053 = vmatprep.subr.mxu0 0.0
  %2054 = vmatpush1.msra.mxu0 0.0
  %2055 = vmatprep.subr.mxu0 0.0
  %2056 = vmatpush1.msra.mxu0 0.0
  %2057 = vmatprep.subr.mxu0 0.0
  %2058 = vmatpush1.msra.mxu0 0.0
  %2059 = vmatprep.subr.mxu0 0.0
  %2060 = vmatpush1.msra.mxu0 0.0
  %2061 = vmatprep.subr.mxu0 0.0
  %2062 = vmatpush1.msra.mxu0 0.0
  %2063 = vmatprep.subr.mxu0 0.0
  %2064 = vmatpush1.msra.mxu0 0.0
  %2065 = vmatprep.subr.mxu0 0.0
  %2066 = vmatpush1.msra.mxu0 0.0
  %2067 = vmatprep.mubr.f32.mxu0 0.0
  %2068 = vmatmul.mubr.f32.gmra.mrb[0].mxu0 %v2001
  %v2069 = vpop.f32.mrb[0].mxu0
  %v2070 = vadd.f32 0.0, %v2069
  %v2071 = vpop.f32.mrb[0].mxu0
  %v2072 = vadd.f32 0.0, %v2071
  %2073 = vdwg.mxu0
  %v2074 = vadd.f32 %v1986, %v2070
  %v2075 = vadd.f32 %v1988, %v2072
  %2076 = vrot.lane.b32.xlu0 %v1816, 1
  %v2077 = vpop.permute.xlu0 %2076
  %2078 = vrot.lane.b32.xlu0 %v1817, 1
  %v2079 = vpop.permute.xlu0 %2078
  %v2080 = vsel %vm364, %v2077, %v2079
  %v2081 = vsel %vm364, %v2079, %v2077
  %v2082 = vmul.f32 %v2081, %v373
  %v2083 = vmul.f32 %v2080, %v377
  %s2084 = scalar_lea.vmem %s3, 24
  %v2085 = vld [vmem:[%s2084] sm:$0xff]
  %v2087 = vsel %vm1841, %v2085, 0
  %2089 = vmatprep.subr.mxu0 %v2083
  %2090 = vmatpush1.msra.mxu0 %v2082
  %2091 = vmatprep.subr.mxu0 0.0
  %2092 = vmatpush1.msra.mxu0 0.0
  %2093 = vmatprep.subr.mxu0 0.0
  %2094 = vmatpush1.msra.mxu0 0.0
  %2095 = vmatprep.subr.mxu0 0.0
  %2096 = vmatpush1.msra.mxu0 0.0
  %2097 = vmatprep.subr.mxu0 0.0
  %2098 = vmatpush1.msra.mxu0 0.0
  %2099 = vmatprep.subr.mxu0 0.0
  %2100 = vmatpush1.msra.mxu0 0.0
  %2101 = vmatprep.subr.mxu0 0.0
  %2102 = vmatpush1.msra.mxu0 0.0
  %2103 = vmatprep.subr.mxu0 0.0
  %2104 = vmatpush1.msra.mxu0 0.0
  %2105 = vmatprep.subr.mxu0 0.0
  %2106 = vmatpush1.msra.mxu0 0.0
  %2107 = vmatprep.subr.mxu0 0.0
  %2108 = vmatpush1.msra.mxu0 0.0
  %2109 = vmatprep.subr.mxu0 0.0
  %2110 = vmatpush1.msra.mxu0 0.0
  %2111 = vmatprep.subr.mxu0 0.0
  %2112 = vmatpush1.msra.mxu0 0.0
  %2113 = vmatprep.subr.mxu0 0.0
  %2114 = vmatpush1.msra.mxu0 0.0
  %2115 = vmatprep.subr.mxu0 0.0
  %2116 = vmatpush1.msra.mxu0 0.0
  %2117 = vmatprep.subr.mxu0 0.0
  %2118 = vmatpush1.msra.mxu0 0.0
  %2119 = vmatprep.subr.mxu0 0.0
  %2120 = vmatpush1.msra.mxu0 0.0
  %2121 = vmatprep.subr.mxu0 0.0
  %2122 = vmatpush1.msra.mxu0 0.0
  %2123 = vmatprep.subr.mxu0 0.0
  %2124 = vmatpush1.msra.mxu0 0.0
  %2125 = vmatprep.subr.mxu0 0.0
  %2126 = vmatpush1.msra.mxu0 0.0
  %2127 = vmatprep.subr.mxu0 0.0
  %2128 = vmatpush1.msra.mxu0 0.0
  %2129 = vmatprep.subr.mxu0 0.0
  %2130 = vmatpush1.msra.mxu0 0.0
  %2131 = vmatprep.subr.mxu0 0.0
  %2132 = vmatpush1.msra.mxu0 0.0
  %2133 = vmatprep.subr.mxu0 0.0
  %2134 = vmatpush1.msra.mxu0 0.0
  %2135 = vmatprep.subr.mxu0 0.0
  %2136 = vmatpush1.msra.mxu0 0.0
  %2137 = vmatprep.subr.mxu0 0.0
  %2138 = vmatpush1.msra.mxu0 0.0
  %2139 = vmatprep.subr.mxu0 0.0
  %2140 = vmatpush1.msra.mxu0 0.0
  %2141 = vmatprep.subr.mxu0 0.0
  %2142 = vmatpush1.msra.mxu0 0.0
  %2143 = vmatprep.subr.mxu0 0.0
  %2144 = vmatpush1.msra.mxu0 0.0
  %2145 = vmatprep.subr.mxu0 0.0
  %2146 = vmatpush1.msra.mxu0 0.0
  %2147 = vmatprep.subr.mxu0 0.0
  %2148 = vmatpush1.msra.mxu0 0.0
  %2149 = vmatprep.subr.mxu0 0.0
  %2150 = vmatpush1.msra.mxu0 0.0
  %2151 = vmatprep.subr.mxu0 0.0
  %2152 = vmatpush1.msra.mxu0 0.0
  %2153 = vmatprep.mubr.f32.mxu0 0.0
  %2154 = vmatmul.mubr.f32.gmra.mrb[0].mxu0 %v2087
  %v2155 = vpop.f32.mrb[0].mxu0
  %v2156 = vadd.f32 0.0, %v2155
  %v2157 = vpop.f32.mrb[0].mxu0
  %v2158 = vadd.f32 0.0, %v2157
  %2159 = vdwg.mxu0
  %v2160 = vadd.f32 %v2074, %v2156
  %v2161 = vadd.f32 %v2075, %v2158
  %s2162 = scalar_lea.vmem %s3, 32
  %v2163 = vld [vmem:[%s2162] sm:$0xff]
  %v2165 = vsel %vm1841, %v2163, 0
  %2167 = vmatprep.subr.mxu0 %v1817
  %2168 = vmatpush1.msra.mxu0 %v1816
  %2169 = vmatprep.subr.mxu0 0.0
  %2170 = vmatpush1.msra.mxu0 0.0
  %2171 = vmatprep.subr.mxu0 0.0
  %2172 = vmatpush1.msra.mxu0 0.0
  %2173 = vmatprep.subr.mxu0 0.0
  %2174 = vmatpush1.msra.mxu0 0.0
  %2175 = vmatprep.subr.mxu0 0.0
  %2176 = vmatpush1.msra.mxu0 0.0
  %2177 = vmatprep.subr.mxu0 0.0
  %2178 = vmatpush1.msra.mxu0 0.0
  %2179 = vmatprep.subr.mxu0 0.0
  %2180 = vmatpush1.msra.mxu0 0.0
  %2181 = vmatprep.subr.mxu0 0.0
  %2182 = vmatpush1.msra.mxu0 0.0
  %2183 = vmatprep.subr.mxu0 0.0
  %2184 = vmatpush1.msra.mxu0 0.0
  %2185 = vmatprep.subr.mxu0 0.0
  %2186 = vmatpush1.msra.mxu0 0.0
  %2187 = vmatprep.subr.mxu0 0.0
  %2188 = vmatpush1.msra.mxu0 0.0
  %2189 = vmatprep.subr.mxu0 0.0
  %2190 = vmatpush1.msra.mxu0 0.0
  %2191 = vmatprep.subr.mxu0 0.0
  %2192 = vmatpush1.msra.mxu0 0.0
  %2193 = vmatprep.subr.mxu0 0.0
  %2194 = vmatpush1.msra.mxu0 0.0
  %2195 = vmatprep.subr.mxu0 0.0
  %2196 = vmatpush1.msra.mxu0 0.0
  %2197 = vmatprep.subr.mxu0 0.0
  %2198 = vmatpush1.msra.mxu0 0.0
  %2199 = vmatprep.subr.mxu0 0.0
  %2200 = vmatpush1.msra.mxu0 0.0
  %2201 = vmatprep.subr.mxu0 0.0
  %2202 = vmatpush1.msra.mxu0 0.0
  %2203 = vmatprep.subr.mxu0 0.0
  %2204 = vmatpush1.msra.mxu0 0.0
  %2205 = vmatprep.subr.mxu0 0.0
  %2206 = vmatpush1.msra.mxu0 0.0
  %2207 = vmatprep.subr.mxu0 0.0
  %2208 = vmatpush1.msra.mxu0 0.0
  %2209 = vmatprep.subr.mxu0 0.0
  %2210 = vmatpush1.msra.mxu0 0.0
  %2211 = vmatprep.subr.mxu0 0.0
  %2212 = vmatpush1.msra.mxu0 0.0
  %2213 = vmatprep.subr.mxu0 0.0
  %2214 = vmatpush1.msra.mxu0 0.0
  %2215 = vmatprep.subr.mxu0 0.0
  %2216 = vmatpush1.msra.mxu0 0.0
  %2217 = vmatprep.subr.mxu0 0.0
  %2218 = vmatpush1.msra.mxu0 0.0
  %2219 = vmatprep.subr.mxu0 0.0
  %2220 = vmatpush1.msra.mxu0 0.0
  %2221 = vmatprep.subr.mxu0 0.0
  %2222 = vmatpush1.msra.mxu0 0.0
  %2223 = vmatprep.subr.mxu0 0.0
  %2224 = vmatpush1.msra.mxu0 0.0
  %2225 = vmatprep.subr.mxu0 0.0
  %2226 = vmatpush1.msra.mxu0 0.0
  %2227 = vmatprep.subr.mxu0 0.0
  %2228 = vmatpush1.msra.mxu0 0.0
  %2229 = vmatprep.subr.mxu0 0.0
  %2230 = vmatpush1.msra.mxu0 0.0
  %2231 = vmatprep.mubr.f32.mxu0 0.0
  %2232 = vmatmul.mubr.f32.gmra.mrb[0].mxu0 %v2165
  %v2233 = vpop.f32.mrb[0].mxu0
  %v2234 = vadd.f32 0.0, %v2233
  %v2235 = vpop.f32.mrb[0].mxu0
  %v2236 = vadd.f32 0.0, %v2235
  %2237 = vdwg.mxu0
  %v2238 = vadd.f32 %v2160, %v2234
  %v2239 = vadd.f32 %v2161, %v2236
  %2240 = vrot.lane.b32.xlu0 %v1816, 127
  %v2241 = vpop.permute.xlu0 %2240
  %2242 = vrot.lane.b32.xlu0 %v1817, 127
  %v2243 = vpop.permute.xlu0 %2242
  %v2244 = vsel %vm552, %v2241, %v2243
  %v2245 = vsel %vm552, %v2243, %v2241
  %v2246 = vmul.f32 %v2244, %v561
  %v2247 = vmul.f32 %v2245, %v565
  %s2248 = scalar_lea.vmem %s3, 40
  %v2249 = vld [vmem:[%s2248] sm:$0xff]
  %v2251 = vsel %vm1841, %v2249, 0
  %2253 = vmatprep.subr.mxu0 %v2247
  %2254 = vmatpush1.msra.mxu0 %v2246
  %2255 = vmatprep.subr.mxu0 0.0
  %2256 = vmatpush1.msra.mxu0 0.0
  %2257 = vmatprep.subr.mxu0 0.0
  %2258 = vmatpush1.msra.mxu0 0.0
  %2259 = vmatprep.subr.mxu0 0.0
  %2260 = vmatpush1.msra.mxu0 0.0
  %2261 = vmatprep.subr.mxu0 0.0
  %2262 = vmatpush1.msra.mxu0 0.0
  %2263 = vmatprep.subr.mxu0 0.0
  %2264 = vmatpush1.msra.mxu0 0.0
  %2265 = vmatprep.subr.mxu0 0.0
  %2266 = vmatpush1.msra.mxu0 0.0
  %2267 = vmatprep.subr.mxu0 0.0
  %2268 = vmatpush1.msra.mxu0 0.0
  %2269 = vmatprep.subr.mxu0 0.0
  %2270 = vmatpush1.msra.mxu0 0.0
  %2271 = vmatprep.subr.mxu0 0.0
  %2272 = vmatpush1.msra.mxu0 0.0
  %2273 = vmatprep.subr.mxu0 0.0
  %2274 = vmatpush1.msra.mxu0 0.0
  %2275 = vmatprep.subr.mxu0 0.0
  %2276 = vmatpush1.msra.mxu0 0.0
  %2277 = vmatprep.subr.mxu0 0.0
  %2278 = vmatpush1.msra.mxu0 0.0
  %2279 = vmatprep.subr.mxu0 0.0
  %2280 = vmatpush1.msra.mxu0 0.0
  %2281 = vmatprep.subr.mxu0 0.0
  %2282 = vmatpush1.msra.mxu0 0.0
  %2283 = vmatprep.subr.mxu0 0.0
  %2284 = vmatpush1.msra.mxu0 0.0
  %2285 = vmatprep.subr.mxu0 0.0
  %2286 = vmatpush1.msra.mxu0 0.0
  %2287 = vmatprep.subr.mxu0 0.0
  %2288 = vmatpush1.msra.mxu0 0.0
  %2289 = vmatprep.subr.mxu0 0.0
  %2290 = vmatpush1.msra.mxu0 0.0
  %2291 = vmatprep.subr.mxu0 0.0
  %2292 = vmatpush1.msra.mxu0 0.0
  %2293 = vmatprep.subr.mxu0 0.0
  %2294 = vmatpush1.msra.mxu0 0.0
  %2295 = vmatprep.subr.mxu0 0.0
  %2296 = vmatpush1.msra.mxu0 0.0
  %2297 = vmatprep.subr.mxu0 0.0
  %2298 = vmatpush1.msra.mxu0 0.0
  %2299 = vmatprep.subr.mxu0 0.0
  %2300 = vmatpush1.msra.mxu0 0.0
  %2301 = vmatprep.subr.mxu0 0.0
  %2302 = vmatpush1.msra.mxu0 0.0
  %2303 = vmatprep.subr.mxu0 0.0
  %2304 = vmatpush1.msra.mxu0 0.0
  %2305 = vmatprep.subr.mxu0 0.0
  %2306 = vmatpush1.msra.mxu0 0.0
  %2307 = vmatprep.subr.mxu0 0.0
  %2308 = vmatpush1.msra.mxu0 0.0
  %2309 = vmatprep.subr.mxu0 0.0
  %2310 = vmatpush1.msra.mxu0 0.0
  %2311 = vmatprep.subr.mxu0 0.0
  %2312 = vmatpush1.msra.mxu0 0.0
  %2313 = vmatprep.subr.mxu0 0.0
  %2314 = vmatpush1.msra.mxu0 0.0
  %2315 = vmatprep.subr.mxu0 0.0
  %2316 = vmatpush1.msra.mxu0 0.0
  %2317 = vmatprep.mubr.f32.mxu0 0.0
  %2318 = vmatmul.mubr.f32.gmra.mrb[0].mxu0 %v2251
  %v2319 = vpop.f32.mrb[0].mxu0
  %v2320 = vadd.f32 0.0, %v2319
  %v2321 = vpop.f32.mrb[0].mxu0
  %v2322 = vadd.f32 0.0, %v2321
  %2323 = vdwg.mxu0
  %v2324 = vadd.f32 %v2238, %v2320
  %v2325 = vadd.f32 %v2239, %v2322
  %2326 = vrot.lane.b32.xlu0 %v1816, 113
  %v2327 = vpop.permute.xlu0 %2326
  %2328 = vrot.lane.b32.xlu0 %v1817, 113
  %v2329 = vpop.permute.xlu0 %2328
  %v2330 = vsel %vm658, %v2327, %v2329
  %v2331 = vsel %vm658, %v2329, %v2327
  %v2332 = vmul.f32 %v2330, %v667
  %v2333 = vmul.f32 %v2331, %v671
  %s2334 = scalar_lea.vmem %s3, 48
  %v2335 = vld [vmem:[%s2334] sm:$0xff]
  %v2337 = vsel %vm1841, %v2335, 0
  %2339 = vmatprep.subr.mxu0 %v2333
  %2340 = vmatpush1.msra.mxu0 %v2332
  %2341 = vmatprep.subr.mxu0 0.0
  %2342 = vmatpush1.msra.mxu0 0.0
  %2343 = vmatprep.subr.mxu0 0.0
  %2344 = vmatpush1.msra.mxu0 0.0
  %2345 = vmatprep.subr.mxu0 0.0
  %2346 = vmatpush1.msra.mxu0 0.0
  %2347 = vmatprep.subr.mxu0 0.0
  %2348 = vmatpush1.msra.mxu0 0.0
  %2349 = vmatprep.subr.mxu0 0.0
  %2350 = vmatpush1.msra.mxu0 0.0
  %2351 = vmatprep.subr.mxu0 0.0
  %2352 = vmatpush1.msra.mxu0 0.0
  %2353 = vmatprep.subr.mxu0 0.0
  %2354 = vmatpush1.msra.mxu0 0.0
  %2355 = vmatprep.subr.mxu0 0.0
  %2356 = vmatpush1.msra.mxu0 0.0
  %2357 = vmatprep.subr.mxu0 0.0
  %2358 = vmatpush1.msra.mxu0 0.0
  %2359 = vmatprep.subr.mxu0 0.0
  %2360 = vmatpush1.msra.mxu0 0.0
  %2361 = vmatprep.subr.mxu0 0.0
  %2362 = vmatpush1.msra.mxu0 0.0
  %2363 = vmatprep.subr.mxu0 0.0
  %2364 = vmatpush1.msra.mxu0 0.0
  %2365 = vmatprep.subr.mxu0 0.0
  %2366 = vmatpush1.msra.mxu0 0.0
  %2367 = vmatprep.subr.mxu0 0.0
  %2368 = vmatpush1.msra.mxu0 0.0
  %2369 = vmatprep.subr.mxu0 0.0
  %2370 = vmatpush1.msra.mxu0 0.0
  %2371 = vmatprep.subr.mxu0 0.0
  %2372 = vmatpush1.msra.mxu0 0.0
  %2373 = vmatprep.subr.mxu0 0.0
  %2374 = vmatpush1.msra.mxu0 0.0
  %2375 = vmatprep.subr.mxu0 0.0
  %2376 = vmatpush1.msra.mxu0 0.0
  %2377 = vmatprep.subr.mxu0 0.0
  %2378 = vmatpush1.msra.mxu0 0.0
  %2379 = vmatprep.subr.mxu0 0.0
  %2380 = vmatpush1.msra.mxu0 0.0
  %2381 = vmatprep.subr.mxu0 0.0
  %2382 = vmatpush1.msra.mxu0 0.0
  %2383 = vmatprep.subr.mxu0 0.0
  %2384 = vmatpush1.msra.mxu0 0.0
  %2385 = vmatprep.subr.mxu0 0.0
  %2386 = vmatpush1.msra.mxu0 0.0
  %2387 = vmatprep.subr.mxu0 0.0
  %2388 = vmatpush1.msra.mxu0 0.0
  %2389 = vmatprep.subr.mxu0 0.0
  %2390 = vmatpush1.msra.mxu0 0.0
  %2391 = vmatprep.subr.mxu0 0.0
  %2392 = vmatpush1.msra.mxu0 0.0
  %2393 = vmatprep.subr.mxu0 0.0
  %2394 = vmatpush1.msra.mxu0 0.0
  %2395 = vmatprep.subr.mxu0 0.0
  %2396 = vmatpush1.msra.mxu0 0.0
  %2397 = vmatprep.subr.mxu0 0.0
  %2398 = vmatpush1.msra.mxu0 0.0
  %2399 = vmatprep.subr.mxu0 0.0
  %2400 = vmatpush1.msra.mxu0 0.0
  %2401 = vmatprep.subr.mxu0 0.0
  %2402 = vmatpush1.msra.mxu0 0.0
  %2403 = vmatprep.mubr.f32.mxu0 0.0
  %2404 = vmatmul.mubr.f32.gmra.mrb[0].mxu0 %v2337
  %v2405 = vpop.f32.mrb[0].mxu0
  %v2406 = vadd.f32 0.0, %v2405
  %v2407 = vpop.f32.mrb[0].mxu0
  %v2408 = vadd.f32 0.0, %v2407
  %2409 = vdwg.mxu0
  %v2410 = vadd.f32 %v2324, %v2406
  %v2411 = vadd.f32 %v2325, %v2408
  %2412 = vrot.lane.b32.xlu0 %v1816, 112
  %v2413 = vpop.permute.xlu0 %2412
  %2414 = vrot.lane.b32.xlu0 %v1817, 112
  %v2415 = vpop.permute.xlu0 %2414
  %v2416 = vsel %vm764, %v2413, %v2415
  %v2417 = vsel %vm764, %v2415, %v2413
  %v2418 = vmul.f32 %v2416, %v773
  %v2419 = vmul.f32 %v2417, %v777
  %s2420 = scalar_lea.vmem %s3, 56
  %v2421 = vld [vmem:[%s2420] sm:$0xff]
  %v2423 = vsel %vm1841, %v2421, 0
  %2425 = vmatprep.subr.mxu0 %v2419
  %2426 = vmatpush1.msra.mxu0 %v2418
  %2427 = vmatprep.subr.mxu0 0.0
  %2428 = vmatpush1.msra.mxu0 0.0
  %2429 = vmatprep.subr.mxu0 0.0
  %2430 = vmatpush1.msra.mxu0 0.0
  %2431 = vmatprep.subr.mxu0 0.0
  %2432 = vmatpush1.msra.mxu0 0.0
  %2433 = vmatprep.subr.mxu0 0.0
  %2434 = vmatpush1.msra.mxu0 0.0
  %2435 = vmatprep.subr.mxu0 0.0
  %2436 = vmatpush1.msra.mxu0 0.0
  %2437 = vmatprep.subr.mxu0 0.0
  %2438 = vmatpush1.msra.mxu0 0.0
  %2439 = vmatprep.subr.mxu0 0.0
  %2440 = vmatpush1.msra.mxu0 0.0
  %2441 = vmatprep.subr.mxu0 0.0
  %2442 = vmatpush1.msra.mxu0 0.0
  %2443 = vmatprep.subr.mxu0 0.0
  %2444 = vmatpush1.msra.mxu0 0.0
  %2445 = vmatprep.subr.mxu0 0.0
  %2446 = vmatpush1.msra.mxu0 0.0
  %2447 = vmatprep.subr.mxu0 0.0
  %2448 = vmatpush1.msra.mxu0 0.0
  %2449 = vmatprep.subr.mxu0 0.0
  %2450 = vmatpush1.msra.mxu0 0.0
  %2451 = vmatprep.subr.mxu0 0.0
  %2452 = vmatpush1.msra.mxu0 0.0
  %2453 = vmatprep.subr.mxu0 0.0
  %2454 = vmatpush1.msra.mxu0 0.0
  %2455 = vmatprep.subr.mxu0 0.0
  %2456 = vmatpush1.msra.mxu0 0.0
  %2457 = vmatprep.subr.mxu0 0.0
  %2458 = vmatpush1.msra.mxu0 0.0
  %2459 = vmatprep.subr.mxu0 0.0
  %2460 = vmatpush1.msra.mxu0 0.0
  %2461 = vmatprep.subr.mxu0 0.0
  %2462 = vmatpush1.msra.mxu0 0.0
  %2463 = vmatprep.subr.mxu0 0.0
  %2464 = vmatpush1.msra.mxu0 0.0
  %2465 = vmatprep.subr.mxu0 0.0
  %2466 = vmatpush1.msra.mxu0 0.0
  %2467 = vmatprep.subr.mxu0 0.0
  %2468 = vmatpush1.msra.mxu0 0.0
  %2469 = vmatprep.subr.mxu0 0.0
  %2470 = vmatpush1.msra.mxu0 0.0
  %2471 = vmatprep.subr.mxu0 0.0
  %2472 = vmatpush1.msra.mxu0 0.0
  %2473 = vmatprep.subr.mxu0 0.0
  %2474 = vmatpush1.msra.mxu0 0.0
  %2475 = vmatprep.subr.mxu0 0.0
  %2476 = vmatpush1.msra.mxu0 0.0
  %2477 = vmatprep.subr.mxu0 0.0
  %2478 = vmatpush1.msra.mxu0 0.0
  %2479 = vmatprep.subr.mxu0 0.0
  %2480 = vmatpush1.msra.mxu0 0.0
  %2481 = vmatprep.subr.mxu0 0.0
  %2482 = vmatpush1.msra.mxu0 0.0
  %2483 = vmatprep.subr.mxu0 0.0
  %2484 = vmatpush1.msra.mxu0 0.0
  %2485 = vmatprep.subr.mxu0 0.0
  %2486 = vmatpush1.msra.mxu0 0.0
  %2487 = vmatprep.subr.mxu0 0.0
  %2488 = vmatpush1.msra.mxu0 0.0
  %2489 = vmatprep.mubr.f32.mxu0 0.0
  %2490 = vmatmul.mubr.f32.gmra.mrb[0].mxu0 %v2423
  %v2491 = vpop.f32.mrb[0].mxu0
  %v2492 = vadd.f32 0.0, %v2491
  %v2493 = vpop.f32.mrb[0].mxu0
  %v2494 = vadd.f32 0.0, %v2493
  %2495 = vdwg.mxu0
  %v2496 = vadd.f32 %v2410, %v2492
  %v2497 = vadd.f32 %v2411, %v2494
  %2498 = vrot.lane.b32.xlu0 %v1816, 111
  %v2499 = vpop.permute.xlu0 %2498
  %2500 = vrot.lane.b32.xlu0 %v1817, 111
  %v2501 = vpop.permute.xlu0 %2500
  %v2502 = vsel %vm870, %v2499, %v2501
  %v2503 = vsel %vm870, %v2501, %v2499
  %v2504 = vmul.f32 %v2502, %v879
  %v2505 = vmul.f32 %v2503, %v883
  %s2506 = scalar_lea.vmem %s3, 64
  %v2507 = vld [vmem:[%s2506] sm:$0xff]
  %v2509 = vsel %vm1841, %v2507, 0
  %2511 = vmatprep.subr.mxu0 %v2505
  %2512 = vmatpush1.msra.mxu0 %v2504
  %2513 = vmatprep.subr.mxu0 0.0
  %2514 = vmatpush1.msra.mxu0 0.0
  %2515 = vmatprep.subr.mxu0 0.0
  %2516 = vmatpush1.msra.mxu0 0.0
  %2517 = vmatprep.subr.mxu0 0.0
  %2518 = vmatpush1.msra.mxu0 0.0
  %2519 = vmatprep.subr.mxu0 0.0
  %2520 = vmatpush1.msra.mxu0 0.0
  %2521 = vmatprep.subr.mxu0 0.0
  %2522 = vmatpush1.msra.mxu0 0.0
  %2523 = vmatprep.subr.mxu0 0.0
  %2524 = vmatpush1.msra.mxu0 0.0
  %2525 = vmatprep.subr.mxu0 0.0
  %2526 = vmatpush1.msra.mxu0 0.0
  %2527 = vmatprep.subr.mxu0 0.0
  %2528 = vmatpush1.msra.mxu0 0.0
  %2529 = vmatprep.subr.mxu0 0.0
  %2530 = vmatpush1.msra.mxu0 0.0
  %2531 = vmatprep.subr.mxu0 0.0
  %2532 = vmatpush1.msra.mxu0 0.0
  %2533 = vmatprep.subr.mxu0 0.0
  %2534 = vmatpush1.msra.mxu0 0.0
  %2535 = vmatprep.subr.mxu0 0.0
  %2536 = vmatpush1.msra.mxu0 0.0
  %2537 = vmatprep.subr.mxu0 0.0
  %2538 = vmatpush1.msra.mxu0 0.0
  %2539 = vmatprep.subr.mxu0 0.0
  %2540 = vmatpush1.msra.mxu0 0.0
  %2541 = vmatprep.subr.mxu0 0.0
  %2542 = vmatpush1.msra.mxu0 0.0
  %2543 = vmatprep.subr.mxu0 0.0
  %2544 = vmatpush1.msra.mxu0 0.0
  %2545 = vmatprep.subr.mxu0 0.0
  %2546 = vmatpush1.msra.mxu0 0.0
  %2547 = vmatprep.subr.mxu0 0.0
  %2548 = vmatpush1.msra.mxu0 0.0
  %2549 = vmatprep.subr.mxu0 0.0
  %2550 = vmatpush1.msra.mxu0 0.0
  %2551 = vmatprep.subr.mxu0 0.0
  %2552 = vmatpush1.msra.mxu0 0.0
  %2553 = vmatprep.subr.mxu0 0.0
  %2554 = vmatpush1.msra.mxu0 0.0
  %2555 = vmatprep.subr.mxu0 0.0
  %2556 = vmatpush1.msra.mxu0 0.0
  %2557 = vmatprep.subr.mxu0 0.0
  %2558 = vmatpush1.msra.mxu0 0.0
  %2559 = vmatprep.subr.mxu0 0.0
  %2560 = vmatpush1.msra.mxu0 0.0
  %2561 = vmatprep.subr.mxu0 0.0
  %2562 = vmatpush1.msra.mxu0 0.0
  %2563 = vmatprep.subr.mxu0 0.0
  %2564 = vmatpush1.msra.mxu0 0.0
  %2565 = vmatprep.subr.mxu0 0.0
  %2566 = vmatpush1.msra.mxu0 0.0
  %2567 = vmatprep.subr.mxu0 0.0
  %2568 = vmatpush1.msra.mxu0 0.0
  %2569 = vmatprep.subr.mxu0 0.0
  %2570 = vmatpush1.msra.mxu0 0.0
  %2571 = vmatprep.subr.mxu0 0.0
  %2572 = vmatpush1.msra.mxu0 0.0
  %2573 = vmatprep.subr.mxu0 0.0
  %2574 = vmatpush1.msra.mxu0 0.0
  %2575 = vmatprep.mubr.f32.mxu0 0.0
  %2576 = vmatmul.mubr.f32.gmra.mrb[0].mxu0 %v2509
  %v2577 = vpop.f32.mrb[0].mxu0
  %v2578 = vadd.f32 0.0, %v2577
  %v2579 = vpop.f32.mrb[0].mxu0
  %v2580 = vadd.f32 0.0, %v2579
  %2581 = vdwg.mxu0
  %v2582 = vadd.f32 %v2496, %v2578
  %v2583 = vadd.f32 %v2497, %v2580
  %v2584 = vld [vmem:[%s4] sm:$0xff]
  %2586 = vset.pattern.permute.xlu0 0
  %2587 = vperm.xlu0 %2586, %v2584
  %v2588 = vpop.permute.xlu0 %2587
  %v2590 = vadd.f32 %v2582, %v2588
  %v2591 = vadd.f32 %v2583, %v2588
  %v2592 = vmax.f32 %v2590, 0.0
  %v2593 = vmax.f32 %v2591, 0.0
  %2594 = vrot.lane.b32.xlu0 %v1820, 17
  %v2595 = vpop.permute.xlu0 %2594
  %2596 = vrot.lane.b32.xlu0 %v1821, 17
  %v2597 = vpop.permute.xlu0 %2596
  %v2598 = vsel %vm50, %v2595, %v2597
  %v2599 = vsel %vm50, %v2597, %v2595
  %v2600 = vmul.f32 %v2599, %v58
  %v2601 = vmul.f32 %v2598, %v62
  %2602 = vrot.lane.b32.xlu0 %v1820, 16
  %v2603 = vpop.permute.xlu0 %2602
  %2604 = vrot.lane.b32.xlu0 %v1821, 16
  %v2605 = vpop.permute.xlu0 %2604
  %v2606 = vsel %vm72, %v2603, %v2605
  %v2607 = vsel %vm72, %v2605, %v2603
  %v2608 = vmul.f32 %v2607, %v81
  %v2609 = vmul.f32 %v2606, %v85
  %2610 = vmatprep.subr.mxu0 %v2609
  %2611 = vmatpush1.msra.mxu0 %v2608
  %2612 = vmatprep.subr.mxu0 0.0
  %2613 = vmatpush1.msra.mxu0 0.0
  %2614 = vmatprep.subr.mxu0 0.0
  %2615 = vmatpush1.msra.mxu0 0.0
  %2616 = vmatprep.subr.mxu0 0.0
  %2617 = vmatpush1.msra.mxu0 0.0
  %2618 = vmatprep.subr.mxu0 0.0
  %2619 = vmatpush1.msra.mxu0 0.0
  %2620 = vmatprep.subr.mxu0 0.0
  %2621 = vmatpush1.msra.mxu0 0.0
  %2622 = vmatprep.subr.mxu0 0.0
  %2623 = vmatpush1.msra.mxu0 0.0
  %2624 = vmatprep.subr.mxu0 0.0
  %2625 = vmatpush1.msra.mxu0 0.0
  %2626 = vmatprep.subr.mxu0 0.0
  %2627 = vmatpush1.msra.mxu0 0.0
  %2628 = vmatprep.subr.mxu0 0.0
  %2629 = vmatpush1.msra.mxu0 0.0
  %2630 = vmatprep.subr.mxu0 0.0
  %2631 = vmatpush1.msra.mxu0 0.0
  %2632 = vmatprep.subr.mxu0 0.0
  %2633 = vmatpush1.msra.mxu0 0.0
  %2634 = vmatprep.subr.mxu0 0.0
  %2635 = vmatpush1.msra.mxu0 0.0
  %2636 = vmatprep.subr.mxu0 0.0
  %2637 = vmatpush1.msra.mxu0 0.0
  %2638 = vmatprep.subr.mxu0 0.0
  %2639 = vmatpush1.msra.mxu0 0.0
  %2640 = vmatprep.subr.mxu0 0.0
  %2641 = vmatpush1.msra.mxu0 0.0
  %2642 = vmatprep.subr.mxu0 0.0
  %2643 = vmatpush1.msra.mxu0 0.0
  %2644 = vmatprep.subr.mxu0 0.0
  %2645 = vmatpush1.msra.mxu0 0.0
  %2646 = vmatprep.subr.mxu0 0.0
  %2647 = vmatpush1.msra.mxu0 0.0
  %2648 = vmatprep.subr.mxu0 0.0
  %2649 = vmatpush1.msra.mxu0 0.0
  %2650 = vmatprep.subr.mxu0 0.0
  %2651 = vmatpush1.msra.mxu0 0.0
  %2652 = vmatprep.subr.mxu0 0.0
  %2653 = vmatpush1.msra.mxu0 0.0
  %2654 = vmatprep.subr.mxu0 0.0
  %2655 = vmatpush1.msra.mxu0 0.0
  %2656 = vmatprep.subr.mxu0 0.0
  %2657 = vmatpush1.msra.mxu0 0.0
  %2658 = vmatprep.subr.mxu0 0.0
  %2659 = vmatpush1.msra.mxu0 0.0
  %2660 = vmatprep.subr.mxu0 0.0
  %2661 = vmatpush1.msra.mxu0 0.0
  %2662 = vmatprep.subr.mxu0 0.0
  %2663 = vmatpush1.msra.mxu0 0.0
  %2664 = vmatprep.subr.mxu0 0.0
  %2665 = vmatpush1.msra.mxu0 0.0
  %2666 = vmatprep.subr.mxu0 0.0
  %2667 = vmatpush1.msra.mxu0 0.0
  %2668 = vmatprep.subr.mxu0 0.0
  %2669 = vmatpush1.msra.mxu0 0.0
  %2670 = vmatprep.subr.mxu0 0.0
  %2671 = vmatpush1.msra.mxu0 0.0
  %2672 = vmatprep.subr.mxu0 0.0
  %2673 = vmatpush1.msra.mxu0 0.0
  %2674 = vmatprep.mubr.f32.mxu0 0.0
  %2675 = vmatmul.mubr.f32.gmra.mrb[0].mxu0 %v1843
  %v2676 = vpop.f32.mrb[0].mxu0
  %v2677 = vadd.f32 0.0, %v2676
  %v2678 = vpop.f32.mrb[0].mxu0
  %v2679 = vadd.f32 0.0, %v2678
  %2680 = vdwg.mxu0
  %2681 = vmatprep.subr.mxu0 %v2601
  %2682 = vmatpush1.msra.mxu0 %v2600
  %2683 = vmatprep.subr.mxu0 0.0
  %2684 = vmatpush1.msra.mxu0 0.0
  %2685 = vmatprep.subr.mxu0 0.0
  %2686 = vmatpush1.msra.mxu0 0.0
  %2687 = vmatprep.subr.mxu0 0.0
  %2688 = vmatpush1.msra.mxu0 0.0
  %2689 = vmatprep.subr.mxu0 0.0
  %2690 = vmatpush1.msra.mxu0 0.0
  %2691 = vmatprep.subr.mxu0 0.0
  %2692 = vmatpush1.msra.mxu0 0.0
  %2693 = vmatprep.subr.mxu0 0.0
  %2694 = vmatpush1.msra.mxu0 0.0
  %2695 = vmatprep.subr.mxu0 0.0
  %2696 = vmatpush1.msra.mxu0 0.0
  %2697 = vmatprep.subr.mxu0 0.0
  %2698 = vmatpush1.msra.mxu0 0.0
  %2699 = vmatprep.subr.mxu0 0.0
  %2700 = vmatpush1.msra.mxu0 0.0
  %2701 = vmatprep.subr.mxu0 0.0
  %2702 = vmatpush1.msra.mxu0 0.0
  %2703 = vmatprep.subr.mxu0 0.0
  %2704 = vmatpush1.msra.mxu0 0.0
  %2705 = vmatprep.subr.mxu0 0.0
  %2706 = vmatpush1.msra.mxu0 0.0
  %2707 = vmatprep.subr.mxu0 0.0
  %2708 = vmatpush1.msra.mxu0 0.0
  %2709 = vmatprep.subr.mxu0 0.0
  %2710 = vmatpush1.msra.mxu0 0.0
  %2711 = vmatprep.subr.mxu0 0.0
  %2712 = vmatpush1.msra.mxu0 0.0
  %2713 = vmatprep.subr.mxu0 0.0
  %2714 = vmatpush1.msra.mxu0 0.0
  %2715 = vmatprep.subr.mxu0 0.0
  %2716 = vmatpush1.msra.mxu0 0.0
  %2717 = vmatprep.subr.mxu0 0.0
  %2718 = vmatpush1.msra.mxu0 0.0
  %2719 = vmatprep.subr.mxu0 0.0
  %2720 = vmatpush1.msra.mxu0 0.0
  %2721 = vmatprep.subr.mxu0 0.0
  %2722 = vmatpush1.msra.mxu0 0.0
  %2723 = vmatprep.subr.mxu0 0.0
  %2724 = vmatpush1.msra.mxu0 0.0
  %2725 = vmatprep.subr.mxu0 0.0
  %2726 = vmatpush1.msra.mxu0 0.0
  %2727 = vmatprep.subr.mxu0 0.0
  %2728 = vmatpush1.msra.mxu0 0.0
  %2729 = vmatprep.subr.mxu0 0.0
  %2730 = vmatpush1.msra.mxu0 0.0
  %2731 = vmatprep.subr.mxu0 0.0
  %2732 = vmatpush1.msra.mxu0 0.0
  %2733 = vmatprep.subr.mxu0 0.0
  %2734 = vmatpush1.msra.mxu0 0.0
  %2735 = vmatprep.subr.mxu0 0.0
  %2736 = vmatpush1.msra.mxu0 0.0
  %2737 = vmatprep.subr.mxu0 0.0
  %2738 = vmatpush1.msra.mxu0 0.0
  %2739 = vmatprep.subr.mxu0 0.0
  %2740 = vmatpush1.msra.mxu0 0.0
  %2741 = vmatprep.subr.mxu0 0.0
  %2742 = vmatpush1.msra.mxu0 0.0
  %2743 = vmatprep.subr.mxu0 0.0
  %2744 = vmatpush1.msra.mxu0 0.0
  %2745 = vmatprep.mubr.f32.mxu0 0.0
  %2746 = vmatmul.mubr.f32.gmra.mrb[0].mxu0 %v1917
  %v2747 = vpop.f32.mrb[0].mxu0
  %v2748 = vadd.f32 %v2677, %v2747
  %v2749 = vpop.f32.mrb[0].mxu0
  %v2750 = vadd.f32 %v2679, %v2749
  %2751 = vdwg.mxu0
  %2752 = vrot.lane.b32.xlu0 %v1820, 15
  %v2753 = vpop.permute.xlu0 %2752
  %2754 = vrot.lane.b32.xlu0 %v1821, 15
  %v2755 = vpop.permute.xlu0 %2754
  %v2756 = vsel %vm258, %v2753, %v2755
  %v2757 = vsel %vm258, %v2755, %v2753
  %v2758 = vmul.f32 %v2757, %v267
  %v2759 = vmul.f32 %v2756, %v271
  %2760 = vmatprep.subr.mxu0 %v2759
  %2761 = vmatpush1.msra.mxu0 %v2758
  %2762 = vmatprep.subr.mxu0 0.0
  %2763 = vmatpush1.msra.mxu0 0.0
  %2764 = vmatprep.subr.mxu0 0.0
  %2765 = vmatpush1.msra.mxu0 0.0
  %2766 = vmatprep.subr.mxu0 0.0
  %2767 = vmatpush1.msra.mxu0 0.0
  %2768 = vmatprep.subr.mxu0 0.0
  %2769 = vmatpush1.msra.mxu0 0.0
  %2770 = vmatprep.subr.mxu0 0.0
  %2771 = vmatpush1.msra.mxu0 0.0
  %2772 = vmatprep.subr.mxu0 0.0
  %2773 = vmatpush1.msra.mxu0 0.0
  %2774 = vmatprep.subr.mxu0 0.0
  %2775 = vmatpush1.msra.mxu0 0.0
  %2776 = vmatprep.subr.mxu0 0.0
  %2777 = vmatpush1.msra.mxu0 0.0
  %2778 = vmatprep.subr.mxu0 0.0
  %2779 = vmatpush1.msra.mxu0 0.0
  %2780 = vmatprep.subr.mxu0 0.0
  %2781 = vmatpush1.msra.mxu0 0.0
  %2782 = vmatprep.subr.mxu0 0.0
  %2783 = vmatpush1.msra.mxu0 0.0
  %2784 = vmatprep.subr.mxu0 0.0
  %2785 = vmatpush1.msra.mxu0 0.0
  %2786 = vmatprep.subr.mxu0 0.0
  %2787 = vmatpush1.msra.mxu0 0.0
  %2788 = vmatprep.subr.mxu0 0.0
  %2789 = vmatpush1.msra.mxu0 0.0
  %2790 = vmatprep.subr.mxu0 0.0
  %2791 = vmatpush1.msra.mxu0 0.0
  %2792 = vmatprep.subr.mxu0 0.0
  %2793 = vmatpush1.msra.mxu0 0.0
  %2794 = vmatprep.subr.mxu0 0.0
  %2795 = vmatpush1.msra.mxu0 0.0
  %2796 = vmatprep.subr.mxu0 0.0
  %2797 = vmatpush1.msra.mxu0 0.0
  %2798 = vmatprep.subr.mxu0 0.0
  %2799 = vmatpush1.msra.mxu0 0.0
  %2800 = vmatprep.subr.mxu0 0.0
  %2801 = vmatpush1.msra.mxu0 0.0
  %2802 = vmatprep.subr.mxu0 0.0
  %2803 = vmatpush1.msra.mxu0 0.0
  %2804 = vmatprep.subr.mxu0 0.0
  %2805 = vmatpush1.msra.mxu0 0.0
  %2806 = vmatprep.subr.mxu0 0.0
  %2807 = vmatpush1.msra.mxu0 0.0
  %2808 = vmatprep.subr.mxu0 0.0
  %2809 = vmatpush1.msra.mxu0 0.0
  %2810 = vmatprep.subr.mxu0 0.0
  %2811 = vmatpush1.msra.mxu0 0.0
  %2812 = vmatprep.subr.mxu0 0.0
  %2813 = vmatpush1.msra.mxu0 0.0
  %2814 = vmatprep.subr.mxu0 0.0
  %2815 = vmatpush1.msra.mxu0 0.0
  %2816 = vmatprep.subr.mxu0 0.0
  %2817 = vmatpush1.msra.mxu0 0.0
  %2818 = vmatprep.subr.mxu0 0.0
  %2819 = vmatpush1.msra.mxu0 0.0
  %2820 = vmatprep.subr.mxu0 0.0
  %2821 = vmatpush1.msra.mxu0 0.0
  %2822 = vmatprep.subr.mxu0 0.0
  %2823 = vmatpush1.msra.mxu0 0.0
  %2824 = vmatprep.mubr.f32.mxu0 0.0
  %2825 = vmatmul.mubr.f32.gmra.mrb[0].mxu0 %v2001
  %v2826 = vpop.f32.mrb[0].mxu0
  %v2827 = vadd.f32 0.0, %v2826
  %v2828 = vpop.f32.mrb[0].mxu0
  %v2829 = vadd.f32 0.0, %v2828
  %2830 = vdwg.mxu0
  %v2831 = vadd.f32 %v2748, %v2827
  %v2832 = vadd.f32 %v2750, %v2829
  %2833 = vrot.lane.b32.xlu0 %v1820, 1
  %v2834 = vpop.permute.xlu0 %2833
  %2835 = vrot.lane.b32.xlu0 %v1821, 1
  %v2836 = vpop.permute.xlu0 %2835
  %v2837 = vsel %vm364, %v2834, %v2836
  %v2838 = vsel %vm364, %v2836, %v2834
  %v2839 = vmul.f32 %v2838, %v373
  %v2840 = vmul.f32 %v2837, %v377
  %2841 = vmatprep.subr.mxu0 %v2840
  %2842 = vmatpush1.msra.mxu0 %v2839
  %2843 = vmatprep.subr.mxu0 0.0
  %2844 = vmatpush1.msra.mxu0 0.0
  %2845 = vmatprep.subr.mxu0 0.0
  %2846 = vmatpush1.msra.mxu0 0.0
  %2847 = vmatprep.subr.mxu0 0.0
  %2848 = vmatpush1.msra.mxu0 0.0
  %2849 = vmatprep.subr.mxu0 0.0
  %2850 = vmatpush1.msra.mxu0 0.0
  %2851 = vmatprep.subr.mxu0 0.0
  %2852 = vmatpush1.msra.mxu0 0.0
  %2853 = vmatprep.subr.mxu0 0.0
  %2854 = vmatpush1.msra.mxu0 0.0
  %2855 = vmatprep.subr.mxu0 0.0
  %2856 = vmatpush1.msra.mxu0 0.0
  %2857 = vmatprep.subr.mxu0 0.0
  %2858 = vmatpush1.msra.mxu0 0.0
  %2859 = vmatprep.subr.mxu0 0.0
  %2860 = vmatpush1.msra.mxu0 0.0
  %2861 = vmatprep.subr.mxu0 0.0
  %2862 = vmatpush1.msra.mxu0 0.0
  %2863 = vmatprep.subr.mxu0 0.0
  %2864 = vmatpush1.msra.mxu0 0.0
  %2865 = vmatprep.subr.mxu0 0.0
  %2866 = vmatpush1.msra.mxu0 0.0
  %2867 = vmatprep.subr.mxu0 0.0
  %2868 = vmatpush1.msra.mxu0 0.0
  %2869 = vmatprep.subr.mxu0 0.0
  %2870 = vmatpush1.msra.mxu0 0.0
  %2871 = vmatprep.subr.mxu0 0.0
  %2872 = vmatpush1.msra.mxu0 0.0
  %2873 = vmatprep.subr.mxu0 0.0
  %2874 = vmatpush1.msra.mxu0 0.0
  %2875 = vmatprep.subr.mxu0 0.0
  %2876 = vmatpush1.msra.mxu0 0.0
  %2877 = vmatprep.subr.mxu0 0.0
  %2878 = vmatpush1.msra.mxu0 0.0
  %2879 = vmatprep.subr.mxu0 0.0
  %2880 = vmatpush1.msra.mxu0 0.0
  %2881 = vmatprep.subr.mxu0 0.0
  %2882 = vmatpush1.msra.mxu0 0.0
  %2883 = vmatprep.subr.mxu0 0.0
  %2884 = vmatpush1.msra.mxu0 0.0
  %2885 = vmatprep.subr.mxu0 0.0
  %2886 = vmatpush1.msra.mxu0 0.0
  %2887 = vmatprep.subr.mxu0 0.0
  %2888 = vmatpush1.msra.mxu0 0.0
  %2889 = vmatprep.subr.mxu0 0.0
  %2890 = vmatpush1.msra.mxu0 0.0
  %2891 = vmatprep.subr.mxu0 0.0
  %2892 = vmatpush1.msra.mxu0 0.0
  %2893 = vmatprep.subr.mxu0 0.0
  %2894 = vmatpush1.msra.mxu0 0.0
  %2895 = vmatprep.subr.mxu0 0.0
  %2896 = vmatpush1.msra.mxu0 0.0
  %2897 = vmatprep.subr.mxu0 0.0
  %2898 = vmatpush1.msra.mxu0 0.0
  %2899 = vmatprep.subr.mxu0 0.0
  %2900 = vmatpush1.msra.mxu0 0.0
  %2901 = vmatprep.subr.mxu0 0.0
  %2902 = vmatpush1.msra.mxu0 0.0
  %2903 = vmatprep.subr.mxu0 0.0
  %2904 = vmatpush1.msra.mxu0 0.0
  %2905 = vmatprep.mubr.f32.mxu0 0.0
  %2906 = vmatmul.mubr.f32.gmra.mrb[0].mxu0 %v2087
  %v2907 = vpop.f32.mrb[0].mxu0
  %v2908 = vadd.f32 0.0, %v2907
  %v2909 = vpop.f32.mrb[0].mxu0
  %v2910 = vadd.f32 0.0, %v2909
  %2911 = vdwg.mxu0
  %v2912 = vadd.f32 %v2831, %v2908
  %v2913 = vadd.f32 %v2832, %v2910
  %2914 = vmatprep.subr.mxu0 %v1821
  %2915 = vmatpush1.msra.mxu0 %v1820
  %2916 = vmatprep.subr.mxu0 0.0
  %2917 = vmatpush1.msra.mxu0 0.0
  %2918 = vmatprep.subr.mxu0 0.0
  %2919 = vmatpush1.msra.mxu0 0.0
  %2920 = vmatprep.subr.mxu0 0.0
  %2921 = vmatpush1.msra.mxu0 0.0
  %2922 = vmatprep.subr.mxu0 0.0
  %2923 = vmatpush1.msra.mxu0 0.0
  %2924 = vmatprep.subr.mxu0 0.0
  %2925 = vmatpush1.msra.mxu0 0.0
  %2926 = vmatprep.subr.mxu0 0.0
  %2927 = vmatpush1.msra.mxu0 0.0
  %2928 = vmatprep.subr.mxu0 0.0
  %2929 = vmatpush1.msra.mxu0 0.0
  %2930 = vmatprep.subr.mxu0 0.0
  %2931 = vmatpush1.msra.mxu0 0.0
  %2932 = vmatprep.subr.mxu0 0.0
  %2933 = vmatpush1.msra.mxu0 0.0
  %2934 = vmatprep.subr.mxu0 0.0
  %2935 = vmatpush1.msra.mxu0 0.0
  %2936 = vmatprep.subr.mxu0 0.0
  %2937 = vmatpush1.msra.mxu0 0.0
  %2938 = vmatprep.subr.mxu0 0.0
  %2939 = vmatpush1.msra.mxu0 0.0
  %2940 = vmatprep.subr.mxu0 0.0
  %2941 = vmatpush1.msra.mxu0 0.0
  %2942 = vmatprep.subr.mxu0 0.0
  %2943 = vmatpush1.msra.mxu0 0.0
  %2944 = vmatprep.subr.mxu0 0.0
  %2945 = vmatpush1.msra.mxu0 0.0
  %2946 = vmatprep.subr.mxu0 0.0
  %2947 = vmatpush1.msra.mxu0 0.0
  %2948 = vmatprep.subr.mxu0 0.0
  %2949 = vmatpush1.msra.mxu0 0.0
  %2950 = vmatprep.subr.mxu0 0.0
  %2951 = vmatpush1.msra.mxu0 0.0
  %2952 = vmatprep.subr.mxu0 0.0
  %2953 = vmatpush1.msra.mxu0 0.0
  %2954 = vmatprep.subr.mxu0 0.0
  %2955 = vmatpush1.msra.mxu0 0.0
  %2956 = vmatprep.subr.mxu0 0.0
  %2957 = vmatpush1.msra.mxu0 0.0
  %2958 = vmatprep.subr.mxu0 0.0
  %2959 = vmatpush1.msra.mxu0 0.0
  %2960 = vmatprep.subr.mxu0 0.0
  %2961 = vmatpush1.msra.mxu0 0.0
  %2962 = vmatprep.subr.mxu0 0.0
  %2963 = vmatpush1.msra.mxu0 0.0
  %2964 = vmatprep.subr.mxu0 0.0
  %2965 = vmatpush1.msra.mxu0 0.0
  %2966 = vmatprep.subr.mxu0 0.0
  %2967 = vmatpush1.msra.mxu0 0.0
  %2968 = vmatprep.subr.mxu0 0.0
  %2969 = vmatpush1.msra.mxu0 0.0
  %2970 = vmatprep.subr.mxu0 0.0
  %2971 = vmatpush1.msra.mxu0 0.0
  %2972 = vmatprep.subr.mxu0 0.0
  %2973 = vmatpush1.msra.mxu0 0.0
  %2974 = vmatprep.subr.mxu0 0.0
  %2975 = vmatpush1.msra.mxu0 0.0
  %2976 = vmatprep.subr.mxu0 0.0
  %2977 = vmatpush1.msra.mxu0 0.0
  %2978 = vmatprep.mubr.f32.mxu0 0.0
  %2979 = vmatmul.mubr.f32.gmra.mrb[0].mxu0 %v2165
  %v2980 = vpop.f32.mrb[0].mxu0
  %v2981 = vadd.f32 0.0, %v2980
  %v2982 = vpop.f32.mrb[0].mxu0
  %v2983 = vadd.f32 0.0, %v2982
  %2984 = vdwg.mxu0
  %v2985 = vadd.f32 %v2912, %v2981
  %v2986 = vadd.f32 %v2913, %v2983
  %2987 = vrot.lane.b32.xlu0 %v1820, 127
  %v2988 = vpop.permute.xlu0 %2987
  %2989 = vrot.lane.b32.xlu0 %v1821, 127
  %v2990 = vpop.permute.xlu0 %2989
  %v2991 = vsel %vm552, %v2988, %v2990
  %v2992 = vsel %vm552, %v2990, %v2988
  %v2993 = vmul.f32 %v2991, %v561
  %v2994 = vmul.f32 %v2992, %v565
  %2995 = vmatprep.subr.mxu0 %v2994
  %2996 = vmatpush1.msra.mxu0 %v2993
  %2997 = vmatprep.subr.mxu0 0.0
  %2998 = vmatpush1.msra.mxu0 0.0
  %2999 = vmatprep.subr.mxu0 0.0
  %3000 = vmatpush1.msra.mxu0 0.0
  %3001 = vmatprep.subr.mxu0 0.0
  %3002 = vmatpush1.msra.mxu0 0.0
  %3003 = vmatprep.subr.mxu0 0.0
  %3004 = vmatpush1.msra.mxu0 0.0
  %3005 = vmatprep.subr.mxu0 0.0
  %3006 = vmatpush1.msra.mxu0 0.0
  %3007 = vmatprep.subr.mxu0 0.0
  %3008 = vmatpush1.msra.mxu0 0.0
  %3009 = vmatprep.subr.mxu0 0.0
  %3010 = vmatpush1.msra.mxu0 0.0
  %3011 = vmatprep.subr.mxu0 0.0
  %3012 = vmatpush1.msra.mxu0 0.0
  %3013 = vmatprep.subr.mxu0 0.0
  %3014 = vmatpush1.msra.mxu0 0.0
  %3015 = vmatprep.subr.mxu0 0.0
  %3016 = vmatpush1.msra.mxu0 0.0
  %3017 = vmatprep.subr.mxu0 0.0
  %3018 = vmatpush1.msra.mxu0 0.0
  %3019 = vmatprep.subr.mxu0 0.0
  %3020 = vmatpush1.msra.mxu0 0.0
  %3021 = vmatprep.subr.mxu0 0.0
  %3022 = vmatpush1.msra.mxu0 0.0
  %3023 = vmatprep.subr.mxu0 0.0
  %3024 = vmatpush1.msra.mxu0 0.0
  %3025 = vmatprep.subr.mxu0 0.0
  %3026 = vmatpush1.msra.mxu0 0.0
  %3027 = vmatprep.subr.mxu0 0.0
  %3028 = vmatpush1.msra.mxu0 0.0
  %3029 = vmatprep.subr.mxu0 0.0
  %3030 = vmatpush1.msra.mxu0 0.0
  %3031 = vmatprep.subr.mxu0 0.0
  %3032 = vmatpush1.msra.mxu0 0.0
  %3033 = vmatprep.subr.mxu0 0.0
  %3034 = vmatpush1.msra.mxu0 0.0
  %3035 = vmatprep.subr.mxu0 0.0
  %3036 = vmatpush1.msra.mxu0 0.0
  %3037 = vmatprep.subr.mxu0 0.0
  %3038 = vmatpush1.msra.mxu0 0.0
  %3039 = vmatprep.subr.mxu0 0.0
  %3040 = vmatpush1.msra.mxu0 0.0
  %3041 = vmatprep.subr.mxu0 0.0
  %3042 = vmatpush1.msra.mxu0 0.0
  %3043 = vmatprep.subr.mxu0 0.0
  %3044 = vmatpush1.msra.mxu0 0.0
  %3045 = vmatprep.subr.mxu0 0.0
  %3046 = vmatpush1.msra.mxu0 0.0
  %3047 = vmatprep.subr.mxu0 0.0
  %3048 = vmatpush1.msra.mxu0 0.0
  %3049 = vmatprep.subr.mxu0 0.0
  %3050 = vmatpush1.msra.mxu0 0.0
  %3051 = vmatprep.subr.mxu0 0.0
  %3052 = vmatpush1.msra.mxu0 0.0
  %3053 = vmatprep.subr.mxu0 0.0
  %3054 = vmatpush1.msra.mxu0 0.0
  %3055 = vmatprep.subr.mxu0 0.0
  %3056 = vmatpush1.msra.mxu0 0.0
  %3057 = vmatprep.subr.mxu0 0.0
  %3058 = vmatpush1.msra.mxu0 0.0
  %3059 = vmatprep.mubr.f32.mxu0 0.0
  %3060 = vmatmul.mubr.f32.gmra.mrb[0].mxu0 %v2251
  %v3061 = vpop.f32.mrb[0].mxu0
  %v3062 = vadd.f32 0.0, %v3061
  %v3063 = vpop.f32.mrb[0].mxu0
  %v3064 = vadd.f32 0.0, %v3063
  %3065 = vdwg.mxu0
  %v3066 = vadd.f32 %v2985, %v3062
  %v3067 = vadd.f32 %v2986, %v3064
  %3068 = vrot.lane.b32.xlu0 %v1820, 113
  %v3069 = vpop.permute.xlu0 %3068
  %3070 = vrot.lane.b32.xlu0 %v1821, 113
  %v3071 = vpop.permute.xlu0 %3070
  %v3072 = vsel %vm658, %v3069, %v3071
  %v3073 = vsel %vm658, %v3071, %v3069
  %v3074 = vmul.f32 %v3072, %v667
  %v3075 = vmul.f32 %v3073, %v671
  %3076 = vmatprep.subr.mxu0 %v3075
  %3077 = vmatpush1.msra.mxu0 %v3074
  %3078 = vmatprep.subr.mxu0 0.0
  %3079 = vmatpush1.msra.mxu0 0.0
  %3080 = vmatprep.subr.mxu0 0.0
  %3081 = vmatpush1.msra.mxu0 0.0
  %3082 = vmatprep.subr.mxu0 0.0
  %3083 = vmatpush1.msra.mxu0 0.0
  %3084 = vmatprep.subr.mxu0 0.0
  %3085 = vmatpush1.msra.mxu0 0.0
  %3086 = vmatprep.subr.mxu0 0.0
  %3087 = vmatpush1.msra.mxu0 0.0
  %3088 = vmatprep.subr.mxu0 0.0
  %3089 = vmatpush1.msra.mxu0 0.0
  %3090 = vmatprep.subr.mxu0 0.0
  %3091 = vmatpush1.msra.mxu0 0.0
  %3092 = vmatprep.subr.mxu0 0.0
  %3093 = vmatpush1.msra.mxu0 0.0
  %3094 = vmatprep.subr.mxu0 0.0
  %3095 = vmatpush1.msra.mxu0 0.0
  %3096 = vmatprep.subr.mxu0 0.0
  %3097 = vmatpush1.msra.mxu0 0.0
  %3098 = vmatprep.subr.mxu0 0.0
  %3099 = vmatpush1.msra.mxu0 0.0
  %3100 = vmatprep.subr.mxu0 0.0
  %3101 = vmatpush1.msra.mxu0 0.0
  %3102 = vmatprep.subr.mxu0 0.0
  %3103 = vmatpush1.msra.mxu0 0.0
  %3104 = vmatprep.subr.mxu0 0.0
  %3105 = vmatpush1.msra.mxu0 0.0
  %3106 = vmatprep.subr.mxu0 0.0
  %3107 = vmatpush1.msra.mxu0 0.0
  %3108 = vmatprep.subr.mxu0 0.0
  %3109 = vmatpush1.msra.mxu0 0.0
  %3110 = vmatprep.subr.mxu0 0.0
  %3111 = vmatpush1.msra.mxu0 0.0
  %3112 = vmatprep.subr.mxu0 0.0
  %3113 = vmatpush1.msra.mxu0 0.0
  %3114 = vmatprep.subr.mxu0 0.0
  %3115 = vmatpush1.msra.mxu0 0.0
  %3116 = vmatprep.subr.mxu0 0.0
  %3117 = vmatpush1.msra.mxu0 0.0
  %3118 = vmatprep.subr.mxu0 0.0
  %3119 = vmatpush1.msra.mxu0 0.0
  %3120 = vmatprep.subr.mxu0 0.0
  %3121 = vmatpush1.msra.mxu0 0.0
  %3122 = vmatprep.subr.mxu0 0.0
  %3123 = vmatpush1.msra.mxu0 0.0
  %3124 = vmatprep.subr.mxu0 0.0
  %3125 = vmatpush1.msra.mxu0 0.0
  %3126 = vmatprep.subr.mxu0 0.0
  %3127 = vmatpush1.msra.mxu0 0.0
  %3128 = vmatprep.subr.mxu0 0.0
  %3129 = vmatpush1.msra.mxu0 0.0
  %3130 = vmatprep.subr.mxu0 0.0
  %3131 = vmatpush1.msra.mxu0 0.0
  %3132 = vmatprep.subr.mxu0 0.0
  %3133 = vmatpush1.msra.mxu0 0.0
  %3134 = vmatprep.subr.mxu0 0.0
  %3135 = vmatpush1.msra.mxu0 0.0
  %3136 = vmatprep.subr.mxu0 0.0
  %3137 = vmatpush1.msra.mxu0 0.0
  %3138 = vmatprep.subr.mxu0 0.0
  %3139 = vmatpush1.msra.mxu0 0.0
  %3140 = vmatprep.mubr.f32.mxu0 0.0
  %3141 = vmatmul.mubr.f32.gmra.mrb[0].mxu0 %v2337
  %v3142 = vpop.f32.mrb[0].mxu0
  %v3143 = vadd.f32 0.0, %v3142
  %v3144 = vpop.f32.mrb[0].mxu0
  %v3145 = vadd.f32 0.0, %v3144
  %3146 = vdwg.mxu0
  %v3147 = vadd.f32 %v3066, %v3143
  %v3148 = vadd.f32 %v3067, %v3145
  %3149 = vrot.lane.b32.xlu0 %v1820, 112
  %v3150 = vpop.permute.xlu0 %3149
  %3151 = vrot.lane.b32.xlu0 %v1821, 112
  %v3152 = vpop.permute.xlu0 %3151
  %v3153 = vsel %vm764, %v3150, %v3152
  %v3154 = vsel %vm764, %v3152, %v3150
  %v3155 = vmul.f32 %v3153, %v773
  %v3156 = vmul.f32 %v3154, %v777
  %3157 = vmatprep.subr.mxu0 %v3156
  %3158 = vmatpush1.msra.mxu0 %v3155
  %3159 = vmatprep.subr.mxu0 0.0
  %3160 = vmatpush1.msra.mxu0 0.0
  %3161 = vmatprep.subr.mxu0 0.0
  %3162 = vmatpush1.msra.mxu0 0.0
  %3163 = vmatprep.subr.mxu0 0.0
  %3164 = vmatpush1.msra.mxu0 0.0
  %3165 = vmatprep.subr.mxu0 0.0
  %3166 = vmatpush1.msra.mxu0 0.0
  %3167 = vmatprep.subr.mxu0 0.0
  %3168 = vmatpush1.msra.mxu0 0.0
  %3169 = vmatprep.subr.mxu0 0.0
  %3170 = vmatpush1.msra.mxu0 0.0
  %3171 = vmatprep.subr.mxu0 0.0
  %3172 = vmatpush1.msra.mxu0 0.0
  %3173 = vmatprep.subr.mxu0 0.0
  %3174 = vmatpush1.msra.mxu0 0.0
  %3175 = vmatprep.subr.mxu0 0.0
  %3176 = vmatpush1.msra.mxu0 0.0
  %3177 = vmatprep.subr.mxu0 0.0
  %3178 = vmatpush1.msra.mxu0 0.0
  %3179 = vmatprep.subr.mxu0 0.0
  %3180 = vmatpush1.msra.mxu0 0.0
  %3181 = vmatprep.subr.mxu0 0.0
  %3182 = vmatpush1.msra.mxu0 0.0
  %3183 = vmatprep.subr.mxu0 0.0
  %3184 = vmatpush1.msra.mxu0 0.0
  %3185 = vmatprep.subr.mxu0 0.0
  %3186 = vmatpush1.msra.mxu0 0.0
  %3187 = vmatprep.subr.mxu0 0.0
  %3188 = vmatpush1.msra.mxu0 0.0
  %3189 = vmatprep.subr.mxu0 0.0
  %3190 = vmatpush1.msra.mxu0 0.0
  %3191 = vmatprep.subr.mxu0 0.0
  %3192 = vmatpush1.msra.mxu0 0.0
  %3193 = vmatprep.subr.mxu0 0.0
  %3194 = vmatpush1.msra.mxu0 0.0
  %3195 = vmatprep.subr.mxu0 0.0
  %3196 = vmatpush1.msra.mxu0 0.0
  %3197 = vmatprep.subr.mxu0 0.0
  %3198 = vmatpush1.msra.mxu0 0.0
  %3199 = vmatprep.subr.mxu0 0.0
  %3200 = vmatpush1.msra.mxu0 0.0
  %3201 = vmatprep.subr.mxu0 0.0
  %3202 = vmatpush1.msra.mxu0 0.0
  %3203 = vmatprep.subr.mxu0 0.0
  %3204 = vmatpush1.msra.mxu0 0.0
  %3205 = vmatprep.subr.mxu0 0.0
  %3206 = vmatpush1.msra.mxu0 0.0
  %3207 = vmatprep.subr.mxu0 0.0
  %3208 = vmatpush1.msra.mxu0 0.0
  %3209 = vmatprep.subr.mxu0 0.0
  %3210 = vmatpush1.msra.mxu0 0.0
  %3211 = vmatprep.subr.mxu0 0.0
  %3212 = vmatpush1.msra.mxu0 0.0
  %3213 = vmatprep.subr.mxu0 0.0
  %3214 = vmatpush1.msra.mxu0 0.0
  %3215 = vmatprep.subr.mxu0 0.0
  %3216 = vmatpush1.msra.mxu0 0.0
  %3217 = vmatprep.subr.mxu0 0.0
  %3218 = vmatpush1.msra.mxu0 0.0
  %3219 = vmatprep.subr.mxu0 0.0
  %3220 = vmatpush1.msra.mxu0 0.0
  %3221 = vmatprep.mubr.f32.mxu0 0.0
  %3222 = vmatmul.mubr.f32.gmra.mrb[0].mxu0 %v2423
  %v3223 = vpop.f32.mrb[0].mxu0
  %v3224 = vadd.f32 0.0, %v3223
  %v3225 = vpop.f32.mrb[0].mxu0
  %v3226 = vadd.f32 0.0, %v3225
  %3227 = vdwg.mxu0
  %v3228 = vadd.f32 %v3147, %v3224
  %v3229 = vadd.f32 %v3148, %v3226
  %3230 = vrot.lane.b32.xlu0 %v1820, 111
  %v3231 = vpop.permute.xlu0 %3230
  %3232 = vrot.lane.b32.xlu0 %v1821, 111
  %v3233 = vpop.permute.xlu0 %3232
  %v3234 = vsel %vm870, %v3231, %v3233
  %v3235 = vsel %vm870, %v3233, %v3231
  %v3236 = vmul.f32 %v3234, %v879
  %v3237 = vmul.f32 %v3235, %v883
  %3238 = vmatprep.subr.mxu0 %v3237
  %3239 = vmatpush1.msra.mxu0 %v3236
  %3240 = vmatprep.subr.mxu0 0.0
  %3241 = vmatpush1.msra.mxu0 0.0
  %3242 = vmatprep.subr.mxu0 0.0
  %3243 = vmatpush1.msra.mxu0 0.0
  %3244 = vmatprep.subr.mxu0 0.0
  %3245 = vmatpush1.msra.mxu0 0.0
  %3246 = vmatprep.subr.mxu0 0.0
  %3247 = vmatpush1.msra.mxu0 0.0
  %3248 = vmatprep.subr.mxu0 0.0
  %3249 = vmatpush1.msra.mxu0 0.0
  %3250 = vmatprep.subr.mxu0 0.0
  %3251 = vmatpush1.msra.mxu0 0.0
  %3252 = vmatprep.subr.mxu0 0.0
  %3253 = vmatpush1.msra.mxu0 0.0
  %3254 = vmatprep.subr.mxu0 0.0
  %3255 = vmatpush1.msra.mxu0 0.0
  %3256 = vmatprep.subr.mxu0 0.0
  %3257 = vmatpush1.msra.mxu0 0.0
  %3258 = vmatprep.subr.mxu0 0.0
  %3259 = vmatpush1.msra.mxu0 0.0
  %3260 = vmatprep.subr.mxu0 0.0
  %3261 = vmatpush1.msra.mxu0 0.0
  %3262 = vmatprep.subr.mxu0 0.0
  %3263 = vmatpush1.msra.mxu0 0.0
  %3264 = vmatprep.subr.mxu0 0.0
  %3265 = vmatpush1.msra.mxu0 0.0
  %3266 = vmatprep.subr.mxu0 0.0
  %3267 = vmatpush1.msra.mxu0 0.0
  %3268 = vmatprep.subr.mxu0 0.0
  %3269 = vmatpush1.msra.mxu0 0.0
  %3270 = vmatprep.subr.mxu0 0.0
  %3271 = vmatpush1.msra.mxu0 0.0
  %3272 = vmatprep.subr.mxu0 0.0
  %3273 = vmatpush1.msra.mxu0 0.0
  %3274 = vmatprep.subr.mxu0 0.0
  %3275 = vmatpush1.msra.mxu0 0.0
  %3276 = vmatprep.subr.mxu0 0.0
  %3277 = vmatpush1.msra.mxu0 0.0
  %3278 = vmatprep.subr.mxu0 0.0
  %3279 = vmatpush1.msra.mxu0 0.0
  %3280 = vmatprep.subr.mxu0 0.0
  %3281 = vmatpush1.msra.mxu0 0.0
  %3282 = vmatprep.subr.mxu0 0.0
  %3283 = vmatpush1.msra.mxu0 0.0
  %3284 = vmatprep.subr.mxu0 0.0
  %3285 = vmatpush1.msra.mxu0 0.0
  %3286 = vmatprep.subr.mxu0 0.0
  %3287 = vmatpush1.msra.mxu0 0.0
  %3288 = vmatprep.subr.mxu0 0.0
  %3289 = vmatpush1.msra.mxu0 0.0
  %3290 = vmatprep.subr.mxu0 0.0
  %3291 = vmatpush1.msra.mxu0 0.0
  %3292 = vmatprep.subr.mxu0 0.0
  %3293 = vmatpush1.msra.mxu0 0.0
  %3294 = vmatprep.subr.mxu0 0.0
  %3295 = vmatpush1.msra.mxu0 0.0
  %3296 = vmatprep.subr.mxu0 0.0
  %3297 = vmatpush1.msra.mxu0 0.0
  %3298 = vmatprep.subr.mxu0 0.0
  %3299 = vmatpush1.msra.mxu0 0.0
  %3300 = vmatprep.subr.mxu0 0.0
  %3301 = vmatpush1.msra.mxu0 0.0
  %3302 = vmatprep.mubr.f32.mxu0 0.0
  %3303 = vmatmul.mubr.f32.gmra.mrb[0].mxu0 %v2509
  %v3304 = vpop.f32.mrb[0].mxu0
  %v3305 = vadd.f32 0.0, %v3304
  %v3306 = vpop.f32.mrb[0].mxu0
  %v3307 = vadd.f32 0.0, %v3306
  %3308 = vdwg.mxu0
  %v3309 = vadd.f32 %v3228, %v3305
  %v3310 = vadd.f32 %v3229, %v3307
  %v3311 = vadd.f32 %v3309, %v2588
  %v3312 = vadd.f32 %v3310, %v2588
  %v3313 = vmax.f32 %v3311, 0.0
  %v3314 = vmax.f32 %v3312, 0.0
  %s3315 = scalar_lea.vmem %s10, 2
  %v3316 = vld [vmem:[%s3315] sm:$0x3]
  %v3318 = vlaneseq
  %v3319 = vshrl.u32 %v3318, 7
  %v3320 = vsub.s32 0, %v3319
  %v3321 = vrot.slane %v3316, %v3320
  %v3322 = vlaneseq
  %v3323 = vshrl.u32 %v3322, 7
  %v3324 = vsub.s32 1, %v3323
  %v3325 = vrot.slane %v3316, %v3324
  %v3328 = vmul.f32 %v2592, %v3321
  %v3329 = vmul.f32 %v2593, %v3325
  %v3330 = vadd.f32 %v3328, %v3329
  %3331 = vadd.xlane.f32.xlu0 %v3330
  %v3332 = vpop.xlane.xlu0 %3331
  %v3333 = vmul.f32 %v3328, %v2592
  %v3334 = vmul.f32 %v3329, %v2593
  %v3335 = vadd.f32 %v3333, %v3334
  %3336 = vadd.xlane.f32.xlu0 %v3335
  %v3337 = vpop.xlane.xlu0 %3336
  %v3338 = vmul.f32 %v3313, %v3321
  %v3339 = vmul.f32 %v3314, %v3325
  %v3340 = vadd.f32 %v3338, %v3339
  %3341 = vadd.xlane.f32.xlu0 %v3340
  %v3342 = vpop.xlane.xlu0 %3341
  %v3343 = vmul.f32 %v3338, %v3313
  %v3344 = vmul.f32 %v3339, %v3314
  %v3345 = vadd.f32 %v3343, %v3344
  %3346 = vadd.xlane.f32.xlu0 %v3345
  %v3347 = vpop.xlane.xlu0 %3346
  %v3348 = vadd.f32 %v3332, %v3342
  %v3349 = vadd.f32 %v3337, %v3347
  %v3350 = vmul.f32 %v3348, 0.001953125
  %v3351 = vmul.f32 %v3349, 0.001953125
  %v3352 = vmul.f32 %v3350, %v3350
  %v3353 = vsub.f32 %v3351, %v3352
  %v3354 = vmax.f32 %v3353, 0.0
  %v3355 = vld [vmem:[%s7] sm:$0xff]
  %v3356 = vadd.f32 %v3354, 1e-05
  %v3357 = vrsqrt.pop %v3356
  %v3358 = vmul.f32 %v3355, %v3357
  %v3359 = vld [vmem:[%s8] sm:$0xff]
  %v3360 = vmul.f32 %v3350, %v3358
  %v3361 = vsub.f32 %v3359, %v3360
  %3363 = vset.pattern.permute.xlu0 0
  %3364 = vperm.xlu0 %3363, %v3358
  %v3365 = vpop.permute.xlu0 %3364
  %v3367 = vmul.f32 %v2592, %v3365
  %v3368 = vmul.f32 %v2593, %v3365
  %3370 = vset.pattern.permute.xlu0 0
  %3371 = vperm.xlu0 %3370, %v3361
  %v3372 = vpop.permute.xlu0 %3371
  %v3374 = vadd.f32 %v3367, %v3372
  %v3375 = vadd.f32 %v3368, %v3372
  %v3376 = vmul.f32 %v3313, %v3365
  %v3377 = vmul.f32 %v3314, %v3365
  %v3378 = vadd.f32 %v3376, %v3372
  %v3379 = vadd.f32 %v3377, %v3372
  %3380 = vst [vmem:[%s11] sm:$0xff] %v3374
  %3381 = vst [vmem:[%s11 + $0x8] sm:$0xff] %v3375
  %s3382 = scalar_lea.vmem %s11, 16
  %3383 = vst [vmem:[%s3382] sm:$0xff] %v3378
  %3384 = vst [vmem:[%s3382 + $0x8] sm:$0xff] %v3379
  // Predicated region
  $region46: #{block_forward.1} parent=0 // pred_check
    _
  $region47: #{block_forward.1} parent=0 // pred_check_branch
    %3386 = sbr.rel (0) target = $region49
  $region48: #{block_forward.1} parent=0 // pred_region
    _
  $region49: #{block_forward.1} parent=0 // pred_fallthru
    _
  // Predicated region
  $region50: #{block_forward.1} parent=0 // pred_check
    _
  $region51: #{block_forward.1} parent=0 // pred_check_branch
    %3388 = sbr.rel (0) target = $region53
  $region52: #{block_forward.1} parent=0 // pred_region
    _
  $region53: #{block_forward.1} parent=0 // pred_fallthru
    _

</llo_original>
